<compile_context>
chip_gen: v6e
topology: v6e:2x2x1
jax: 0.10.0
libtpu: 0.0.40
codegen_flags: <defaults>
</compile_context>

<pallas_src>
import jax
import jax.numpy as jnp
from jax import lax
from jax.experimental import pallas as pl
from jax.experimental.pallas import tpu as pltpu


# ---------------------------------------------------------------------------
# Fused forward kernel (one grid step == one image)
# ---------------------------------------------------------------------------
def _lenet_fused_kernel(
    x_ref,                                   # (28, 28, 1)   image, HWC
    w1_ref, b1_ref,                          # (9, 1, 6),    (1, 6)
    w2_ref, b2_ref,                          # (9, 6, 6),    (1, 6)
    w3_ref, b3_ref,                          # (9, 6, 16),   (1, 16)
    wf1_ref, bf1_ref,                        # (25, 16, 120),(1, 120)
    wf2_ref, bf2_ref,                        # (120, 48),    (1, 48)
    wf3_ref, bf3_ref,                        # (48, 24),     (1, 24)
    o_ref,                                   # (1, 24)
    a1_ref, a2_ref, a3_ref, a4_ref, a5_ref,  # VMEM activation scratch (HWC)
):
    def conv3x3_relu(src_ref, w_ref, b_ref, dst_ref, hgt, wid, cin, cout):
        """Valid 3x3 conv + bias + ReLU: src (H,W,cin) -> dst (H-2,W-2,cout)."""
        ho, wo = hgt - 2, wid - 2
        bias = b_ref[...]                                        # (1, cout)

        def row(r, carry):
            acc = jnp.zeros((wo, cout), jnp.float32)
            for di in range(3):
                for dj in range(3):
                    patch = src_ref[r + di, pl.ds(dj, wo), :]    # (wo, cin)
                    wk = w_ref[di * 3 + dj]                      # (cin, cout)
                    if cin == 1:
                        # degenerate K=1 contraction -> cheap VPU broadcast-mul
                        acc = acc + patch * wk
                    else:
                        acc = acc + jnp.dot(
                            patch, wk, preferred_element_type=jnp.float32)
            dst_ref[r] = jnp.maximum(acc + bias, 0.0)
            return carry

        lax.fori_loop(0, ho, row, 0)

    def maxpool2x2(src_ref, dst_ref, hgt, wid):
        """Exact 2x2/stride-2 max pool: src (H,W,C) -> dst (H/2,W/2,C)."""
        hh, wh = hgt // 2, wid // 2

        def row(i, carry):
            r = jnp.maximum(src_ref[2 * i], src_ref[2 * i + 1])  # (W, C)
            for j in range(wh):                                  # static unroll
                cmax = jnp.maximum(r[2 * j:2 * j + 1, :],
                                   r[2 * j + 1:2 * j + 2, :])    # (1, C)
                dst_ref[i, pl.ds(j, 1), :] = cmax
            return carry

        lax.fori_loop(0, hh, row, 0)

    # conv1 + relu                          (28,28,1)  -> (26,26,6)
    conv3x3_relu(x_ref, w1_ref, b1_ref, a1_ref, 28, 28, 1, 6)
    # conv2 + relu + pool                   (26,26,6)  -> (24,24,6) -> (12,12,6)
    conv3x3_relu(a1_ref, w2_ref, b2_ref, a2_ref, 26, 26, 6, 6)
    maxpool2x2(a2_ref, a3_ref, 24, 24)
    # conv3 + relu + pool                   (12,12,6)  -> (10,10,16) -> (5,5,16)
    conv3x3_relu(a3_ref, w3_ref, b3_ref, a4_ref, 12, 12, 6, 16)
    maxpool2x2(a4_ref, a5_ref, 10, 10)

    # fc1 over the (5,5,16) feature map.  The torch .view(-1,400) flatten is
    # folded into wf1's layout (25,16,120) indexed by [h*5+w, c, out].
    acc = jnp.zeros((1, 120), jnp.float32)
    for ph in range(5):
        for pw in range(5):
            v = a5_ref[ph, pl.ds(pw, 1), :]                      # (1, 16)
            acc = acc + jnp.dot(v, wf1_ref[ph * 5 + pw],
                                preferred_element_type=jnp.float32)
    h1 = jnp.maximum(acc + bf1_ref[...], 0.0)                                        # (1, 120)
    h2 = jnp.maximum(
        jnp.dot(h1, wf2_ref[...], preferred_element_type=jnp.float32) + bf2_ref[...],
        0.0)                                                                         # (1, 48)
    o_ref[...] = (jnp.dot(h2, wf3_ref[...], preferred_element_type=jnp.float32)
                  + bf3_ref[...])                                                    # (1, 24)


# ---------------------------------------------------------------------------
# Wrappers
# ---------------------------------------------------------------------------
def _lenet_pallas_call(x_hwc, kp):
    n = x_hwc.shape[0]
    return pl.pallas_call(
        _lenet_fused_kernel,
        out_shape=jax.ShapeDtypeStruct((n, 1, 24), jnp.float32),
        grid_spec=pltpu.PrefetchScalarGridSpec(
            num_scalar_prefetch=0,
            grid=(n,),
            in_specs=[
                pl.BlockSpec((None, 28, 28, 1), lambda i: (i, 0, 0, 0)),  # x
                pl.BlockSpec((9, 1, 6), lambda i: (0, 0, 0)),             # w1
                pl.BlockSpec((1, 6), lambda i: (0, 0)),                   # b1
                pl.BlockSpec((9, 6, 6), lambda i: (0, 0, 0)),             # w2
                pl.BlockSpec((1, 6), lambda i: (0, 0)),                   # b2
                pl.BlockSpec((9, 6, 16), lambda i: (0, 0, 0)),            # w3
                pl.BlockSpec((1, 16), lambda i: (0, 0)),                  # b3
                pl.BlockSpec((25, 16, 120), lambda i: (0, 0, 0)),         # wf1
                pl.BlockSpec((1, 120), lambda i: (0, 0)),                 # bf1
                pl.BlockSpec((120, 48), lambda i: (0, 0)),                # wf2
                pl.BlockSpec((1, 48), lambda i: (0, 0)),                  # bf2
                pl.BlockSpec((48, 24), lambda i: (0, 0)),                 # wf3
                pl.BlockSpec((1, 24), lambda i: (0, 0)),                  # bf3
            ],
            out_specs=pl.BlockSpec((None, 1, 24), lambda i: (i, 0, 0)),
            scratch_shapes=[
                pltpu.VMEM((26, 26, 6), jnp.float32),   # conv1 out
                pltpu.VMEM((24, 24, 6), jnp.float32),   # conv2 out
                pltpu.VMEM((12, 12, 6), jnp.float32),   # pool1 out
                pltpu.VMEM((10, 10, 16), jnp.float32),  # conv3 out
                pltpu.VMEM((5, 5, 16), jnp.float32),    # pool2 out
            ],
        ),
        compiler_params=pltpu.CompilerParams(
            dimension_semantics=("parallel",),
        ),
    )(x_hwc, kp["w1"], kp["b1"], kp["w2"], kp["b2"], kp["w3"], kp["b3"],
      kp["wf1"], kp["bf1"], kp["wf2"], kp["bf2"], kp["wf3"], kp["bf3"])


def forward(kparams, x):
    """Fused LeNet forward.  x: (N, 1, 28, 28) f32, NCHW as in the torch module."""
    n = x.shape[0]
    assert x.shape[1:] == (1, 28, 28)
    x_hwc = x.reshape(n, 28, 28, 1)     # Cin == 1: pure relabeling, no data movement
    out = _lenet_pallas_call(x_hwc, kparams)
    return out.reshape(n, 24)


# ---------------------------------------------------------------------------
# Parameters (PyTorch layouts) + one-time kernel-layout preparation
# ---------------------------------------------------------------------------
def init_params(key):
    """Deterministic init mimicking PyTorch's default U(-1/sqrt(fan_in), +)."""
    def conv(key, cout, cin, k):
        kw_, kb_ = jax.random.split(key)
        bound = 1.0 / (cin * k * k) ** 0.5
        w = jax.random.uniform(kw_, (cout, cin, k, k), jnp.float32, -bound, bound)
        b = jax.random.uniform(kb_, (cout,), jnp.float32, -bound, bound)
        return w, b

    def linear(key, cout, cin):
        kw_, kb_ = jax.random.split(key)
        bound = 1.0 / cin ** 0.5
        w = jax.random.uniform(kw_, (cout, cin), jnp.float32, -bound, bound)
        b = jax.random.uniform(kb_, (cout,), jnp.float32, -bound, bound)
        return w, b

    keys = jax.random.split(key, 6)
    p = {}
    p["conv1_w"], p["conv1_b"] = conv(keys[0], 6, 1, 3)
    p["conv2_w"], p["conv2_b"] = conv(keys[1], 6, 6, 3)
    p["conv3_w"], p["conv3_b"] = conv(keys[2], 16, 6, 3)
    p["fc1_w"], p["fc1_b"] = linear(keys[3], 120, 16 * 5 * 5)
    p["fc2_w"], p["fc2_b"] = linear(keys[4], 48, 120)
    p["fc3_w"], p["fc3_b"] = linear(keys[5], 24, 48)
    return p


def prepare_params(p):
    """One-time layout prep (kept OUT of the jitted forward):
    conv w (Cout,Cin,3,3)->(9,Cin,Cout); fc w (out,in)->(in,out);
    fc1 additionally gets the CHW->HWC flatten permutation folded in so the
    kernel's HWC flatten matches torch's .view(-1, 16*5*5)."""
    def conv_prep(w):
        cout, cin = w.shape[0], w.shape[1]
        return jnp.transpose(w, (2, 3, 1, 0)).reshape(9, cin, cout)

    return {
        "w1": conv_prep(p["conv1_w"]), "b1": p["conv1_b"].reshape(1, 6),
        "w2": conv_prep(p["conv2_w"]), "b2": p["conv2_b"].reshape(1, 6),
        "w3": conv_prep(p["conv3_w"]), "b3": p["conv3_b"].reshape(1, 16),
        # fc1_w[o, c*25 + h*5 + w]  ->  wf1[h*5+w, c, o]
        "wf1": jnp.transpose(p["fc1_w"].reshape(120, 16, 5, 5),
                             (2, 3, 1, 0)).reshape(25, 16, 120),
        "bf1": p["fc1_b"].reshape(1, 120),
        "wf2": p["fc2_w"].T, "bf2": p["fc2_b"].reshape(1, 48),
        "wf3": p["fc3_w"].T, "bf3": p["fc3_b"].reshape(1, 24),
    }


# ---------------------------------------------------------------------------
# Plain-JAX reference (mirrors the torch module) for a sanity check
# ---------------------------------------------------------------------------
def forward_reference(p, x):
    def conv(x, w, b):
        y = lax.conv_general_dilated(
            x, w, window_strides=(1, 1), padding="VALID",
            dimension_numbers=("NCHW", "OIHW", "NCHW"))
        return y + b.reshape(1, -1, 1, 1)

    def pool(x):
        return lax.reduce_window(x, -jnp.inf, lax.max,
                                 (1, 1, 2, 2), (1, 1, 2, 2), "VALID")

    x = jax.nn.relu(conv(x, p["conv1_w"], p["conv1_b"]))
    x = pool(jax.nn.relu(conv(x, p["conv2_w"], p["conv2_b"])))
    x = pool(jax.nn.relu(conv(x, p["conv3_w"], p["conv3_b"])))
    x = x.reshape(x.shape[0], 16 * 5 * 5)
    x = jax.nn.relu(x @ p["fc1_w"].T + p["fc1_b"])
    x = jax.nn.relu(x @ p["fc2_w"].T + p["fc2_b"])
    return x @ p["fc3_w"].T + p["fc3_b"]


if __name__ == "__main__":
    key = jax.random.PRNGKey(0)
    pkey, xkey = jax.random.split(key)
    params = init_params(pkey)
    kparams = prepare_params(params)   # one-time weight layout prep (outside jit)
    # input spatial size 28x28 is forced by the .view(-1, 16*5*5) flatten
    x = jax.random.normal(xkey, (2, 1, 28, 28), dtype=jnp.float32)

    out = jax.block_until_ready(jax.jit(forward)(kparams, x))
    assert out.shape == (2, 24), out.shape
    assert out.dtype == jnp.float32

    # sanity-check against a plain-JAX (XLA) reference of the same forward
    ref = jax.block_until_ready(jax.jit(forward_reference)(params, x))
    max_err = float(jnp.max(jnp.abs(out - ref)))
    assert max_err < 2e-2, f"mismatch vs reference: max abs err = {max_err}"

    print("KERNEL_OK")
</pallas_src>

<mosaic_0001>
module attributes {stable_mosaic.version = 11 : i64} {
  func.func @_lenet_fused_kernel(%arg0: i32, %arg1: memref<1x28x28x1xf32, #tpu.memory_space<vmem>>, %arg2: memref<9x1x6xf32, #tpu.memory_space<vmem>>, %arg3: memref<1x6xf32, #tpu.memory_space<vmem>>, %arg4: memref<9x6x6xf32, #tpu.memory_space<vmem>>, %arg5: memref<1x6xf32, #tpu.memory_space<vmem>>, %arg6: memref<9x6x16xf32, #tpu.memory_space<vmem>>, %arg7: memref<1x16xf32, #tpu.memory_space<vmem>>, %arg8: memref<25x16x120xf32, #tpu.memory_space<vmem>>, %arg9: memref<1x120xf32, #tpu.memory_space<vmem>>, %arg10: memref<120x48xf32, #tpu.memory_space<vmem>>, %arg11: memref<1x48xf32, #tpu.memory_space<vmem>>, %arg12: memref<48x24xf32, #tpu.memory_space<vmem>>, %arg13: memref<1x24xf32, #tpu.memory_space<vmem>>, %arg14: memref<1x1x24xf32, #tpu.memory_space<vmem>>, %arg15: memref<26x26x6xf32, #tpu.memory_space<vmem>>, %arg16: memref<24x24x6xf32, #tpu.memory_space<vmem>>, %arg17: memref<12x12x6xf32, #tpu.memory_space<vmem>>, %arg18: memref<10x10x16xf32, #tpu.memory_space<vmem>>, %arg19: memref<5x5x16xf32, #tpu.memory_space<vmem>>) attributes {dimension_semantics = [#tpu.dimension_semantics<parallel>], iteration_bounds = array<i64: 2>, scalar_prefetch = 0 : i64, scratch_operands = 5 : i64, tpu.core_type = #tpu.core_type<tc>, window_params = [{transform_indices = @transform_0, window_bounds = array<i64: 1, 28, 28, 1>}, {pipeline_mode = #tpu.pipeline_mode<synchronous>, transform_indices = @transform_1, window_bounds = array<i64: 9, 1, 6>}, {pipeline_mode = #tpu.pipeline_mode<synchronous>, transform_indices = @transform_2, window_bounds = array<i64: 1, 6>}, {pipeline_mode = #tpu.pipeline_mode<synchronous>, transform_indices = @transform_3, window_bounds = array<i64: 9, 6, 6>}, {pipeline_mode = #tpu.pipeline_mode<synchronous>, transform_indices = @transform_4, window_bounds = array<i64: 1, 6>}, {pipeline_mode = #tpu.pipeline_mode<synchronous>, transform_indices = @transform_5, window_bounds = array<i64: 9, 6, 16>}, {pipeline_mode = #tpu.pipeline_mode<synchronous>, transform_indices = @transform_6, window_bounds = array<i64: 1, 16>}, {pipeline_mode = #tpu.pipeline_mode<synchronous>, transform_indices = @transform_7, window_bounds = array<i64: 25, 16, 120>}, {pipeline_mode = #tpu.pipeline_mode<synchronous>, transform_indices = @transform_8, window_bounds = array<i64: 1, 120>}, {pipeline_mode = #tpu.pipeline_mode<synchronous>, transform_indices = @transform_9, window_bounds = array<i64: 120, 48>}, {pipeline_mode = #tpu.pipeline_mode<synchronous>, transform_indices = @transform_10, window_bounds = array<i64: 1, 48>}, {pipeline_mode = #tpu.pipeline_mode<synchronous>, transform_indices = @transform_11, window_bounds = array<i64: 48, 24>}, {pipeline_mode = #tpu.pipeline_mode<synchronous>, transform_indices = @transform_12, window_bounds = array<i64: 1, 24>}, {transform_indices = @transform_13, window_bounds = array<i64: 1, 1, 24>}]} {
    %c0 = arith.constant 0 : index
    %c0_0 = arith.constant 0 : index
    %0 = vector.load %arg3[%c0, %c0_0] : memref<1x6xf32, #tpu.memory_space<vmem>>, vector<1x6xf32>
    %c0_i32 = arith.constant 0 : i32
    %c26_i32 = arith.constant 26 : i32
    %1 = arith.addi %c0_i32, %c26_i32 : i32
    %c1_i32 = arith.constant 1 : i32
    scf.for %arg20 = %c0_i32 to %1 step %c1_i32  : i32 {
      %cst_186 = arith.constant 0.000000e+00 : f32
      %176 = vector.broadcast %cst_186 : f32 to vector<26x6xf32>
      %c0_i32_187 = arith.constant 0 : i32
      %177 = arith.addi %arg20, %c0_i32_187 : i32
      %c0_188 = arith.constant 0 : index
      %178 = arith.index_cast %177 : i32 to index
      %c0_189 = arith.constant 0 : index
      %c0_190 = arith.constant 0 : index
      %179 = vector.load %arg1[%c0_188, %178, %c0_189, %c0_190] : memref<1x28x28x1xf32, #tpu.memory_space<vmem>>, vector<1x1x26x1xf32>
      %180 = vector.shape_cast %179 : vector<1x1x26x1xf32> to vector<26x1xf32>
      %c0_191 = arith.constant 0 : index
      %c0_192 = arith.constant 0 : index
      %c0_193 = arith.constant 0 : index
      %181 = vector.load %arg2[%c0_191, %c0_192, %c0_193] : memref<9x1x6xf32, #tpu.memory_space<vmem>>, vector<1x1x6xf32>
      %182 = vector.shape_cast %181 : vector<1x1x6xf32> to vector<1x6xf32>
      %183 = vector.broadcast %180 : vector<26x1xf32> to vector<26x6xf32>
      %184 = vector.broadcast %182 : vector<1x6xf32> to vector<26x6xf32>
      %185 = arith.mulf %183, %184 : vector<26x6xf32>
      %186 = arith.addf %176, %185 : vector<26x6xf32>
      %c0_i32_194 = arith.constant 0 : i32
      %187 = arith.addi %arg20, %c0_i32_194 : i32
      %c0_195 = arith.constant 0 : index
      %188 = arith.index_cast %187 : i32 to index
      %c1_196 = arith.constant 1 : index
      %c0_197 = arith.constant 0 : index
      %189 = vector.load %arg1[%c0_195, %188, %c1_196, %c0_197] : memref<1x28x28x1xf32, #tpu.memory_space<vmem>>, vector<1x1x26x1xf32>
      %190 = vector.shape_cast %189 : vector<1x1x26x1xf32> to vector<26x1xf32>
      %c1_198 = arith.constant 1 : index
      %c0_199 = arith.constant 0 : index
      %c0_200 = arith.constant 0 : index
      %191 = vector.load %arg2[%c1_198, %c0_199, %c0_200] : memref<9x1x6xf32, #tpu.memory_space<vmem>>, vector<1x1x6xf32>
      %192 = vector.shape_cast %191 : vector<1x1x6xf32> to vector<1x6xf32>
      %193 = vector.broadcast %190 : vector<26x1xf32> to vector<26x6xf32>
      %194 = vector.broadcast %192 : vector<1x6xf32> to vector<26x6xf32>
      %195 = arith.mulf %193, %194 : vector<26x6xf32>
      %196 = arith.addf %186, %195 : vector<26x6xf32>
      %c0_i32_201 = arith.constant 0 : i32
      %197 = arith.addi %arg20, %c0_i32_201 : i32
      %c0_202 = arith.constant 0 : index
      %198 = arith.index_cast %197 : i32 to index
      %c2_203 = arith.constant 2 : index
      %c0_204 = arith.constant 0 : index
      %199 = vector.load %arg1[%c0_202, %198, %c2_203, %c0_204] : memref<1x28x28x1xf32, #tpu.memory_space<vmem>>, vector<1x1x26x1xf32>
      %200 = vector.shape_cast %199 : vector<1x1x26x1xf32> to vector<26x1xf32>
      %c2_205 = arith.constant 2 : index
      %c0_206 = arith.constant 0 : index
      %c0_207 = arith.constant 0 : index
      %201 = vector.load %arg2[%c2_205, %c0_206, %c0_207] : memref<9x1x6xf32, #tpu.memory_space<vmem>>, vector<1x1x6xf32>
      %202 = vector.shape_cast %201 : vector<1x1x6xf32> to vector<1x6xf32>
      %203 = vector.broadcast %200 : vector<26x1xf32> to vector<26x6xf32>
      %204 = vector.broadcast %202 : vector<1x6xf32> to vector<26x6xf32>
      %205 = arith.mulf %203, %204 : vector<26x6xf32>
      %206 = arith.addf %196, %205 : vector<26x6xf32>
      %c1_i32_208 = arith.constant 1 : i32
      %207 = arith.addi %arg20, %c1_i32_208 : i32
      %c0_209 = arith.constant 0 : index
      %208 = arith.index_cast %207 : i32 to index
      %c0_210 = arith.constant 0 : index
      %c0_211 = arith.constant 0 : index
      %209 = vector.load %arg1[%c0_209, %208, %c0_210, %c0_211] : memref<1x28x28x1xf32, #tpu.memory_space<vmem>>, vector<1x1x26x1xf32>
      %210 = vector.shape_cast %209 : vector<1x1x26x1xf32> to vector<26x1xf32>
      %c3_212 = arith.constant 3 : index
      %c0_213 = arith.constant 0 : index
      %c0_214 = arith.constant 0 : index
      %211 = vector.load %arg2[%c3_212, %c0_213, %c0_214] : memref<9x1x6xf32, #tpu.memory_space<vmem>>, vector<1x1x6xf32>
      %212 = vector.shape_cast %211 : vector<1x1x6xf32> to vector<1x6xf32>
      %213 = vector.broadcast %210 : vector<26x1xf32> to vector<26x6xf32>
      %214 = vector.broadcast %212 : vector<1x6xf32> to vector<26x6xf32>
      %215 = arith.mulf %213, %214 : vector<26x6xf32>
      %216 = arith.addf %206, %215 : vector<26x6xf32>
      %c1_i32_215 = arith.constant 1 : i32
      %217 = arith.addi %arg20, %c1_i32_215 : i32
      %c0_216 = arith.constant 0 : index
      %218 = arith.index_cast %217 : i32 to index
      %c1_217 = arith.constant 1 : index
      %c0_218 = arith.constant 0 : index
      %219 = vector.load %arg1[%c0_216, %218, %c1_217, %c0_218] : memref<1x28x28x1xf32, #tpu.memory_space<vmem>>, vector<1x1x26x1xf32>
      %220 = vector.shape_cast %219 : vector<1x1x26x1xf32> to vector<26x1xf32>
      %c4_219 = arith.constant 4 : index
      %c0_220 = arith.constant 0 : index
      %c0_221 = arith.constant 0 : index
      %221 = vector.load %arg2[%c4_219, %c0_220, %c0_221] : memref<9x1x6xf32, #tpu.memory_space<vmem>>, vector<1x1x6xf32>
      %222 = vector.shape_cast %221 : vector<1x1x6xf32> to vector<1x6xf32>
      %223 = vector.broadcast %220 : vector<26x1xf32> to vector<26x6xf32>
      %224 = vector.broadcast %222 : vector<1x6xf32> to vector<26x6xf32>
      %225 = arith.mulf %223, %224 : vector<26x6xf32>
      %226 = arith.addf %216, %225 : vector<26x6xf32>
      %c1_i32_222 = arith.constant 1 : i32
      %227 = arith.addi %arg20, %c1_i32_222 : i32
      %c0_223 = arith.constant 0 : index
      %228 = arith.index_cast %227 : i32 to index
      %c2_224 = arith.constant 2 : index
      %c0_225 = arith.constant 0 : index
      %229 = vector.load %arg1[%c0_223, %228, %c2_224, %c0_225] : memref<1x28x28x1xf32, #tpu.memory_space<vmem>>, vector<1x1x26x1xf32>
      %230 = vector.shape_cast %229 : vector<1x1x26x1xf32> to vector<26x1xf32>
      %c5_226 = arith.constant 5 : index
      %c0_227 = arith.constant 0 : index
      %c0_228 = arith.constant 0 : index
      %231 = vector.load %arg2[%c5_226, %c0_227, %c0_228] : memref<9x1x6xf32, #tpu.memory_space<vmem>>, vector<1x1x6xf32>
      %232 = vector.shape_cast %231 : vector<1x1x6xf32> to vector<1x6xf32>
      %233 = vector.broadcast %230 : vector<26x1xf32> to vector<26x6xf32>
      %234 = vector.broadcast %232 : vector<1x6xf32> to vector<26x6xf32>
      %235 = arith.mulf %233, %234 : vector<26x6xf32>
      %236 = arith.addf %226, %235 : vector<26x6xf32>
      %c2_i32 = arith.constant 2 : i32
      %237 = arith.addi %arg20, %c2_i32 : i32
      %c0_229 = arith.constant 0 : index
      %238 = arith.index_cast %237 : i32 to index
      %c0_230 = arith.constant 0 : index
      %c0_231 = arith.constant 0 : index
      %239 = vector.load %arg1[%c0_229, %238, %c0_230, %c0_231] : memref<1x28x28x1xf32, #tpu.memory_space<vmem>>, vector<1x1x26x1xf32>
      %240 = vector.shape_cast %239 : vector<1x1x26x1xf32> to vector<26x1xf32>
      %c6_232 = arith.constant 6 : index
      %c0_233 = arith.constant 0 : index
      %c0_234 = arith.constant 0 : index
      %241 = vector.load %arg2[%c6_232, %c0_233, %c0_234] : memref<9x1x6xf32, #tpu.memory_space<vmem>>, vector<1x1x6xf32>
      %242 = vector.shape_cast %241 : vector<1x1x6xf32> to vector<1x6xf32>
      %243 = vector.broadcast %240 : vector<26x1xf32> to vector<26x6xf32>
      %244 = vector.broadcast %242 : vector<1x6xf32> to vector<26x6xf32>
      %245 = arith.mulf %243, %244 : vector<26x6xf32>
      %246 = arith.addf %236, %245 : vector<26x6xf32>
      %c2_i32_235 = arith.constant 2 : i32
      %247 = arith.addi %arg20, %c2_i32_235 : i32
      %c0_236 = arith.constant 0 : index
      %248 = arith.index_cast %247 : i32 to index
      %c1_237 = arith.constant 1 : index
      %c0_238 = arith.constant 0 : index
      %249 = vector.load %arg1[%c0_236, %248, %c1_237, %c0_238] : memref<1x28x28x1xf32, #tpu.memory_space<vmem>>, vector<1x1x26x1xf32>
      %250 = vector.shape_cast %249 : vector<1x1x26x1xf32> to vector<26x1xf32>
      %c7_239 = arith.constant 7 : index
      %c0_240 = arith.constant 0 : index
      %c0_241 = arith.constant 0 : index
      %251 = vector.load %arg2[%c7_239, %c0_240, %c0_241] : memref<9x1x6xf32, #tpu.memory_space<vmem>>, vector<1x1x6xf32>
      %252 = vector.shape_cast %251 : vector<1x1x6xf32> to vector<1x6xf32>
      %253 = vector.broadcast %250 : vector<26x1xf32> to vector<26x6xf32>
      %254 = vector.broadcast %252 : vector<1x6xf32> to vector<26x6xf32>
      %255 = arith.mulf %253, %254 : vector<26x6xf32>
      %256 = arith.addf %246, %255 : vector<26x6xf32>
      %c2_i32_242 = arith.constant 2 : i32
      %257 = arith.addi %arg20, %c2_i32_242 : i32
      %c0_243 = arith.constant 0 : index
      %258 = arith.index_cast %257 : i32 to index
      %c2_244 = arith.constant 2 : index
      %c0_245 = arith.constant 0 : index
      %259 = vector.load %arg1[%c0_243, %258, %c2_244, %c0_245] : memref<1x28x28x1xf32, #tpu.memory_space<vmem>>, vector<1x1x26x1xf32>
      %260 = vector.shape_cast %259 : vector<1x1x26x1xf32> to vector<26x1xf32>
      %c8_246 = arith.constant 8 : index
      %c0_247 = arith.constant 0 : index
      %c0_248 = arith.constant 0 : index
      %261 = vector.load %arg2[%c8_246, %c0_247, %c0_248] : memref<9x1x6xf32, #tpu.memory_space<vmem>>, vector<1x1x6xf32>
      %262 = vector.shape_cast %261 : vector<1x1x6xf32> to vector<1x6xf32>
      %263 = vector.broadcast %260 : vector<26x1xf32> to vector<26x6xf32>
      %264 = vector.broadcast %262 : vector<1x6xf32> to vector<26x6xf32>
      %265 = arith.mulf %263, %264 : vector<26x6xf32>
      %266 = arith.addf %256, %265 : vector<26x6xf32>
      %267 = vector.broadcast %0 : vector<1x6xf32> to vector<26x6xf32>
      %268 = arith.addf %266, %267 : vector<26x6xf32>
      %cst_249 = arith.constant 0.000000e+00 : f32
      %269 = vector.broadcast %cst_249 : f32 to vector<26x6xf32>
      %270 = arith.maximumf %268, %269 : vector<26x6xf32>
      %271 = arith.index_cast %arg20 : i32 to index
      %c0_250 = arith.constant 0 : index
      %c0_251 = arith.constant 0 : index
      %272 = vector.load %arg15[%271, %c0_250, %c0_251] : memref<26x26x6xf32, #tpu.memory_space<vmem>>, vector<1x26x6xf32>
      %273 = vector.shape_cast %272 : vector<1x26x6xf32> to vector<26x6xf32>
      %274 = vector.shape_cast %270 : vector<26x6xf32> to vector<1x26x6xf32>
      tpu.vector_store %arg15[%271, %c0_250, %c0_251], %274 {strides = array<i32>} : memref<26x26x6xf32, #tpu.memory_space<vmem>>, vector<1x26x6xf32>,
    }
    %c26_i32_1 = arith.constant 26 : i32
    %c0_2 = arith.constant 0 : index
    %c0_3 = arith.constant 0 : index
    %2 = vector.load %arg5[%c0_2, %c0_3] : memref<1x6xf32, #tpu.memory_space<vmem>>, vector<1x6xf32>
    %c0_i32_4 = arith.constant 0 : i32
    %c24_i32 = arith.constant 24 : i32
    %3 = arith.addi %c0_i32_4, %c24_i32 : i32
    %c1_i32_5 = arith.constant 1 : i32
    scf.for %arg20 = %c0_i32_4 to %3 step %c1_i32_5  : i32 {
      %cst_186 = arith.constant 0.000000e+00 : f32
      %176 = vector.broadcast %cst_186 : f32 to vector<24x6xf32>
      %c0_i32_187 = arith.constant 0 : i32
      %177 = arith.addi %arg20, %c0_i32_187 : i32
      %178 = arith.index_cast %177 : i32 to index
      %c0_188 = arith.constant 0 : index
      %c0_189 = arith.constant 0 : index
      %179 = vector.load %arg15[%178, %c0_188, %c0_189] : memref<26x26x6xf32, #tpu.memory_space<vmem>>, vector<1x24x6xf32>
      %180 = vector.shape_cast %179 : vector<1x24x6xf32> to vector<24x6xf32>
      %c0_190 = arith.constant 0 : index
      %c0_191 = arith.constant 0 : index
      %c0_192 = arith.constant 0 : index
      %181 = vector.load %arg4[%c0_190, %c0_191, %c0_192] : memref<9x6x6xf32, #tpu.memory_space<vmem>>, vector<1x6x6xf32>
      %182 = vector.shape_cast %181 : vector<1x6x6xf32> to vector<6x6xf32>
      %cst_193 = arith.constant dense<0.000000e+00> : vector<24x6xf32>
      %183 = tpu.matmul %180, %182, %cst_193 {dimension_numbers = #tpu.dot_dimension_numbers<[1], [0], [0], [1], [0, 0, 1, 1], [], []>} : vector<24x6xf32>, vector<6x6xf32>, vector<24x6xf32> -> vector<24x6xf32>
      %184 = arith.addf %176, %183 : vector<24x6xf32>
      %c0_i32_194 = arith.constant 0 : i32
      %185 = arith.addi %arg20, %c0_i32_194 : i32
      %186 = arith.index_cast %185 : i32 to index
      %c1_195 = arith.constant 1 : index
      %c0_196 = arith.constant 0 : index
      %187 = vector.load %arg15[%186, %c1_195, %c0_196] : memref<26x26x6xf32, #tpu.memory_space<vmem>>, vector<1x24x6xf32>
      %188 = vector.shape_cast %187 : vector<1x24x6xf32> to vector<24x6xf32>
      %c1_197 = arith.constant 1 : index
      %c0_198 = arith.constant 0 : index
      %c0_199 = arith.constant 0 : index
      %189 = vector.load %arg4[%c1_197, %c0_198, %c0_199] : memref<9x6x6xf32, #tpu.memory_space<vmem>>, vector<1x6x6xf32>
      %190 = vector.shape_cast %189 : vector<1x6x6xf32> to vector<6x6xf32>
      %cst_200 = arith.constant dense<0.000000e+00> : vector<24x6xf32>
      %191 = tpu.matmul %188, %190, %cst_200 {dimension_numbers = #tpu.dot_dimension_numbers<[1], [0], [0], [1], [0, 0, 1, 1], [], []>} : vector<24x6xf32>, vector<6x6xf32>, vector<24x6xf32> -> vector<24x6xf32>
      %192 = arith.addf %184, %191 : vector<24x6xf32>
      %c0_i32_201 = arith.constant 0 : i32
      %193 = arith.addi %arg20, %c0_i32_201 : i32
      %194 = arith.index_cast %193 : i32 to index
      %c2_202 = arith.constant 2 : index
      %c0_203 = arith.constant 0 : index
      %195 = vector.load %arg15[%194, %c2_202, %c0_203] : memref<26x26x6xf32, #tpu.memory_space<vmem>>, vector<1x24x6xf32>
      %196 = vector.shape_cast %195 : vector<1x24x6xf32> to vector<24x6xf32>
      %c2_204 = arith.constant 2 : index
      %c0_205 = arith.constant 0 : index
      %c0_206 = arith.constant 0 : index
      %197 = vector.load %arg4[%c2_204, %c0_205, %c0_206] : memref<9x6x6xf32, #tpu.memory_space<vmem>>, vector<1x6x6xf32>
      %198 = vector.shape_cast %197 : vector<1x6x6xf32> to vector<6x6xf32>
      %cst_207 = arith.constant dense<0.000000e+00> : vector<24x6xf32>
      %199 = tpu.matmul %196, %198, %cst_207 {dimension_numbers = #tpu.dot_dimension_numbers<[1], [0], [0], [1], [0, 0, 1, 1], [], []>} : vector<24x6xf32>, vector<6x6xf32>, vector<24x6xf32> -> vector<24x6xf32>
      %200 = arith.addf %192, %199 : vector<24x6xf32>
      %c1_i32_208 = arith.constant 1 : i32
      %201 = arith.addi %arg20, %c1_i32_208 : i32
      %202 = arith.index_cast %201 : i32 to index
      %c0_209 = arith.constant 0 : index
      %c0_210 = arith.constant 0 : index
      %203 = vector.load %arg15[%202, %c0_209, %c0_210] : memref<26x26x6xf32, #tpu.memory_space<vmem>>, vector<1x24x6xf32>
      %204 = vector.shape_cast %203 : vector<1x24x6xf32> to vector<24x6xf32>
      %c3_211 = arith.constant 3 : index
      %c0_212 = arith.constant 0 : index
      %c0_213 = arith.constant 0 : index
      %205 = vector.load %arg4[%c3_211, %c0_212, %c0_213] : memref<9x6x6xf32, #tpu.memory_space<vmem>>, vector<1x6x6xf32>
      %206 = vector.shape_cast %205 : vector<1x6x6xf32> to vector<6x6xf32>
      %cst_214 = arith.constant dense<0.000000e+00> : vector<24x6xf32>
      %207 = tpu.matmul %204, %206, %cst_214 {dimension_numbers = #tpu.dot_dimension_numbers<[1], [0], [0], [1], [0, 0, 1, 1], [], []>} : vector<24x6xf32>, vector<6x6xf32>, vector<24x6xf32> -> vector<24x6xf32>
      %208 = arith.addf %200, %207 : vector<24x6xf32>
      %c1_i32_215 = arith.constant 1 : i32
      %209 = arith.addi %arg20, %c1_i32_215 : i32
      %210 = arith.index_cast %209 : i32 to index
      %c1_216 = arith.constant 1 : index
      %c0_217 = arith.constant 0 : index
      %211 = vector.load %arg15[%210, %c1_216, %c0_217] : memref<26x26x6xf32, #tpu.memory_space<vmem>>, vector<1x24x6xf32>
      %212 = vector.shape_cast %211 : vector<1x24x6xf32> to vector<24x6xf32>
      %c4_218 = arith.constant 4 : index
      %c0_219 = arith.constant 0 : index
      %c0_220 = arith.constant 0 : index
      %213 = vector.load %arg4[%c4_218, %c0_219, %c0_220] : memref<9x6x6xf32, #tpu.memory_space<vmem>>, vector<1x6x6xf32>
      %214 = vector.shape_cast %213 : vector<1x6x6xf32> to vector<6x6xf32>
      %cst_221 = arith.constant dense<0.000000e+00> : vector<24x6xf32>
      %215 = tpu.matmul %212, %214, %cst_221 {dimension_numbers = #tpu.dot_dimension_numbers<[1], [0], [0], [1], [0, 0, 1, 1], [], []>} : vector<24x6xf32>, vector<6x6xf32>, vector<24x6xf32> -> vector<24x6xf32>
      %216 = arith.addf %208, %215 : vector<24x6xf32>
      %c1_i32_222 = arith.constant 1 : i32
      %217 = arith.addi %arg20, %c1_i32_222 : i32
      %218 = arith.index_cast %217 : i32 to index
      %c2_223 = arith.constant 2 : index
      %c0_224 = arith.constant 0 : index
      %219 = vector.load %arg15[%218, %c2_223, %c0_224] : memref<26x26x6xf32, #tpu.memory_space<vmem>>, vector<1x24x6xf32>
      %220 = vector.shape_cast %219 : vector<1x24x6xf32> to vector<24x6xf32>
      %c5_225 = arith.constant 5 : index
      %c0_226 = arith.constant 0 : index
      %c0_227 = arith.constant 0 : index
      %221 = vector.load %arg4[%c5_225, %c0_226, %c0_227] : memref<9x6x6xf32, #tpu.memory_space<vmem>>, vector<1x6x6xf32>
      %222 = vector.shape_cast %221 : vector<1x6x6xf32> to vector<6x6xf32>
      %cst_228 = arith.constant dense<0.000000e+00> : vector<24x6xf32>
      %223 = tpu.matmul %220, %222, %cst_228 {dimension_numbers = #tpu.dot_dimension_numbers<[1], [0], [0], [1], [0, 0, 1, 1], [], []>} : vector<24x6xf32>, vector<6x6xf32>, vector<24x6xf32> -> vector<24x6xf32>
      %224 = arith.addf %216, %223 : vector<24x6xf32>
      %c2_i32 = arith.constant 2 : i32
      %225 = arith.addi %arg20, %c2_i32 : i32
      %226 = arith.index_cast %225 : i32 to index
      %c0_229 = arith.constant 0 : index
      %c0_230 = arith.constant 0 : index
      %227 = vector.load %arg15[%226, %c0_229, %c0_230] : memref<26x26x6xf32, #tpu.memory_space<vmem>>, vector<1x24x6xf32>
      %228 = vector.shape_cast %227 : vector<1x24x6xf32> to vector<24x6xf32>
      %c6_231 = arith.constant 6 : index
      %c0_232 = arith.constant 0 : index
      %c0_233 = arith.constant 0 : index
      %229 = vector.load %arg4[%c6_231, %c0_232, %c0_233] : memref<9x6x6xf32, #tpu.memory_space<vmem>>, vector<1x6x6xf32>
      %230 = vector.shape_cast %229 : vector<1x6x6xf32> to vector<6x6xf32>
      %cst_234 = arith.constant dense<0.000000e+00> : vector<24x6xf32>
      %231 = tpu.matmul %228, %230, %cst_234 {dimension_numbers = #tpu.dot_dimension_numbers<[1], [0], [0], [1], [0, 0, 1, 1], [], []>} : vector<24x6xf32>, vector<6x6xf32>, vector<24x6xf32> -> vector<24x6xf32>
      %232 = arith.addf %224, %231 : vector<24x6xf32>
      %c2_i32_235 = arith.constant 2 : i32
      %233 = arith.addi %arg20, %c2_i32_235 : i32
      %234 = arith.index_cast %233 : i32 to index
      %c1_236 = arith.constant 1 : index
      %c0_237 = arith.constant 0 : index
      %235 = vector.load %arg15[%234, %c1_236, %c0_237] : memref<26x26x6xf32, #tpu.memory_space<vmem>>, vector<1x24x6xf32>
      %236 = vector.shape_cast %235 : vector<1x24x6xf32> to vector<24x6xf32>
      %c7_238 = arith.constant 7 : index
      %c0_239 = arith.constant 0 : index
      %c0_240 = arith.constant 0 : index
      %237 = vector.load %arg4[%c7_238, %c0_239, %c0_240] : memref<9x6x6xf32, #tpu.memory_space<vmem>>, vector<1x6x6xf32>
      %238 = vector.shape_cast %237 : vector<1x6x6xf32> to vector<6x6xf32>
      %cst_241 = arith.constant dense<0.000000e+00> : vector<24x6xf32>
      %239 = tpu.matmul %236, %238, %cst_241 {dimension_numbers = #tpu.dot_dimension_numbers<[1], [0], [0], [1], [0, 0, 1, 1], [], []>} : vector<24x6xf32>, vector<6x6xf32>, vector<24x6xf32> -> vector<24x6xf32>
      %240 = arith.addf %232, %239 : vector<24x6xf32>
      %c2_i32_242 = arith.constant 2 : i32
      %241 = arith.addi %arg20, %c2_i32_242 : i32
      %242 = arith.index_cast %241 : i32 to index
      %c2_243 = arith.constant 2 : index
      %c0_244 = arith.constant 0 : index
      %243 = vector.load %arg15[%242, %c2_243, %c0_244] : memref<26x26x6xf32, #tpu.memory_space<vmem>>, vector<1x24x6xf32>
      %244 = vector.shape_cast %243 : vector<1x24x6xf32> to vector<24x6xf32>
      %c8_245 = arith.constant 8 : index
      %c0_246 = arith.constant 0 : index
      %c0_247 = arith.constant 0 : index
      %245 = vector.load %arg4[%c8_245, %c0_246, %c0_247] : memref<9x6x6xf32, #tpu.memory_space<vmem>>, vector<1x6x6xf32>
      %246 = vector.shape_cast %245 : vector<1x6x6xf32> to vector<6x6xf32>
      %cst_248 = arith.constant dense<0.000000e+00> : vector<24x6xf32>
      %247 = tpu.matmul %244, %246, %cst_248 {dimension_numbers = #tpu.dot_dimension_numbers<[1], [0], [0], [1], [0, 0, 1, 1], [], []>} : vector<24x6xf32>, vector<6x6xf32>, vector<24x6xf32> -> vector<24x6xf32>
      %248 = arith.addf %240, %247 : vector<24x6xf32>
      %249 = vector.broadcast %2 : vector<1x6xf32> to vector<24x6xf32>
      %250 = arith.addf %248, %249 : vector<24x6xf32>
      %cst_249 = arith.constant 0.000000e+00 : f32
      %251 = vector.broadcast %cst_249 : f32 to vector<24x6xf32>
      %252 = arith.maximumf %250, %251 : vector<24x6xf32>
      %253 = arith.index_cast %arg20 : i32 to index
      %c0_250 = arith.constant 0 : index
      %c0_251 = arith.constant 0 : index
      %254 = vector.load %arg16[%253, %c0_250, %c0_251] : memref<24x24x6xf32, #tpu.memory_space<vmem>>, vector<1x24x6xf32>
      %255 = vector.shape_cast %254 : vector<1x24x6xf32> to vector<24x6xf32>
      %256 = vector.shape_cast %252 : vector<24x6xf32> to vector<1x24x6xf32>
      tpu.vector_store %arg16[%253, %c0_250, %c0_251], %256 {strides = array<i32>} : memref<24x24x6xf32, #tpu.memory_space<vmem>>, vector<1x24x6xf32>,
    }
    %c24_i32_6 = arith.constant 24 : i32
    %c0_i32_7 = arith.constant 0 : i32
    %c12_i32 = arith.constant 12 : i32
    %4 = arith.addi %c0_i32_7, %c12_i32 : i32
    %c1_i32_8 = arith.constant 1 : i32
    scf.for %arg20 = %c0_i32_7 to %4 step %c1_i32_8  : i32 {
      %c2_i32 = arith.constant 2 : i32
      %176 = arith.muli %c2_i32, %arg20 : i32
      %177 = arith.index_cast %176 : i32 to index
      %c0_186 = arith.constant 0 : index
      %c0_187 = arith.constant 0 : index
      %178 = vector.load %arg16[%177, %c0_186, %c0_187] : memref<24x24x6xf32, #tpu.memory_space<vmem>>, vector<1x24x6xf32>
      %179 = vector.shape_cast %178 : vector<1x24x6xf32> to vector<24x6xf32>
      %c2_i32_188 = arith.constant 2 : i32
      %180 = arith.muli %c2_i32_188, %arg20 : i32
      %c1_i32_189 = arith.constant 1 : i32
      %181 = arith.addi %180, %c1_i32_189 : i32
      %182 = arith.index_cast %181 : i32 to index
      %c0_190 = arith.constant 0 : index
      %c0_191 = arith.constant 0 : index
      %183 = vector.load %arg16[%182, %c0_190, %c0_191] : memref<24x24x6xf32, #tpu.memory_space<vmem>>, vector<1x24x6xf32>
      %184 = vector.shape_cast %183 : vector<1x24x6xf32> to vector<24x6xf32>
      %185 = arith.maximumf %179, %184 : vector<24x6xf32>
      %186 = vector.extract_strided_slice %185 {offsets = [0, 0], sizes = [1, 6], strides = [1, 1]} : vector<24x6xf32> to vector<1x6xf32>
      %187 = vector.extract_strided_slice %185 {offsets = [1, 0], sizes = [1, 6], strides = [1, 1]} : vector<24x6xf32> to vector<1x6xf32>
      %188 = arith.maximumf %186, %187 : vector<1x6xf32>
      %189 = arith.index_cast %arg20 : i32 to index
      %c0_192 = arith.constant 0 : index
      %c0_193 = arith.constant 0 : index
      %190 = vector.load %arg17[%189, %c0_192, %c0_193] : memref<12x12x6xf32, #tpu.memory_space<vmem>>, vector<1x1x6xf32>
      %191 = vector.shape_cast %190 : vector<1x1x6xf32> to vector<1x6xf32>
      %192 = vector.shape_cast %188 : vector<1x6xf32> to vector<1x1x6xf32>
      tpu.vector_store %arg17[%189, %c0_192, %c0_193], %192 {strides = array<i32>} : memref<12x12x6xf32, #tpu.memory_space<vmem>>, vector<1x1x6xf32>,
      %193 = vector.extract_strided_slice %185 {offsets = [2, 0], sizes = [1, 6], strides = [1, 1]} : vector<24x6xf32> to vector<1x6xf32>
      %194 = vector.extract_strided_slice %185 {offsets = [3, 0], sizes = [1, 6], strides = [1, 1]} : vector<24x6xf32> to vector<1x6xf32>
      %195 = arith.maximumf %193, %194 : vector<1x6xf32>
      %196 = arith.index_cast %arg20 : i32 to index
      %c1_194 = arith.constant 1 : index
      %c0_195 = arith.constant 0 : index
      %197 = vector.load %arg17[%196, %c1_194, %c0_195] : memref<12x12x6xf32, #tpu.memory_space<vmem>>, vector<1x1x6xf32>
      %198 = vector.shape_cast %197 : vector<1x1x6xf32> to vector<1x6xf32>
      %199 = vector.shape_cast %195 : vector<1x6xf32> to vector<1x1x6xf32>
      tpu.vector_store %arg17[%196, %c1_194, %c0_195], %199 {strides = array<i32>} : memref<12x12x6xf32, #tpu.memory_space<vmem>>, vector<1x1x6xf32>,
      %200 = vector.extract_strided_slice %185 {offsets = [4, 0], sizes = [1, 6], strides = [1, 1]} : vector<24x6xf32> to vector<1x6xf32>
      %201 = vector.extract_strided_slice %185 {offsets = [5, 0], sizes = [1, 6], strides = [1, 1]} : vector<24x6xf32> to vector<1x6xf32>
      %202 = arith.maximumf %200, %201 : vector<1x6xf32>
      %203 = arith.index_cast %arg20 : i32 to index
      %c2_196 = arith.constant 2 : index
      %c0_197 = arith.constant 0 : index
      %204 = vector.load %arg17[%203, %c2_196, %c0_197] : memref<12x12x6xf32, #tpu.memory_space<vmem>>, vector<1x1x6xf32>
      %205 = vector.shape_cast %204 : vector<1x1x6xf32> to vector<1x6xf32>
      %206 = vector.shape_cast %202 : vector<1x6xf32> to vector<1x1x6xf32>
      tpu.vector_store %arg17[%203, %c2_196, %c0_197], %206 {strides = array<i32>} : memref<12x12x6xf32, #tpu.memory_space<vmem>>, vector<1x1x6xf32>,
      %207 = vector.extract_strided_slice %185 {offsets = [6, 0], sizes = [1, 6], strides = [1, 1]} : vector<24x6xf32> to vector<1x6xf32>
      %208 = vector.extract_strided_slice %185 {offsets = [7, 0], sizes = [1, 6], strides = [1, 1]} : vector<24x6xf32> to vector<1x6xf32>
      %209 = arith.maximumf %207, %208 : vector<1x6xf32>
      %210 = arith.index_cast %arg20 : i32 to index
      %c3_198 = arith.constant 3 : index
      %c0_199 = arith.constant 0 : index
      %211 = vector.load %arg17[%210, %c3_198, %c0_199] : memref<12x12x6xf32, #tpu.memory_space<vmem>>, vector<1x1x6xf32>
      %212 = vector.shape_cast %211 : vector<1x1x6xf32> to vector<1x6xf32>
      %213 = vector.shape_cast %209 : vector<1x6xf32> to vector<1x1x6xf32>
      tpu.vector_store %arg17[%210, %c3_198, %c0_199], %213 {strides = array<i32>} : memref<12x12x6xf32, #tpu.memory_space<vmem>>, vector<1x1x6xf32>,
      %214 = vector.extract_strided_slice %185 {offsets = [8, 0], sizes = [1, 6], strides = [1, 1]} : vector<24x6xf32> to vector<1x6xf32>
      %215 = vector.extract_strided_slice %185 {offsets = [9, 0], sizes = [1, 6], strides = [1, 1]} : vector<24x6xf32> to vector<1x6xf32>
      %216 = arith.maximumf %214, %215 : vector<1x6xf32>
      %217 = arith.index_cast %arg20 : i32 to index
      %c4_200 = arith.constant 4 : index
      %c0_201 = arith.constant 0 : index
      %218 = vector.load %arg17[%217, %c4_200, %c0_201] : memref<12x12x6xf32, #tpu.memory_space<vmem>>, vector<1x1x6xf32>
      %219 = vector.shape_cast %218 : vector<1x1x6xf32> to vector<1x6xf32>
      %220 = vector.shape_cast %216 : vector<1x6xf32> to vector<1x1x6xf32>
      tpu.vector_store %arg17[%217, %c4_200, %c0_201], %220 {strides = array<i32>} : memref<12x12x6xf32, #tpu.memory_space<vmem>>, vector<1x1x6xf32>,
      %221 = vector.extract_strided_slice %185 {offsets = [10, 0], sizes = [1, 6], strides = [1, 1]} : vector<24x6xf32> to vector<1x6xf32>
      %222 = vector.extract_strided_slice %185 {offsets = [11, 0], sizes = [1, 6], strides = [1, 1]} : vector<24x6xf32> to vector<1x6xf32>
      %223 = arith.maximumf %221, %222 : vector<1x6xf32>
      %224 = arith.index_cast %arg20 : i32 to index
      %c5_202 = arith.constant 5 : index
      %c0_203 = arith.constant 0 : index
      %225 = vector.load %arg17[%224, %c5_202, %c0_203] : memref<12x12x6xf32, #tpu.memory_space<vmem>>, vector<1x1x6xf32>
      %226 = vector.shape_cast %225 : vector<1x1x6xf32> to vector<1x6xf32>
      %227 = vector.shape_cast %223 : vector<1x6xf32> to vector<1x1x6xf32>
      tpu.vector_store %arg17[%224, %c5_202, %c0_203], %227 {strides = array<i32>} : memref<12x12x6xf32, #tpu.memory_space<vmem>>, vector<1x1x6xf32>,
      %228 = vector.extract_strided_slice %185 {offsets = [12, 0], sizes = [1, 6], strides = [1, 1]} : vector<24x6xf32> to vector<1x6xf32>
      %229 = vector.extract_strided_slice %185 {offsets = [13, 0], sizes = [1, 6], strides = [1, 1]} : vector<24x6xf32> to vector<1x6xf32>
      %230 = arith.maximumf %228, %229 : vector<1x6xf32>
      %231 = arith.index_cast %arg20 : i32 to index
      %c6_204 = arith.constant 6 : index
      %c0_205 = arith.constant 0 : index
      %232 = vector.load %arg17[%231, %c6_204, %c0_205] : memref<12x12x6xf32, #tpu.memory_space<vmem>>, vector<1x1x6xf32>
      %233 = vector.shape_cast %232 : vector<1x1x6xf32> to vector<1x6xf32>
      %234 = vector.shape_cast %230 : vector<1x6xf32> to vector<1x1x6xf32>
      tpu.vector_store %arg17[%231, %c6_204, %c0_205], %234 {strides = array<i32>} : memref<12x12x6xf32, #tpu.memory_space<vmem>>, vector<1x1x6xf32>,
      %235 = vector.extract_strided_slice %185 {offsets = [14, 0], sizes = [1, 6], strides = [1, 1]} : vector<24x6xf32> to vector<1x6xf32>
      %236 = vector.extract_strided_slice %185 {offsets = [15, 0], sizes = [1, 6], strides = [1, 1]} : vector<24x6xf32> to vector<1x6xf32>
      %237 = arith.maximumf %235, %236 : vector<1x6xf32>
      %238 = arith.index_cast %arg20 : i32 to index
      %c7_206 = arith.constant 7 : index
      %c0_207 = arith.constant 0 : index
      %239 = vector.load %arg17[%238, %c7_206, %c0_207] : memref<12x12x6xf32, #tpu.memory_space<vmem>>, vector<1x1x6xf32>
      %240 = vector.shape_cast %239 : vector<1x1x6xf32> to vector<1x6xf32>
      %241 = vector.shape_cast %237 : vector<1x6xf32> to vector<1x1x6xf32>
      tpu.vector_store %arg17[%238, %c7_206, %c0_207], %241 {strides = array<i32>} : memref<12x12x6xf32, #tpu.memory_space<vmem>>, vector<1x1x6xf32>,
      %242 = vector.extract_strided_slice %185 {offsets = [16, 0], sizes = [1, 6], strides = [1, 1]} : vector<24x6xf32> to vector<1x6xf32>
      %243 = vector.extract_strided_slice %185 {offsets = [17, 0], sizes = [1, 6], strides = [1, 1]} : vector<24x6xf32> to vector<1x6xf32>
      %244 = arith.maximumf %242, %243 : vector<1x6xf32>
      %245 = arith.index_cast %arg20 : i32 to index
      %c8_208 = arith.constant 8 : index
      %c0_209 = arith.constant 0 : index
      %246 = vector.load %arg17[%245, %c8_208, %c0_209] : memref<12x12x6xf32, #tpu.memory_space<vmem>>, vector<1x1x6xf32>
      %247 = vector.shape_cast %246 : vector<1x1x6xf32> to vector<1x6xf32>
      %248 = vector.shape_cast %244 : vector<1x6xf32> to vector<1x1x6xf32>
      tpu.vector_store %arg17[%245, %c8_208, %c0_209], %248 {strides = array<i32>} : memref<12x12x6xf32, #tpu.memory_space<vmem>>, vector<1x1x6xf32>,
      %249 = vector.extract_strided_slice %185 {offsets = [18, 0], sizes = [1, 6], strides = [1, 1]} : vector<24x6xf32> to vector<1x6xf32>
      %250 = vector.extract_strided_slice %185 {offsets = [19, 0], sizes = [1, 6], strides = [1, 1]} : vector<24x6xf32> to vector<1x6xf32>
      %251 = arith.maximumf %249, %250 : vector<1x6xf32>
      %252 = arith.index_cast %arg20 : i32 to index
      %c9_210 = arith.constant 9 : index
      %c0_211 = arith.constant 0 : index
      %253 = vector.load %arg17[%252, %c9_210, %c0_211] : memref<12x12x6xf32, #tpu.memory_space<vmem>>, vector<1x1x6xf32>
      %254 = vector.shape_cast %253 : vector<1x1x6xf32> to vector<1x6xf32>
      %255 = vector.shape_cast %251 : vector<1x6xf32> to vector<1x1x6xf32>
      tpu.vector_store %arg17[%252, %c9_210, %c0_211], %255 {strides = array<i32>} : memref<12x12x6xf32, #tpu.memory_space<vmem>>, vector<1x1x6xf32>,
      %256 = vector.extract_strided_slice %185 {offsets = [20, 0], sizes = [1, 6], strides = [1, 1]} : vector<24x6xf32> to vector<1x6xf32>
      %257 = vector.extract_strided_slice %185 {offsets = [21, 0], sizes = [1, 6], strides = [1, 1]} : vector<24x6xf32> to vector<1x6xf32>
      %258 = arith.maximumf %256, %257 : vector<1x6xf32>
      %259 = arith.index_cast %arg20 : i32 to index
      %c10_212 = arith.constant 10 : index
      %c0_213 = arith.constant 0 : index
      %260 = vector.load %arg17[%259, %c10_212, %c0_213] : memref<12x12x6xf32, #tpu.memory_space<vmem>>, vector<1x1x6xf32>
      %261 = vector.shape_cast %260 : vector<1x1x6xf32> to vector<1x6xf32>
      %262 = vector.shape_cast %258 : vector<1x6xf32> to vector<1x1x6xf32>
      tpu.vector_store %arg17[%259, %c10_212, %c0_213], %262 {strides = array<i32>} : memref<12x12x6xf32, #tpu.memory_space<vmem>>, vector<1x1x6xf32>,
      %263 = vector.extract_strided_slice %185 {offsets = [22, 0], sizes = [1, 6], strides = [1, 1]} : vector<24x6xf32> to vector<1x6xf32>
      %264 = vector.extract_strided_slice %185 {offsets = [23, 0], sizes = [1, 6], strides = [1, 1]} : vector<24x6xf32> to vector<1x6xf32>
      %265 = arith.maximumf %263, %264 : vector<1x6xf32>
      %266 = arith.index_cast %arg20 : i32 to index
      %c11_214 = arith.constant 11 : index
      %c0_215 = arith.constant 0 : index
      %267 = vector.load %arg17[%266, %c11_214, %c0_215] : memref<12x12x6xf32, #tpu.memory_space<vmem>>, vector<1x1x6xf32>
      %268 = vector.shape_cast %267 : vector<1x1x6xf32> to vector<1x6xf32>
      %269 = vector.shape_cast %265 : vector<1x6xf32> to vector<1x1x6xf32>
      tpu.vector_store %arg17[%266, %c11_214, %c0_215], %269 {strides = array<i32>} : memref<12x12x6xf32, #tpu.memory_space<vmem>>, vector<1x1x6xf32>,
    }
    %c12_i32_9 = arith.constant 12 : i32
    %c0_10 = arith.constant 0 : index
    %c0_11 = arith.constant 0 : index
    %5 = vector.load %arg7[%c0_10, %c0_11] : memref<1x16xf32, #tpu.memory_space<vmem>>, vector<1x16xf32>
    %c0_i32_12 = arith.constant 0 : i32
    %c10_i32 = arith.constant 10 : i32
    %6 = arith.addi %c0_i32_12, %c10_i32 : i32
    %c1_i32_13 = arith.constant 1 : i32
    scf.for %arg20 = %c0_i32_12 to %6 step %c1_i32_13  : i32 {
      %cst_186 = arith.constant 0.000000e+00 : f32
      %176 = vector.broadcast %cst_186 : f32 to vector<10x16xf32>
      %c0_i32_187 = arith.constant 0 : i32
      %177 = arith.addi %arg20, %c0_i32_187 : i32
      %178 = arith.index_cast %177 : i32 to index
      %c0_188 = arith.constant 0 : index
      %c0_189 = arith.constant 0 : index
      %179 = vector.load %arg17[%178, %c0_188, %c0_189] : memref<12x12x6xf32, #tpu.memory_space<vmem>>, vector<1x10x6xf32>
      %180 = vector.shape_cast %179 : vector<1x10x6xf32> to vector<10x6xf32>
      %c0_190 = arith.constant 0 : index
      %c0_191 = arith.constant 0 : index
      %c0_192 = arith.constant 0 : index
      %181 = vector.load %arg6[%c0_190, %c0_191, %c0_192] : memref<9x6x16xf32, #tpu.memory_space<vmem>>, vector<1x6x16xf32>
      %182 = vector.shape_cast %181 : vector<1x6x16xf32> to vector<6x16xf32>
      %cst_193 = arith.constant dense<0.000000e+00> : vector<10x16xf32>
      %183 = tpu.matmul %180, %182, %cst_193 {dimension_numbers = #tpu.dot_dimension_numbers<[1], [0], [0], [1], [0, 0, 1, 1], [], []>} : vector<10x6xf32>, vector<6x16xf32>, vector<10x16xf32> -> vector<10x16xf32>
      %184 = arith.addf %176, %183 : vector<10x16xf32>
      %c0_i32_194 = arith.constant 0 : i32
      %185 = arith.addi %arg20, %c0_i32_194 : i32
      %186 = arith.index_cast %185 : i32 to index
      %c1_195 = arith.constant 1 : index
      %c0_196 = arith.constant 0 : index
      %187 = vector.load %arg17[%186, %c1_195, %c0_196] : memref<12x12x6xf32, #tpu.memory_space<vmem>>, vector<1x10x6xf32>
      %188 = vector.shape_cast %187 : vector<1x10x6xf32> to vector<10x6xf32>
      %c1_197 = arith.constant 1 : index
      %c0_198 = arith.constant 0 : index
      %c0_199 = arith.constant 0 : index
      %189 = vector.load %arg6[%c1_197, %c0_198, %c0_199] : memref<9x6x16xf32, #tpu.memory_space<vmem>>, vector<1x6x16xf32>
      %190 = vector.shape_cast %189 : vector<1x6x16xf32> to vector<6x16xf32>
      %cst_200 = arith.constant dense<0.000000e+00> : vector<10x16xf32>
      %191 = tpu.matmul %188, %190, %cst_200 {dimension_numbers = #tpu.dot_dimension_numbers<[1], [0], [0], [1], [0, 0, 1, 1], [], []>} : vector<10x6xf32>, vector<6x16xf32>, vector<10x16xf32> -> vector<10x16xf32>
      %192 = arith.addf %184, %191 : vector<10x16xf32>
      %c0_i32_201 = arith.constant 0 : i32
      %193 = arith.addi %arg20, %c0_i32_201 : i32
      %194 = arith.index_cast %193 : i32 to index
      %c2_202 = arith.constant 2 : index
      %c0_203 = arith.constant 0 : index
      %195 = vector.load %arg17[%194, %c2_202, %c0_203] : memref<12x12x6xf32, #tpu.memory_space<vmem>>, vector<1x10x6xf32>
      %196 = vector.shape_cast %195 : vector<1x10x6xf32> to vector<10x6xf32>
      %c2_204 = arith.constant 2 : index
      %c0_205 = arith.constant 0 : index
      %c0_206 = arith.constant 0 : index
      %197 = vector.load %arg6[%c2_204, %c0_205, %c0_206] : memref<9x6x16xf32, #tpu.memory_space<vmem>>, vector<1x6x16xf32>
      %198 = vector.shape_cast %197 : vector<1x6x16xf32> to vector<6x16xf32>
      %cst_207 = arith.constant dense<0.000000e+00> : vector<10x16xf32>
      %199 = tpu.matmul %196, %198, %cst_207 {dimension_numbers = #tpu.dot_dimension_numbers<[1], [0], [0], [1], [0, 0, 1, 1], [], []>} : vector<10x6xf32>, vector<6x16xf32>, vector<10x16xf32> -> vector<10x16xf32>
      %200 = arith.addf %192, %199 : vector<10x16xf32>
      %c1_i32_208 = arith.constant 1 : i32
      %201 = arith.addi %arg20, %c1_i32_208 : i32
      %202 = arith.index_cast %201 : i32 to index
      %c0_209 = arith.constant 0 : index
      %c0_210 = arith.constant 0 : index
      %203 = vector.load %arg17[%202, %c0_209, %c0_210] : memref<12x12x6xf32, #tpu.memory_space<vmem>>, vector<1x10x6xf32>
      %204 = vector.shape_cast %203 : vector<1x10x6xf32> to vector<10x6xf32>
      %c3_211 = arith.constant 3 : index
      %c0_212 = arith.constant 0 : index
      %c0_213 = arith.constant 0 : index
      %205 = vector.load %arg6[%c3_211, %c0_212, %c0_213] : memref<9x6x16xf32, #tpu.memory_space<vmem>>, vector<1x6x16xf32>
      %206 = vector.shape_cast %205 : vector<1x6x16xf32> to vector<6x16xf32>
      %cst_214 = arith.constant dense<0.000000e+00> : vector<10x16xf32>
      %207 = tpu.matmul %204, %206, %cst_214 {dimension_numbers = #tpu.dot_dimension_numbers<[1], [0], [0], [1], [0, 0, 1, 1], [], []>} : vector<10x6xf32>, vector<6x16xf32>, vector<10x16xf32> -> vector<10x16xf32>
      %208 = arith.addf %200, %207 : vector<10x16xf32>
      %c1_i32_215 = arith.constant 1 : i32
      %209 = arith.addi %arg20, %c1_i32_215 : i32
      %210 = arith.index_cast %209 : i32 to index
      %c1_216 = arith.constant 1 : index
      %c0_217 = arith.constant 0 : index
      %211 = vector.load %arg17[%210, %c1_216, %c0_217] : memref<12x12x6xf32, #tpu.memory_space<vmem>>, vector<1x10x6xf32>
      %212 = vector.shape_cast %211 : vector<1x10x6xf32> to vector<10x6xf32>
      %c4_218 = arith.constant 4 : index
      %c0_219 = arith.constant 0 : index
      %c0_220 = arith.constant 0 : index
      %213 = vector.load %arg6[%c4_218, %c0_219, %c0_220] : memref<9x6x16xf32, #tpu.memory_space<vmem>>, vector<1x6x16xf32>
      %214 = vector.shape_cast %213 : vector<1x6x16xf32> to vector<6x16xf32>
      %cst_221 = arith.constant dense<0.000000e+00> : vector<10x16xf32>
      %215 = tpu.matmul %212, %214, %cst_221 {dimension_numbers = #tpu.dot_dimension_numbers<[1], [0], [0], [1], [0, 0, 1, 1], [], []>} : vector<10x6xf32>, vector<6x16xf32>, vector<10x16xf32> -> vector<10x16xf32>
      %216 = arith.addf %208, %215 : vector<10x16xf32>
      %c1_i32_222 = arith.constant 1 : i32
      %217 = arith.addi %arg20, %c1_i32_222 : i32
      %218 = arith.index_cast %217 : i32 to index
      %c2_223 = arith.constant 2 : index
      %c0_224 = arith.constant 0 : index
      %219 = vector.load %arg17[%218, %c2_223, %c0_224] : memref<12x12x6xf32, #tpu.memory_space<vmem>>, vector<1x10x6xf32>
      %220 = vector.shape_cast %219 : vector<1x10x6xf32> to vector<10x6xf32>
      %c5_225 = arith.constant 5 : index
      %c0_226 = arith.constant 0 : index
      %c0_227 = arith.constant 0 : index
      %221 = vector.load %arg6[%c5_225, %c0_226, %c0_227] : memref<9x6x16xf32, #tpu.memory_space<vmem>>, vector<1x6x16xf32>
      %222 = vector.shape_cast %221 : vector<1x6x16xf32> to vector<6x16xf32>
      %cst_228 = arith.constant dense<0.000000e+00> : vector<10x16xf32>
      %223 = tpu.matmul %220, %222, %cst_228 {dimension_numbers = #tpu.dot_dimension_numbers<[1], [0], [0], [1], [0, 0, 1, 1], [], []>} : vector<10x6xf32>, vector<6x16xf32>, vector<10x16xf32> -> vector<10x16xf32>
      %224 = arith.addf %216, %223 : vector<10x16xf32>
      %c2_i32 = arith.constant 2 : i32
      %225 = arith.addi %arg20, %c2_i32 : i32
      %226 = arith.index_cast %225 : i32 to index
      %c0_229 = arith.constant 0 : index
      %c0_230 = arith.constant 0 : index
      %227 = vector.load %arg17[%226, %c0_229, %c0_230] : memref<12x12x6xf32, #tpu.memory_space<vmem>>, vector<1x10x6xf32>
      %228 = vector.shape_cast %227 : vector<1x10x6xf32> to vector<10x6xf32>
      %c6_231 = arith.constant 6 : index
      %c0_232 = arith.constant 0 : index
      %c0_233 = arith.constant 0 : index
      %229 = vector.load %arg6[%c6_231, %c0_232, %c0_233] : memref<9x6x16xf32, #tpu.memory_space<vmem>>, vector<1x6x16xf32>
      %230 = vector.shape_cast %229 : vector<1x6x16xf32> to vector<6x16xf32>
      %cst_234 = arith.constant dense<0.000000e+00> : vector<10x16xf32>
      %231 = tpu.matmul %228, %230, %cst_234 {dimension_numbers = #tpu.dot_dimension_numbers<[1], [0], [0], [1], [0, 0, 1, 1], [], []>} : vector<10x6xf32>, vector<6x16xf32>, vector<10x16xf32> -> vector<10x16xf32>
      %232 = arith.addf %224, %231 : vector<10x16xf32>
      %c2_i32_235 = arith.constant 2 : i32
      %233 = arith.addi %arg20, %c2_i32_235 : i32
      %234 = arith.index_cast %233 : i32 to index
      %c1_236 = arith.constant 1 : index
      %c0_237 = arith.constant 0 : index
      %235 = vector.load %arg17[%234, %c1_236, %c0_237] : memref<12x12x6xf32, #tpu.memory_space<vmem>>, vector<1x10x6xf32>
      %236 = vector.shape_cast %235 : vector<1x10x6xf32> to vector<10x6xf32>
      %c7_238 = arith.constant 7 : index
      %c0_239 = arith.constant 0 : index
      %c0_240 = arith.constant 0 : index
      %237 = vector.load %arg6[%c7_238, %c0_239, %c0_240] : memref<9x6x16xf32, #tpu.memory_space<vmem>>, vector<1x6x16xf32>
      %238 = vector.shape_cast %237 : vector<1x6x16xf32> to vector<6x16xf32>
      %cst_241 = arith.constant dense<0.000000e+00> : vector<10x16xf32>
      %239 = tpu.matmul %236, %238, %cst_241 {dimension_numbers = #tpu.dot_dimension_numbers<[1], [0], [0], [1], [0, 0, 1, 1], [], []>} : vector<10x6xf32>, vector<6x16xf32>, vector<10x16xf32> -> vector<10x16xf32>
      %240 = arith.addf %232, %239 : vector<10x16xf32>
      %c2_i32_242 = arith.constant 2 : i32
      %241 = arith.addi %arg20, %c2_i32_242 : i32
      %242 = arith.index_cast %241 : i32 to index
      %c2_243 = arith.constant 2 : index
      %c0_244 = arith.constant 0 : index
      %243 = vector.load %arg17[%242, %c2_243, %c0_244] : memref<12x12x6xf32, #tpu.memory_space<vmem>>, vector<1x10x6xf32>
      %244 = vector.shape_cast %243 : vector<1x10x6xf32> to vector<10x6xf32>
      %c8_245 = arith.constant 8 : index
      %c0_246 = arith.constant 0 : index
      %c0_247 = arith.constant 0 : index
      %245 = vector.load %arg6[%c8_245, %c0_246, %c0_247] : memref<9x6x16xf32, #tpu.memory_space<vmem>>, vector<1x6x16xf32>
      %246 = vector.shape_cast %245 : vector<1x6x16xf32> to vector<6x16xf32>
      %cst_248 = arith.constant dense<0.000000e+00> : vector<10x16xf32>
      %247 = tpu.matmul %244, %246, %cst_248 {dimension_numbers = #tpu.dot_dimension_numbers<[1], [0], [0], [1], [0, 0, 1, 1], [], []>} : vector<10x6xf32>, vector<6x16xf32>, vector<10x16xf32> -> vector<10x16xf32>
      %248 = arith.addf %240, %247 : vector<10x16xf32>
      %249 = vector.broadcast %5 : vector<1x16xf32> to vector<10x16xf32>
      %250 = arith.addf %248, %249 : vector<10x16xf32>
      %cst_249 = arith.constant 0.000000e+00 : f32
      %251 = vector.broadcast %cst_249 : f32 to vector<10x16xf32>
      %252 = arith.maximumf %250, %251 : vector<10x16xf32>
      %253 = arith.index_cast %arg20 : i32 to index
      %c0_250 = arith.constant 0 : index
      %c0_251 = arith.constant 0 : index
      %254 = vector.load %arg18[%253, %c0_250, %c0_251] : memref<10x10x16xf32, #tpu.memory_space<vmem>>, vector<1x10x16xf32>
      %255 = vector.shape_cast %254 : vector<1x10x16xf32> to vector<10x16xf32>
      %256 = vector.shape_cast %252 : vector<10x16xf32> to vector<1x10x16xf32>
      tpu.vector_store %arg18[%253, %c0_250, %c0_251], %256 {strides = array<i32>} : memref<10x10x16xf32, #tpu.memory_space<vmem>>, vector<1x10x16xf32>,
    }
    %c10_i32_14 = arith.constant 10 : i32
    %c0_i32_15 = arith.constant 0 : i32
    %c5_i32 = arith.constant 5 : i32
    %7 = arith.addi %c0_i32_15, %c5_i32 : i32
    %c1_i32_16 = arith.constant 1 : i32
    scf.for %arg20 = %c0_i32_15 to %7 step %c1_i32_16  : i32 {
      %c2_i32 = arith.constant 2 : i32
      %176 = arith.muli %c2_i32, %arg20 : i32
      %177 = arith.index_cast %176 : i32 to index
      %c0_186 = arith.constant 0 : index
      %c0_187 = arith.constant 0 : index
      %178 = vector.load %arg18[%177, %c0_186, %c0_187] : memref<10x10x16xf32, #tpu.memory_space<vmem>>, vector<1x10x16xf32>
      %179 = vector.shape_cast %178 : vector<1x10x16xf32> to vector<10x16xf32>
      %c2_i32_188 = arith.constant 2 : i32
      %180 = arith.muli %c2_i32_188, %arg20 : i32
      %c1_i32_189 = arith.constant 1 : i32
      %181 = arith.addi %180, %c1_i32_189 : i32
      %182 = arith.index_cast %181 : i32 to index
      %c0_190 = arith.constant 0 : index
      %c0_191 = arith.constant 0 : index
      %183 = vector.load %arg18[%182, %c0_190, %c0_191] : memref<10x10x16xf32, #tpu.memory_space<vmem>>, vector<1x10x16xf32>
      %184 = vector.shape_cast %183 : vector<1x10x16xf32> to vector<10x16xf32>
      %185 = arith.maximumf %179, %184 : vector<10x16xf32>
      %186 = vector.extract_strided_slice %185 {offsets = [0, 0], sizes = [1, 16], strides = [1, 1]} : vector<10x16xf32> to vector<1x16xf32>
      %187 = vector.extract_strided_slice %185 {offsets = [1, 0], sizes = [1, 16], strides = [1, 1]} : vector<10x16xf32> to vector<1x16xf32>
      %188 = arith.maximumf %186, %187 : vector<1x16xf32>
      %189 = arith.index_cast %arg20 : i32 to index
      %c0_192 = arith.constant 0 : index
      %c0_193 = arith.constant 0 : index
      %190 = vector.load %arg19[%189, %c0_192, %c0_193] : memref<5x5x16xf32, #tpu.memory_space<vmem>>, vector<1x1x16xf32>
      %191 = vector.shape_cast %190 : vector<1x1x16xf32> to vector<1x16xf32>
      %192 = vector.shape_cast %188 : vector<1x16xf32> to vector<1x1x16xf32>
      tpu.vector_store %arg19[%189, %c0_192, %c0_193], %192 {strides = array<i32>} : memref<5x5x16xf32, #tpu.memory_space<vmem>>, vector<1x1x16xf32>,
      %193 = vector.extract_strided_slice %185 {offsets = [2, 0], sizes = [1, 16], strides = [1, 1]} : vector<10x16xf32> to vector<1x16xf32>
      %194 = vector.extract_strided_slice %185 {offsets = [3, 0], sizes = [1, 16], strides = [1, 1]} : vector<10x16xf32> to vector<1x16xf32>
      %195 = arith.maximumf %193, %194 : vector<1x16xf32>
      %196 = arith.index_cast %arg20 : i32 to index
      %c1_194 = arith.constant 1 : index
      %c0_195 = arith.constant 0 : index
      %197 = vector.load %arg19[%196, %c1_194, %c0_195] : memref<5x5x16xf32, #tpu.memory_space<vmem>>, vector<1x1x16xf32>
      %198 = vector.shape_cast %197 : vector<1x1x16xf32> to vector<1x16xf32>
      %199 = vector.shape_cast %195 : vector<1x16xf32> to vector<1x1x16xf32>
      tpu.vector_store %arg19[%196, %c1_194, %c0_195], %199 {strides = array<i32>} : memref<5x5x16xf32, #tpu.memory_space<vmem>>, vector<1x1x16xf32>,
      %200 = vector.extract_strided_slice %185 {offsets = [4, 0], sizes = [1, 16], strides = [1, 1]} : vector<10x16xf32> to vector<1x16xf32>
      %201 = vector.extract_strided_slice %185 {offsets = [5, 0], sizes = [1, 16], strides = [1, 1]} : vector<10x16xf32> to vector<1x16xf32>
      %202 = arith.maximumf %200, %201 : vector<1x16xf32>
      %203 = arith.index_cast %arg20 : i32 to index
      %c2_196 = arith.constant 2 : index
      %c0_197 = arith.constant 0 : index
      %204 = vector.load %arg19[%203, %c2_196, %c0_197] : memref<5x5x16xf32, #tpu.memory_space<vmem>>, vector<1x1x16xf32>
      %205 = vector.shape_cast %204 : vector<1x1x16xf32> to vector<1x16xf32>
      %206 = vector.shape_cast %202 : vector<1x16xf32> to vector<1x1x16xf32>
      tpu.vector_store %arg19[%203, %c2_196, %c0_197], %206 {strides = array<i32>} : memref<5x5x16xf32, #tpu.memory_space<vmem>>, vector<1x1x16xf32>,
      %207 = vector.extract_strided_slice %185 {offsets = [6, 0], sizes = [1, 16], strides = [1, 1]} : vector<10x16xf32> to vector<1x16xf32>
      %208 = vector.extract_strided_slice %185 {offsets = [7, 0], sizes = [1, 16], strides = [1, 1]} : vector<10x16xf32> to vector<1x16xf32>
      %209 = arith.maximumf %207, %208 : vector<1x16xf32>
      %210 = arith.index_cast %arg20 : i32 to index
      %c3_198 = arith.constant 3 : index
      %c0_199 = arith.constant 0 : index
      %211 = vector.load %arg19[%210, %c3_198, %c0_199] : memref<5x5x16xf32, #tpu.memory_space<vmem>>, vector<1x1x16xf32>
      %212 = vector.shape_cast %211 : vector<1x1x16xf32> to vector<1x16xf32>
      %213 = vector.shape_cast %209 : vector<1x16xf32> to vector<1x1x16xf32>
      tpu.vector_store %arg19[%210, %c3_198, %c0_199], %213 {strides = array<i32>} : memref<5x5x16xf32, #tpu.memory_space<vmem>>, vector<1x1x16xf32>,
      %214 = vector.extract_strided_slice %185 {offsets = [8, 0], sizes = [1, 16], strides = [1, 1]} : vector<10x16xf32> to vector<1x16xf32>
      %215 = vector.extract_strided_slice %185 {offsets = [9, 0], sizes = [1, 16], strides = [1, 1]} : vector<10x16xf32> to vector<1x16xf32>
      %216 = arith.maximumf %214, %215 : vector<1x16xf32>
      %217 = arith.index_cast %arg20 : i32 to index
      %c4_200 = arith.constant 4 : index
      %c0_201 = arith.constant 0 : index
      %218 = vector.load %arg19[%217, %c4_200, %c0_201] : memref<5x5x16xf32, #tpu.memory_space<vmem>>, vector<1x1x16xf32>
      %219 = vector.shape_cast %218 : vector<1x1x16xf32> to vector<1x16xf32>
      %220 = vector.shape_cast %216 : vector<1x16xf32> to vector<1x1x16xf32>
      tpu.vector_store %arg19[%217, %c4_200, %c0_201], %220 {strides = array<i32>} : memref<5x5x16xf32, #tpu.memory_space<vmem>>, vector<1x1x16xf32>,
    }
    %c5_i32_17 = arith.constant 5 : i32
    %cst = arith.constant 0.000000e+00 : f32
    %8 = vector.broadcast %cst : f32 to vector<1x120xf32>
    %c0_18 = arith.constant 0 : index
    %c0_19 = arith.constant 0 : index
    %c0_20 = arith.constant 0 : index
    %9 = vector.load %arg19[%c0_18, %c0_19, %c0_20] : memref<5x5x16xf32, #tpu.memory_space<vmem>>, vector<1x1x16xf32>
    %10 = vector.shape_cast %9 : vector<1x1x16xf32> to vector<1x16xf32>
    %c0_21 = arith.constant 0 : index
    %c0_22 = arith.constant 0 : index
    %c0_23 = arith.constant 0 : index
    %11 = vector.load %arg8[%c0_21, %c0_22, %c0_23] : memref<25x16x120xf32, #tpu.memory_space<vmem>>, vector<1x16x120xf32>
    %12 = vector.shape_cast %11 : vector<1x16x120xf32> to vector<16x120xf32>
    %cst_24 = arith.constant dense<0.000000e+00> : vector<1x120xf32>
    %13 = tpu.matmul %10, %12, %cst_24 {dimension_numbers = #tpu.dot_dimension_numbers<[1], [0], [0], [1], [0, 0, 1, 1], [], []>} : vector<1x16xf32>, vector<16x120xf32>, vector<1x120xf32> -> vector<1x120xf32>
    %14 = arith.addf %8, %13 : vector<1x120xf32>
    %c0_25 = arith.constant 0 : index
    %c1 = arith.constant 1 : index
    %c0_26 = arith.constant 0 : index
    %15 = vector.load %arg19[%c0_25, %c1, %c0_26] : memref<5x5x16xf32, #tpu.memory_space<vmem>>, vector<1x1x16xf32>
    %16 = vector.shape_cast %15 : vector<1x1x16xf32> to vector<1x16xf32>
    %c1_27 = arith.constant 1 : index
    %c0_28 = arith.constant 0 : index
    %c0_29 = arith.constant 0 : index
    %17 = vector.load %arg8[%c1_27, %c0_28, %c0_29] : memref<25x16x120xf32, #tpu.memory_space<vmem>>, vector<1x16x120xf32>
    %18 = vector.shape_cast %17 : vector<1x16x120xf32> to vector<16x120xf32>
    %cst_30 = arith.constant dense<0.000000e+00> : vector<1x120xf32>
    %19 = tpu.matmul %16, %18, %cst_30 {dimension_numbers = #tpu.dot_dimension_numbers<[1], [0], [0], [1], [0, 0, 1, 1], [], []>} : vector<1x16xf32>, vector<16x120xf32>, vector<1x120xf32> -> vector<1x120xf32>
    %20 = arith.addf %14, %19 : vector<1x120xf32>
    %c0_31 = arith.constant 0 : index
    %c2 = arith.constant 2 : index
    %c0_32 = arith.constant 0 : index
    %21 = vector.load %arg19[%c0_31, %c2, %c0_32] : memref<5x5x16xf32, #tpu.memory_space<vmem>>, vector<1x1x16xf32>
    %22 = vector.shape_cast %21 : vector<1x1x16xf32> to vector<1x16xf32>
    %c2_33 = arith.constant 2 : index
    %c0_34 = arith.constant 0 : index
    %c0_35 = arith.constant 0 : index
    %23 = vector.load %arg8[%c2_33, %c0_34, %c0_35] : memref<25x16x120xf32, #tpu.memory_space<vmem>>, vector<1x16x120xf32>
    %24 = vector.shape_cast %23 : vector<1x16x120xf32> to vector<16x120xf32>
    %cst_36 = arith.constant dense<0.000000e+00> : vector<1x120xf32>
    %25 = tpu.matmul %22, %24, %cst_36 {dimension_numbers = #tpu.dot_dimension_numbers<[1], [0], [0], [1], [0, 0, 1, 1], [], []>} : vector<1x16xf32>, vector<16x120xf32>, vector<1x120xf32> -> vector<1x120xf32>
    %26 = arith.addf %20, %25 : vector<1x120xf32>
    %c0_37 = arith.constant 0 : index
    %c3 = arith.constant 3 : index
    %c0_38 = arith.constant 0 : index
    %27 = vector.load %arg19[%c0_37, %c3, %c0_38] : memref<5x5x16xf32, #tpu.memory_space<vmem>>, vector<1x1x16xf32>
    %28 = vector.shape_cast %27 : vector<1x1x16xf32> to vector<1x16xf32>
    %c3_39 = arith.constant 3 : index
    %c0_40 = arith.constant 0 : index
    %c0_41 = arith.constant 0 : index
    %29 = vector.load %arg8[%c3_39, %c0_40, %c0_41] : memref<25x16x120xf32, #tpu.memory_space<vmem>>, vector<1x16x120xf32>
    %30 = vector.shape_cast %29 : vector<1x16x120xf32> to vector<16x120xf32>
    %cst_42 = arith.constant dense<0.000000e+00> : vector<1x120xf32>
    %31 = tpu.matmul %28, %30, %cst_42 {dimension_numbers = #tpu.dot_dimension_numbers<[1], [0], [0], [1], [0, 0, 1, 1], [], []>} : vector<1x16xf32>, vector<16x120xf32>, vector<1x120xf32> -> vector<1x120xf32>
    %32 = arith.addf %26, %31 : vector<1x120xf32>
    %c0_43 = arith.constant 0 : index
    %c4 = arith.constant 4 : index
    %c0_44 = arith.constant 0 : index
    %33 = vector.load %arg19[%c0_43, %c4, %c0_44] : memref<5x5x16xf32, #tpu.memory_space<vmem>>, vector<1x1x16xf32>
    %34 = vector.shape_cast %33 : vector<1x1x16xf32> to vector<1x16xf32>
    %c4_45 = arith.constant 4 : index
    %c0_46 = arith.constant 0 : index
    %c0_47 = arith.constant 0 : index
    %35 = vector.load %arg8[%c4_45, %c0_46, %c0_47] : memref<25x16x120xf32, #tpu.memory_space<vmem>>, vector<1x16x120xf32>
    %36 = vector.shape_cast %35 : vector<1x16x120xf32> to vector<16x120xf32>
    %cst_48 = arith.constant dense<0.000000e+00> : vector<1x120xf32>
    %37 = tpu.matmul %34, %36, %cst_48 {dimension_numbers = #tpu.dot_dimension_numbers<[1], [0], [0], [1], [0, 0, 1, 1], [], []>} : vector<1x16xf32>, vector<16x120xf32>, vector<1x120xf32> -> vector<1x120xf32>
    %38 = arith.addf %32, %37 : vector<1x120xf32>
    %c1_49 = arith.constant 1 : index
    %c0_50 = arith.constant 0 : index
    %c0_51 = arith.constant 0 : index
    %39 = vector.load %arg19[%c1_49, %c0_50, %c0_51] : memref<5x5x16xf32, #tpu.memory_space<vmem>>, vector<1x1x16xf32>
    %40 = vector.shape_cast %39 : vector<1x1x16xf32> to vector<1x16xf32>
    %c5 = arith.constant 5 : index
    %c0_52 = arith.constant 0 : index
    %c0_53 = arith.constant 0 : index
    %41 = vector.load %arg8[%c5, %c0_52, %c0_53] : memref<25x16x120xf32, #tpu.memory_space<vmem>>, vector<1x16x120xf32>
    %42 = vector.shape_cast %41 : vector<1x16x120xf32> to vector<16x120xf32>
    %cst_54 = arith.constant dense<0.000000e+00> : vector<1x120xf32>
    %43 = tpu.matmul %40, %42, %cst_54 {dimension_numbers = #tpu.dot_dimension_numbers<[1], [0], [0], [1], [0, 0, 1, 1], [], []>} : vector<1x16xf32>, vector<16x120xf32>, vector<1x120xf32> -> vector<1x120xf32>
    %44 = arith.addf %38, %43 : vector<1x120xf32>
    %c1_55 = arith.constant 1 : index
    %c1_56 = arith.constant 1 : index
    %c0_57 = arith.constant 0 : index
    %45 = vector.load %arg19[%c1_55, %c1_56, %c0_57] : memref<5x5x16xf32, #tpu.memory_space<vmem>>, vector<1x1x16xf32>
    %46 = vector.shape_cast %45 : vector<1x1x16xf32> to vector<1x16xf32>
    %c6 = arith.constant 6 : index
    %c0_58 = arith.constant 0 : index
    %c0_59 = arith.constant 0 : index
    %47 = vector.load %arg8[%c6, %c0_58, %c0_59] : memref<25x16x120xf32, #tpu.memory_space<vmem>>, vector<1x16x120xf32>
    %48 = vector.shape_cast %47 : vector<1x16x120xf32> to vector<16x120xf32>
    %cst_60 = arith.constant dense<0.000000e+00> : vector<1x120xf32>
    %49 = tpu.matmul %46, %48, %cst_60 {dimension_numbers = #tpu.dot_dimension_numbers<[1], [0], [0], [1], [0, 0, 1, 1], [], []>} : vector<1x16xf32>, vector<16x120xf32>, vector<1x120xf32> -> vector<1x120xf32>
    %50 = arith.addf %44, %49 : vector<1x120xf32>
    %c1_61 = arith.constant 1 : index
    %c2_62 = arith.constant 2 : index
    %c0_63 = arith.constant 0 : index
    %51 = vector.load %arg19[%c1_61, %c2_62, %c0_63] : memref<5x5x16xf32, #tpu.memory_space<vmem>>, vector<1x1x16xf32>
    %52 = vector.shape_cast %51 : vector<1x1x16xf32> to vector<1x16xf32>
    %c7 = arith.constant 7 : index
    %c0_64 = arith.constant 0 : index
    %c0_65 = arith.constant 0 : index
    %53 = vector.load %arg8[%c7, %c0_64, %c0_65] : memref<25x16x120xf32, #tpu.memory_space<vmem>>, vector<1x16x120xf32>
    %54 = vector.shape_cast %53 : vector<1x16x120xf32> to vector<16x120xf32>
    %cst_66 = arith.constant dense<0.000000e+00> : vector<1x120xf32>
    %55 = tpu.matmul %52, %54, %cst_66 {dimension_numbers = #tpu.dot_dimension_numbers<[1], [0], [0], [1], [0, 0, 1, 1], [], []>} : vector<1x16xf32>, vector<16x120xf32>, vector<1x120xf32> -> vector<1x120xf32>
    %56 = arith.addf %50, %55 : vector<1x120xf32>
    %c1_67 = arith.constant 1 : index
    %c3_68 = arith.constant 3 : index
    %c0_69 = arith.constant 0 : index
    %57 = vector.load %arg19[%c1_67, %c3_68, %c0_69] : memref<5x5x16xf32, #tpu.memory_space<vmem>>, vector<1x1x16xf32>
    %58 = vector.shape_cast %57 : vector<1x1x16xf32> to vector<1x16xf32>
    %c8 = arith.constant 8 : index
    %c0_70 = arith.constant 0 : index
    %c0_71 = arith.constant 0 : index
    %59 = vector.load %arg8[%c8, %c0_70, %c0_71] : memref<25x16x120xf32, #tpu.memory_space<vmem>>, vector<1x16x120xf32>
    %60 = vector.shape_cast %59 : vector<1x16x120xf32> to vector<16x120xf32>
    %cst_72 = arith.constant dense<0.000000e+00> : vector<1x120xf32>
    %61 = tpu.matmul %58, %60, %cst_72 {dimension_numbers = #tpu.dot_dimension_numbers<[1], [0], [0], [1], [0, 0, 1, 1], [], []>} : vector<1x16xf32>, vector<16x120xf32>, vector<1x120xf32> -> vector<1x120xf32>
    %62 = arith.addf %56, %61 : vector<1x120xf32>
    %c1_73 = arith.constant 1 : index
    %c4_74 = arith.constant 4 : index
    %c0_75 = arith.constant 0 : index
    %63 = vector.load %arg19[%c1_73, %c4_74, %c0_75] : memref<5x5x16xf32, #tpu.memory_space<vmem>>, vector<1x1x16xf32>
    %64 = vector.shape_cast %63 : vector<1x1x16xf32> to vector<1x16xf32>
    %c9 = arith.constant 9 : index
    %c0_76 = arith.constant 0 : index
    %c0_77 = arith.constant 0 : index
    %65 = vector.load %arg8[%c9, %c0_76, %c0_77] : memref<25x16x120xf32, #tpu.memory_space<vmem>>, vector<1x16x120xf32>
    %66 = vector.shape_cast %65 : vector<1x16x120xf32> to vector<16x120xf32>
    %cst_78 = arith.constant dense<0.000000e+00> : vector<1x120xf32>
    %67 = tpu.matmul %64, %66, %cst_78 {dimension_numbers = #tpu.dot_dimension_numbers<[1], [0], [0], [1], [0, 0, 1, 1], [], []>} : vector<1x16xf32>, vector<16x120xf32>, vector<1x120xf32> -> vector<1x120xf32>
    %68 = arith.addf %62, %67 : vector<1x120xf32>
    %c2_79 = arith.constant 2 : index
    %c0_80 = arith.constant 0 : index
    %c0_81 = arith.constant 0 : index
    %69 = vector.load %arg19[%c2_79, %c0_80, %c0_81] : memref<5x5x16xf32, #tpu.memory_space<vmem>>, vector<1x1x16xf32>
    %70 = vector.shape_cast %69 : vector<1x1x16xf32> to vector<1x16xf32>
    %c10 = arith.constant 10 : index
    %c0_82 = arith.constant 0 : index
    %c0_83 = arith.constant 0 : index
    %71 = vector.load %arg8[%c10, %c0_82, %c0_83] : memref<25x16x120xf32, #tpu.memory_space<vmem>>, vector<1x16x120xf32>
    %72 = vector.shape_cast %71 : vector<1x16x120xf32> to vector<16x120xf32>
    %cst_84 = arith.constant dense<0.000000e+00> : vector<1x120xf32>
    %73 = tpu.matmul %70, %72, %cst_84 {dimension_numbers = #tpu.dot_dimension_numbers<[1], [0], [0], [1], [0, 0, 1, 1], [], []>} : vector<1x16xf32>, vector<16x120xf32>, vector<1x120xf32> -> vector<1x120xf32>
    %74 = arith.addf %68, %73 : vector<1x120xf32>
    %c2_85 = arith.constant 2 : index
    %c1_86 = arith.constant 1 : index
    %c0_87 = arith.constant 0 : index
    %75 = vector.load %arg19[%c2_85, %c1_86, %c0_87] : memref<5x5x16xf32, #tpu.memory_space<vmem>>, vector<1x1x16xf32>
    %76 = vector.shape_cast %75 : vector<1x1x16xf32> to vector<1x16xf32>
    %c11 = arith.constant 11 : index
    %c0_88 = arith.constant 0 : index
    %c0_89 = arith.constant 0 : index
    %77 = vector.load %arg8[%c11, %c0_88, %c0_89] : memref<25x16x120xf32, #tpu.memory_space<vmem>>, vector<1x16x120xf32>
    %78 = vector.shape_cast %77 : vector<1x16x120xf32> to vector<16x120xf32>
    %cst_90 = arith.constant dense<0.000000e+00> : vector<1x120xf32>
    %79 = tpu.matmul %76, %78, %cst_90 {dimension_numbers = #tpu.dot_dimension_numbers<[1], [0], [0], [1], [0, 0, 1, 1], [], []>} : vector<1x16xf32>, vector<16x120xf32>, vector<1x120xf32> -> vector<1x120xf32>
    %80 = arith.addf %74, %79 : vector<1x120xf32>
    %c2_91 = arith.constant 2 : index
    %c2_92 = arith.constant 2 : index
    %c0_93 = arith.constant 0 : index
    %81 = vector.load %arg19[%c2_91, %c2_92, %c0_93] : memref<5x5x16xf32, #tpu.memory_space<vmem>>, vector<1x1x16xf32>
    %82 = vector.shape_cast %81 : vector<1x1x16xf32> to vector<1x16xf32>
    %c12 = arith.constant 12 : index
    %c0_94 = arith.constant 0 : index
    %c0_95 = arith.constant 0 : index
    %83 = vector.load %arg8[%c12, %c0_94, %c0_95] : memref<25x16x120xf32, #tpu.memory_space<vmem>>, vector<1x16x120xf32>
    %84 = vector.shape_cast %83 : vector<1x16x120xf32> to vector<16x120xf32>
    %cst_96 = arith.constant dense<0.000000e+00> : vector<1x120xf32>
    %85 = tpu.matmul %82, %84, %cst_96 {dimension_numbers = #tpu.dot_dimension_numbers<[1], [0], [0], [1], [0, 0, 1, 1], [], []>} : vector<1x16xf32>, vector<16x120xf32>, vector<1x120xf32> -> vector<1x120xf32>
    %86 = arith.addf %80, %85 : vector<1x120xf32>
    %c2_97 = arith.constant 2 : index
    %c3_98 = arith.constant 3 : index
    %c0_99 = arith.constant 0 : index
    %87 = vector.load %arg19[%c2_97, %c3_98, %c0_99] : memref<5x5x16xf32, #tpu.memory_space<vmem>>, vector<1x1x16xf32>
    %88 = vector.shape_cast %87 : vector<1x1x16xf32> to vector<1x16xf32>
    %c13 = arith.constant 13 : index
    %c0_100 = arith.constant 0 : index
    %c0_101 = arith.constant 0 : index
    %89 = vector.load %arg8[%c13, %c0_100, %c0_101] : memref<25x16x120xf32, #tpu.memory_space<vmem>>, vector<1x16x120xf32>
    %90 = vector.shape_cast %89 : vector<1x16x120xf32> to vector<16x120xf32>
    %cst_102 = arith.constant dense<0.000000e+00> : vector<1x120xf32>
    %91 = tpu.matmul %88, %90, %cst_102 {dimension_numbers = #tpu.dot_dimension_numbers<[1], [0], [0], [1], [0, 0, 1, 1], [], []>} : vector<1x16xf32>, vector<16x120xf32>, vector<1x120xf32> -> vector<1x120xf32>
    %92 = arith.addf %86, %91 : vector<1x120xf32>
    %c2_103 = arith.constant 2 : index
    %c4_104 = arith.constant 4 : index
    %c0_105 = arith.constant 0 : index
    %93 = vector.load %arg19[%c2_103, %c4_104, %c0_105] : memref<5x5x16xf32, #tpu.memory_space<vmem>>, vector<1x1x16xf32>
    %94 = vector.shape_cast %93 : vector<1x1x16xf32> to vector<1x16xf32>
    %c14 = arith.constant 14 : index
    %c0_106 = arith.constant 0 : index
    %c0_107 = arith.constant 0 : index
    %95 = vector.load %arg8[%c14, %c0_106, %c0_107] : memref<25x16x120xf32, #tpu.memory_space<vmem>>, vector<1x16x120xf32>
    %96 = vector.shape_cast %95 : vector<1x16x120xf32> to vector<16x120xf32>
    %cst_108 = arith.constant dense<0.000000e+00> : vector<1x120xf32>
    %97 = tpu.matmul %94, %96, %cst_108 {dimension_numbers = #tpu.dot_dimension_numbers<[1], [0], [0], [1], [0, 0, 1, 1], [], []>} : vector<1x16xf32>, vector<16x120xf32>, vector<1x120xf32> -> vector<1x120xf32>
    %98 = arith.addf %92, %97 : vector<1x120xf32>
    %c3_109 = arith.constant 3 : index
    %c0_110 = arith.constant 0 : index
    %c0_111 = arith.constant 0 : index
    %99 = vector.load %arg19[%c3_109, %c0_110, %c0_111] : memref<5x5x16xf32, #tpu.memory_space<vmem>>, vector<1x1x16xf32>
    %100 = vector.shape_cast %99 : vector<1x1x16xf32> to vector<1x16xf32>
    %c15 = arith.constant 15 : index
    %c0_112 = arith.constant 0 : index
    %c0_113 = arith.constant 0 : index
    %101 = vector.load %arg8[%c15, %c0_112, %c0_113] : memref<25x16x120xf32, #tpu.memory_space<vmem>>, vector<1x16x120xf32>
    %102 = vector.shape_cast %101 : vector<1x16x120xf32> to vector<16x120xf32>
    %cst_114 = arith.constant dense<0.000000e+00> : vector<1x120xf32>
    %103 = tpu.matmul %100, %102, %cst_114 {dimension_numbers = #tpu.dot_dimension_numbers<[1], [0], [0], [1], [0, 0, 1, 1], [], []>} : vector<1x16xf32>, vector<16x120xf32>, vector<1x120xf32> -> vector<1x120xf32>
    %104 = arith.addf %98, %103 : vector<1x120xf32>
    %c3_115 = arith.constant 3 : index
    %c1_116 = arith.constant 1 : index
    %c0_117 = arith.constant 0 : index
    %105 = vector.load %arg19[%c3_115, %c1_116, %c0_117] : memref<5x5x16xf32, #tpu.memory_space<vmem>>, vector<1x1x16xf32>
    %106 = vector.shape_cast %105 : vector<1x1x16xf32> to vector<1x16xf32>
    %c16 = arith.constant 16 : index
    %c0_118 = arith.constant 0 : index
    %c0_119 = arith.constant 0 : index
    %107 = vector.load %arg8[%c16, %c0_118, %c0_119] : memref<25x16x120xf32, #tpu.memory_space<vmem>>, vector<1x16x120xf32>
    %108 = vector.shape_cast %107 : vector<1x16x120xf32> to vector<16x120xf32>
    %cst_120 = arith.constant dense<0.000000e+00> : vector<1x120xf32>
    %109 = tpu.matmul %106, %108, %cst_120 {dimension_numbers = #tpu.dot_dimension_numbers<[1], [0], [0], [1], [0, 0, 1, 1], [], []>} : vector<1x16xf32>, vector<16x120xf32>, vector<1x120xf32> -> vector<1x120xf32>
    %110 = arith.addf %104, %109 : vector<1x120xf32>
    %c3_121 = arith.constant 3 : index
    %c2_122 = arith.constant 2 : index
    %c0_123 = arith.constant 0 : index
    %111 = vector.load %arg19[%c3_121, %c2_122, %c0_123] : memref<5x5x16xf32, #tpu.memory_space<vmem>>, vector<1x1x16xf32>
    %112 = vector.shape_cast %111 : vector<1x1x16xf32> to vector<1x16xf32>
    %c17 = arith.constant 17 : index
    %c0_124 = arith.constant 0 : index
    %c0_125 = arith.constant 0 : index
    %113 = vector.load %arg8[%c17, %c0_124, %c0_125] : memref<25x16x120xf32, #tpu.memory_space<vmem>>, vector<1x16x120xf32>
    %114 = vector.shape_cast %113 : vector<1x16x120xf32> to vector<16x120xf32>
    %cst_126 = arith.constant dense<0.000000e+00> : vector<1x120xf32>
    %115 = tpu.matmul %112, %114, %cst_126 {dimension_numbers = #tpu.dot_dimension_numbers<[1], [0], [0], [1], [0, 0, 1, 1], [], []>} : vector<1x16xf32>, vector<16x120xf32>, vector<1x120xf32> -> vector<1x120xf32>
    %116 = arith.addf %110, %115 : vector<1x120xf32>
    %c3_127 = arith.constant 3 : index
    %c3_128 = arith.constant 3 : index
    %c0_129 = arith.constant 0 : index
    %117 = vector.load %arg19[%c3_127, %c3_128, %c0_129] : memref<5x5x16xf32, #tpu.memory_space<vmem>>, vector<1x1x16xf32>
    %118 = vector.shape_cast %117 : vector<1x1x16xf32> to vector<1x16xf32>
    %c18 = arith.constant 18 : index
    %c0_130 = arith.constant 0 : index
    %c0_131 = arith.constant 0 : index
    %119 = vector.load %arg8[%c18, %c0_130, %c0_131] : memref<25x16x120xf32, #tpu.memory_space<vmem>>, vector<1x16x120xf32>
    %120 = vector.shape_cast %119 : vector<1x16x120xf32> to vector<16x120xf32>
    %cst_132 = arith.constant dense<0.000000e+00> : vector<1x120xf32>
    %121 = tpu.matmul %118, %120, %cst_132 {dimension_numbers = #tpu.dot_dimension_numbers<[1], [0], [0], [1], [0, 0, 1, 1], [], []>} : vector<1x16xf32>, vector<16x120xf32>, vector<1x120xf32> -> vector<1x120xf32>
    %122 = arith.addf %116, %121 : vector<1x120xf32>
    %c3_133 = arith.constant 3 : index
    %c4_134 = arith.constant 4 : index
    %c0_135 = arith.constant 0 : index
    %123 = vector.load %arg19[%c3_133, %c4_134, %c0_135] : memref<5x5x16xf32, #tpu.memory_space<vmem>>, vector<1x1x16xf32>
    %124 = vector.shape_cast %123 : vector<1x1x16xf32> to vector<1x16xf32>
    %c19 = arith.constant 19 : index
    %c0_136 = arith.constant 0 : index
    %c0_137 = arith.constant 0 : index
    %125 = vector.load %arg8[%c19, %c0_136, %c0_137] : memref<25x16x120xf32, #tpu.memory_space<vmem>>, vector<1x16x120xf32>
    %126 = vector.shape_cast %125 : vector<1x16x120xf32> to vector<16x120xf32>
    %cst_138 = arith.constant dense<0.000000e+00> : vector<1x120xf32>
    %127 = tpu.matmul %124, %126, %cst_138 {dimension_numbers = #tpu.dot_dimension_numbers<[1], [0], [0], [1], [0, 0, 1, 1], [], []>} : vector<1x16xf32>, vector<16x120xf32>, vector<1x120xf32> -> vector<1x120xf32>
    %128 = arith.addf %122, %127 : vector<1x120xf32>
    %c4_139 = arith.constant 4 : index
    %c0_140 = arith.constant 0 : index
    %c0_141 = arith.constant 0 : index
    %129 = vector.load %arg19[%c4_139, %c0_140, %c0_141] : memref<5x5x16xf32, #tpu.memory_space<vmem>>, vector<1x1x16xf32>
    %130 = vector.shape_cast %129 : vector<1x1x16xf32> to vector<1x16xf32>
    %c20 = arith.constant 20 : index
    %c0_142 = arith.constant 0 : index
    %c0_143 = arith.constant 0 : index
    %131 = vector.load %arg8[%c20, %c0_142, %c0_143] : memref<25x16x120xf32, #tpu.memory_space<vmem>>, vector<1x16x120xf32>
    %132 = vector.shape_cast %131 : vector<1x16x120xf32> to vector<16x120xf32>
    %cst_144 = arith.constant dense<0.000000e+00> : vector<1x120xf32>
    %133 = tpu.matmul %130, %132, %cst_144 {dimension_numbers = #tpu.dot_dimension_numbers<[1], [0], [0], [1], [0, 0, 1, 1], [], []>} : vector<1x16xf32>, vector<16x120xf32>, vector<1x120xf32> -> vector<1x120xf32>
    %134 = arith.addf %128, %133 : vector<1x120xf32>
    %c4_145 = arith.constant 4 : index
    %c1_146 = arith.constant 1 : index
    %c0_147 = arith.constant 0 : index
    %135 = vector.load %arg19[%c4_145, %c1_146, %c0_147] : memref<5x5x16xf32, #tpu.memory_space<vmem>>, vector<1x1x16xf32>
    %136 = vector.shape_cast %135 : vector<1x1x16xf32> to vector<1x16xf32>
    %c21 = arith.constant 21 : index
    %c0_148 = arith.constant 0 : index
    %c0_149 = arith.constant 0 : index
    %137 = vector.load %arg8[%c21, %c0_148, %c0_149] : memref<25x16x120xf32, #tpu.memory_space<vmem>>, vector<1x16x120xf32>
    %138 = vector.shape_cast %137 : vector<1x16x120xf32> to vector<16x120xf32>
    %cst_150 = arith.constant dense<0.000000e+00> : vector<1x120xf32>
    %139 = tpu.matmul %136, %138, %cst_150 {dimension_numbers = #tpu.dot_dimension_numbers<[1], [0], [0], [1], [0, 0, 1, 1], [], []>} : vector<1x16xf32>, vector<16x120xf32>, vector<1x120xf32> -> vector<1x120xf32>
    %140 = arith.addf %134, %139 : vector<1x120xf32>
    %c4_151 = arith.constant 4 : index
    %c2_152 = arith.constant 2 : index
    %c0_153 = arith.constant 0 : index
    %141 = vector.load %arg19[%c4_151, %c2_152, %c0_153] : memref<5x5x16xf32, #tpu.memory_space<vmem>>, vector<1x1x16xf32>
    %142 = vector.shape_cast %141 : vector<1x1x16xf32> to vector<1x16xf32>
    %c22 = arith.constant 22 : index
    %c0_154 = arith.constant 0 : index
    %c0_155 = arith.constant 0 : index
    %143 = vector.load %arg8[%c22, %c0_154, %c0_155] : memref<25x16x120xf32, #tpu.memory_space<vmem>>, vector<1x16x120xf32>
    %144 = vector.shape_cast %143 : vector<1x16x120xf32> to vector<16x120xf32>
    %cst_156 = arith.constant dense<0.000000e+00> : vector<1x120xf32>
    %145 = tpu.matmul %142, %144, %cst_156 {dimension_numbers = #tpu.dot_dimension_numbers<[1], [0], [0], [1], [0, 0, 1, 1], [], []>} : vector<1x16xf32>, vector<16x120xf32>, vector<1x120xf32> -> vector<1x120xf32>
    %146 = arith.addf %140, %145 : vector<1x120xf32>
    %c4_157 = arith.constant 4 : index
    %c3_158 = arith.constant 3 : index
    %c0_159 = arith.constant 0 : index
    %147 = vector.load %arg19[%c4_157, %c3_158, %c0_159] : memref<5x5x16xf32, #tpu.memory_space<vmem>>, vector<1x1x16xf32>
    %148 = vector.shape_cast %147 : vector<1x1x16xf32> to vector<1x16xf32>
    %c23 = arith.constant 23 : index
    %c0_160 = arith.constant 0 : index
    %c0_161 = arith.constant 0 : index
    %149 = vector.load %arg8[%c23, %c0_160, %c0_161] : memref<25x16x120xf32, #tpu.memory_space<vmem>>, vector<1x16x120xf32>
    %150 = vector.shape_cast %149 : vector<1x16x120xf32> to vector<16x120xf32>
    %cst_162 = arith.constant dense<0.000000e+00> : vector<1x120xf32>
    %151 = tpu.matmul %148, %150, %cst_162 {dimension_numbers = #tpu.dot_dimension_numbers<[1], [0], [0], [1], [0, 0, 1, 1], [], []>} : vector<1x16xf32>, vector<16x120xf32>, vector<1x120xf32> -> vector<1x120xf32>
    %152 = arith.addf %146, %151 : vector<1x120xf32>
    %c4_163 = arith.constant 4 : index
    %c4_164 = arith.constant 4 : index
    %c0_165 = arith.constant 0 : index
    %153 = vector.load %arg19[%c4_163, %c4_164, %c0_165] : memref<5x5x16xf32, #tpu.memory_space<vmem>>, vector<1x1x16xf32>
    %154 = vector.shape_cast %153 : vector<1x1x16xf32> to vector<1x16xf32>
    %c24 = arith.constant 24 : index
    %c0_166 = arith.constant 0 : index
    %c0_167 = arith.constant 0 : index
    %155 = vector.load %arg8[%c24, %c0_166, %c0_167] : memref<25x16x120xf32, #tpu.memory_space<vmem>>, vector<1x16x120xf32>
    %156 = vector.shape_cast %155 : vector<1x16x120xf32> to vector<16x120xf32>
    %cst_168 = arith.constant dense<0.000000e+00> : vector<1x120xf32>
    %157 = tpu.matmul %154, %156, %cst_168 {dimension_numbers = #tpu.dot_dimension_numbers<[1], [0], [0], [1], [0, 0, 1, 1], [], []>} : vector<1x16xf32>, vector<16x120xf32>, vector<1x120xf32> -> vector<1x120xf32>
    %158 = arith.addf %152, %157 : vector<1x120xf32>
    %c0_169 = arith.constant 0 : index
    %c0_170 = arith.constant 0 : index
    %159 = vector.load %arg9[%c0_169, %c0_170] : memref<1x120xf32, #tpu.memory_space<vmem>>, vector<1x120xf32>
    %160 = arith.addf %158, %159 : vector<1x120xf32>
    %cst_171 = arith.constant 0.000000e+00 : f32
    %161 = vector.broadcast %cst_171 : f32 to vector<1x120xf32>
    %162 = arith.maximumf %160, %161 : vector<1x120xf32>
    %c0_172 = arith.constant 0 : index
    %c0_173 = arith.constant 0 : index
    %163 = vector.load %arg10[%c0_172, %c0_173] : memref<120x48xf32, #tpu.memory_space<vmem>>, vector<120x48xf32>
    %cst_174 = arith.constant dense<0.000000e+00> : vector<1x48xf32>
    %164 = tpu.matmul %162, %163, %cst_174 {dimension_numbers = #tpu.dot_dimension_numbers<[1], [0], [0], [1], [0, 0, 1, 1], [], []>} : vector<1x120xf32>, vector<120x48xf32>, vector<1x48xf32> -> vector<1x48xf32>
    %c0_175 = arith.constant 0 : index
    %c0_176 = arith.constant 0 : index
    %165 = vector.load %arg11[%c0_175, %c0_176] : memref<1x48xf32, #tpu.memory_space<vmem>>, vector<1x48xf32>
    %166 = arith.addf %164, %165 : vector<1x48xf32>
    %cst_177 = arith.constant 0.000000e+00 : f32
    %167 = vector.broadcast %cst_177 : f32 to vector<1x48xf32>
    %168 = arith.maximumf %166, %167 : vector<1x48xf32>
    %c0_178 = arith.constant 0 : index
    %c0_179 = arith.constant 0 : index
    %169 = vector.load %arg12[%c0_178, %c0_179] : memref<48x24xf32, #tpu.memory_space<vmem>>, vector<48x24xf32>
    %cst_180 = arith.constant dense<0.000000e+00> : vector<1x24xf32>
    %170 = tpu.matmul %168, %169, %cst_180 {dimension_numbers = #tpu.dot_dimension_numbers<[1], [0], [0], [1], [0, 0, 1, 1], [], []>} : vector<1x48xf32>, vector<48x24xf32>, vector<1x24xf32> -> vector<1x24xf32>
    %c0_181 = arith.constant 0 : index
    %c0_182 = arith.constant 0 : index
    %171 = vector.load %arg13[%c0_181, %c0_182] : memref<1x24xf32, #tpu.memory_space<vmem>>, vector<1x24xf32>
    %172 = arith.addf %170, %171 : vector<1x24xf32>
    %c0_183 = arith.constant 0 : index
    %c0_184 = arith.constant 0 : index
    %c0_185 = arith.constant 0 : index
    %173 = vector.load %arg14[%c0_183, %c0_184, %c0_185] : memref<1x1x24xf32, #tpu.memory_space<vmem>>, vector<1x1x24xf32>
    %174 = vector.shape_cast %173 : vector<1x1x24xf32> to vector<1x24xf32>
    %175 = vector.shape_cast %172 : vector<1x24xf32> to vector<1x1x24xf32>
    tpu.vector_store %arg14[%c0_183, %c0_184, %c0_185], %175 {strides = array<i32>} : memref<1x1x24xf32, #tpu.memory_space<vmem>>, vector<1x1x24xf32>,
    return
  }
  func.func @transform_0(%arg0: i32) -> (i32, i32, i32, i32) {
    %c0_i32 = arith.constant 0 : i32
    %c0_i32_0 = arith.constant 0 : i32
    %c0_i32_1 = arith.constant 0 : i32
    %c0_i32_2 = arith.constant 0 : i32
    return %arg0, %c0_i32, %c0_i32_0, %c0_i32_1 : i32, i32, i32, i32
  }
  func.func @transform_1(%arg0: i32) -> (i32, i32, i32) {
    %c0_i32 = arith.constant 0 : i32
    %c0_i32_0 = arith.constant 0 : i32
    %c0_i32_1 = arith.constant 0 : i32
    %c0_i32_2 = arith.constant 0 : i32
    return %c0_i32, %c0_i32_0, %c0_i32_1 : i32, i32, i32
  }
  func.func @transform_2(%arg0: i32) -> (i32, i32) {
    %c0_i32 = arith.constant 0 : i32
    %c0_i32_0 = arith.constant 0 : i32
    %c0_i32_1 = arith.constant 0 : i32
    return %c0_i32, %c0_i32_0 : i32, i32
  }
  func.func @transform_3(%arg0: i32) -> (i32, i32, i32) {
    %c0_i32 = arith.constant 0 : i32
    %c0_i32_0 = arith.constant 0 : i32
    %c0_i32_1 = arith.constant 0 : i32
    %c0_i32_2 = arith.constant 0 : i32
    return %c0_i32, %c0_i32_0, %c0_i32_1 : i32, i32, i32
  }
  func.func @transform_4(%arg0: i32) -> (i32, i32) {
    %c0_i32 = arith.constant 0 : i32
    %c0_i32_0 = arith.constant 0 : i32
    %c0_i32_1 = arith.constant 0 : i32
    return %c0_i32, %c0_i32_0 : i32, i32
  }
  func.func @transform_5(%arg0: i32) -> (i32, i32, i32) {
    %c0_i32 = arith.constant 0 : i32
    %c0_i32_0 = arith.constant 0 : i32
    %c0_i32_1 = arith.constant 0 : i32
    %c0_i32_2 = arith.constant 0 : i32
    return %c0_i32, %c0_i32_0, %c0_i32_1 : i32, i32, i32
  }
  func.func @transform_6(%arg0: i32) -> (i32, i32) {
    %c0_i32 = arith.constant 0 : i32
    %c0_i32_0 = arith.constant 0 : i32
    %c0_i32_1 = arith.constant 0 : i32
    return %c0_i32, %c0_i32_0 : i32, i32
  }
  func.func @transform_7(%arg0: i32) -> (i32, i32, i32) {
    %c0_i32 = arith.constant 0 : i32
    %c0_i32_0 = arith.constant 0 : i32
    %c0_i32_1 = arith.constant 0 : i32
    %c0_i32_2 = arith.constant 0 : i32
    return %c0_i32, %c0_i32_0, %c0_i32_1 : i32, i32, i32
  }
  func.func @transform_8(%arg0: i32) -> (i32, i32) {
    %c0_i32 = arith.constant 0 : i32
    %c0_i32_0 = arith.constant 0 : i32
    %c0_i32_1 = arith.constant 0 : i32
    return %c0_i32, %c0_i32_0 : i32, i32
  }
  func.func @transform_9(%arg0: i32) -> (i32, i32) {
    %c0_i32 = arith.constant 0 : i32
    %c0_i32_0 = arith.constant 0 : i32
    %c0_i32_1 = arith.constant 0 : i32
    return %c0_i32, %c0_i32_0 : i32, i32
  }
  func.func @transform_10(%arg0: i32) -> (i32, i32) {
    %c0_i32 = arith.constant 0 : i32
    %c0_i32_0 = arith.constant 0 : i32
    %c0_i32_1 = arith.constant 0 : i32
    return %c0_i32, %c0_i32_0 : i32, i32
  }
  func.func @transform_11(%arg0: i32) -> (i32, i32) {
    %c0_i32 = arith.constant 0 : i32
    %c0_i32_0 = arith.constant 0 : i32
    %c0_i32_1 = arith.constant 0 : i32
    return %c0_i32, %c0_i32_0 : i32, i32
  }
  func.func @transform_12(%arg0: i32) -> (i32, i32) {
    %c0_i32 = arith.constant 0 : i32
    %c0_i32_0 = arith.constant 0 : i32
    %c0_i32_1 = arith.constant 0 : i32
    return %c0_i32, %c0_i32_0 : i32, i32
  }
  func.func @transform_13(%arg0: i32) -> (i32, i32, i32) {
    %c0_i32 = arith.constant 0 : i32
    %c0_i32_0 = arith.constant 0 : i32
    %c0_i32_1 = arith.constant 0 : i32
    return %arg0, %c0_i32, %c0_i32_0 : i32, i32, i32
  }
}

</mosaic_0001>

<llo_original>
// kernel: forward.1
$region0: #{forward.1}
  #allocation0 [shape = 'u32[]', space=smem, size = 0x4, offset = 0x4, fixed_abs, tag = 'smem constant byte address 0x4 - core index']
  #allocation1 [shape = 'u32[144,128]{1,0:T(1,128)}', space=vmem, size = 0x12000, scoped, tag = 'internal scratch']
  #allocation2 [shape = 'f32[26,26,6]{2,1,0:T(8,128)}', space=vmem, size = 0x68000, scoped, tag = 'scratch operand']
  #allocation3 [shape = 'f32[24,24,6]{2,1,0:T(8,128)}', space=vmem, size = 0x48000, scoped, tag = 'scratch operand']
  #allocation4 [shape = 'f32[12,12,6]{2,1,0:T(8,128)}', space=vmem, size = 0x18000, scoped, tag = 'scratch operand']
  #allocation5 [shape = 'f32[10,10,16]{2,1,0:T(8,128)}', space=vmem, size = 0x14000, scoped, tag = 'scratch operand']
  #allocation6 [shape = 'f32[5,5,16]{2,1,0:T(8,128)}', space=vmem, size = 0x5000, scoped, tag = 'scratch operand']
  %s0 = inlined_call_operand.vmem [shape: f32[2,28,28,1], index: 0, kind: input, shape index: {}]
  %s1 = inlined_call_operand.vmem [shape: f32[9,1,6], index: 1, kind: input, shape index: {}]
  %s2 = inlined_call_operand.vmem [shape: f32[1,6], index: 2, kind: input, shape index: {}]
  %s3 = inlined_call_operand.vmem [shape: f32[9,6,6], index: 3, kind: input, shape index: {}]
  %s4 = inlined_call_operand.vmem [shape: f32[1,6], index: 4, kind: input, shape index: {}]
  %s5 = inlined_call_operand.vmem [shape: f32[9,6,16], index: 5, kind: input, shape index: {}]
  %s6 = inlined_call_operand.vmem [shape: f32[1,16], index: 6, kind: input, shape index: {}]
  %s7 = inlined_call_operand.vmem [shape: f32[25,16,120], index: 7, kind: input, shape index: {}]
  %s8 = inlined_call_operand.vmem [shape: f32[1,120], index: 8, kind: input, shape index: {}]
  %s9 = inlined_call_operand.vmem [shape: f32[120,48], index: 9, kind: input, shape index: {}]
  %s10 = inlined_call_operand.vmem [shape: f32[1,48], index: 10, kind: input, shape index: {}]
  %s11 = inlined_call_operand.vmem [shape: f32[48,24], index: 11, kind: input, shape index: {}]
  %s12 = inlined_call_operand.vmem [shape: f32[1,24], index: 12, kind: input, shape index: {}]
  %s13 = inlined_call_operand.hbm [shape: f32[2,1,24], index: 13, kind: output, shape index: {}]
  %s14 = sld [smem:[#allocation0]]
  $region120: #{forward.1} parent=0
    _
  %s16 = ssub.s32 1, %s14
  %s17 = scalar_select 0, %s16, %s14
  $region1: #{forward.1} parent=0
    #allocation7 [shape = 'u8[1024]{0}', space=vmem, size = 0x400, scoped, tag = 'output window, operand 0']
    #allocation8 [shape = 's32[2]{0}', space=sflag, size = 0x8, scoped, tag = 'scoped memory for forward.1']
    %18 = vsyncpa [#allocation8], 0
    %s19 = scalar_lea.sflag [#allocation8], 1
    %20 = vsyncpa %s19, 0
    loop: start=0, step=1, limit=4
    $region2: #{forward.1} parent=1 // loop_pre_header
      _
    $region3: #{forward.1} parent=1 // loop_header
      %s22 = sphi 0, %s26
      %p23 = scmp.ge.s32.totalorder %s22, 4
      %s32 = sphi 0, %s34
      %s35 = sphi 0, %s32
      %s36 = sphi 0, %s35
      %s52 = sphi 0, %s36
      %s56 = sphi 0, %s56
      %s58 = sphi 0, %s56
      %s59 = sphi 0, %s58
      %s73 = sphi 0, %s59
      %s77 = sphi 0, %s77
      %s79 = sphi 0, %s77
      %s80 = sphi 0, %s79
      %s94 = sphi 0, %s80
      %s98 = sphi 0, %s98
      %s100 = sphi 0, %s98
      %s101 = sphi 0, %s100
      %s115 = sphi 0, %s101
      %s119 = sphi 0, %s119
      %s121 = sphi 0, %s119
      %s122 = sphi 0, %s121
      %s136 = sphi 0, %s122
      %s140 = sphi 0, %s140
      %s142 = sphi 0, %s140
      %s143 = sphi 0, %s142
      %s157 = sphi 0, %s143
      %s161 = sphi 0, %s161
      %s163 = sphi 0, %s161
      %s164 = sphi 0, %s163
      %s178 = sphi 0, %s164
      %s182 = sphi 0, %s182
      %s184 = sphi 0, %s182
      %s185 = sphi 0, %s184
      %s199 = sphi 0, %s185
      %s203 = sphi 0, %s203
      %s205 = sphi 0, %s203
      %s206 = sphi 0, %s205
      %s220 = sphi 0, %s206
      %s224 = sphi 0, %s224
      %s226 = sphi 0, %s224
      %s227 = sphi 0, %s226
      %s241 = sphi 0, %s227
      %s245 = sphi 0, %s245
      %s247 = sphi 0, %s245
      %s248 = sphi 0, %s247
      %s262 = sphi 0, %s248
      %s266 = sphi 0, %s266
      %s268 = sphi 0, %s266
      %s269 = sphi 0, %s268
      %s283 = sphi 0, %s269
      %s287 = sphi 0, %s287
      %s289 = sphi 0, %s287
      %s290 = sphi 0, %s289
      %s304 = sphi 0, %s290
      %s310 = sphi 0, %s312
      %s313 = sphi 0, %s310
      %s314 = sphi 0, %s313
      %s330 = sphi 0, %s314
    $region4: #{forward.1} parent=1 // loop_header_branch
      %25 = sbr.rel (%p23) target = $region8
    $region5: #{forward.1} parent=1 // loop_body
      %s27 = ssub.s32 %s22, 1
      %s28 = ssub.s32 %s22, 2
      %s29 = sadd.s32 %s22, 1
      %s30 = ssub.s32 %s22, %s29
      %p31 = scmp.eq.s32.totalorder %s30, 0
      %s33 = sadd.s32 %s32, 1
      %s34 = scalar_select %p31, %s32, %s33
      %p37 = pneg %p31
      %p38 = scmp.eq.s32.totalorder %s22, 1
      %p39 = por %p37, %p38
      %p40 = scmp.ne.s32.totalorder %s32, %s35
      %p41 = scmp.eq.s32.totalorder %s22, 0
      %p42 = por %p40, %p41
      %p43 = scmp.ne.s32.totalorder %s32, %s35
      %p44 = scmp.eq.s32.totalorder %s27, 1
      %p45 = por %p43, %p44
      %p46 = scmp.ne.s32.totalorder %s35, %s36
      %p47 = scmp.eq.s32.totalorder %s27, 0
      %p48 = por %p46, %p47
      %p49 = scmp.ne.s32.totalorder %s35, %s36
      %p50 = scmp.eq.s32.totalorder %s28, 1
      %p51 = por %p49, %p50
      %p53 = scmp.ne.s32.totalorder %s36, %s52
      %p54 = scmp.eq.s32.totalorder %s28, 0
      %p55 = por %p53, %p54
      %s57 = sadd.s32 %s56, 1
      %p60 = scmp.eq.s32.totalorder %s22, 1
      %p61 = scmp.ne.s32.totalorder %s56, %s58
      %p62 = scmp.eq.s32.totalorder %s22, 0
      %p63 = por %p61, %p62
      %p64 = scmp.ne.s32.totalorder %s56, %s58
      %p65 = scmp.eq.s32.totalorder %s27, 1
      %p66 = por %p64, %p65
      %p67 = scmp.ne.s32.totalorder %s58, %s59
      %p68 = scmp.eq.s32.totalorder %s27, 0
      %p69 = por %p67, %p68
      %p70 = scmp.ne.s32.totalorder %s58, %s59
      %p71 = scmp.eq.s32.totalorder %s28, 1
      %p72 = por %p70, %p71
      %p74 = scmp.ne.s32.totalorder %s59, %s73
      %p75 = scmp.eq.s32.totalorder %s28, 0
      %p76 = por %p74, %p75
      %s78 = sadd.s32 %s77, 1
      %p81 = scmp.eq.s32.totalorder %s22, 1
      %p82 = scmp.ne.s32.totalorder %s77, %s79
      %p83 = scmp.eq.s32.totalorder %s22, 0
      %p84 = por %p82, %p83
      %p85 = scmp.ne.s32.totalorder %s77, %s79
      %p86 = scmp.eq.s32.totalorder %s27, 1
      %p87 = por %p85, %p86
      %p88 = scmp.ne.s32.totalorder %s79, %s80
      %p89 = scmp.eq.s32.totalorder %s27, 0
      %p90 = por %p88, %p89
      %p91 = scmp.ne.s32.totalorder %s79, %s80
      %p92 = scmp.eq.s32.totalorder %s28, 1
      %p93 = por %p91, %p92
      %p95 = scmp.ne.s32.totalorder %s80, %s94
      %p96 = scmp.eq.s32.totalorder %s28, 0
      %p97 = por %p95, %p96
      %s99 = sadd.s32 %s98, 1
      %p102 = scmp.eq.s32.totalorder %s22, 1
      %p103 = scmp.ne.s32.totalorder %s98, %s100
      %p104 = scmp.eq.s32.totalorder %s22, 0
      %p105 = por %p103, %p104
      %p106 = scmp.ne.s32.totalorder %s98, %s100
      %p107 = scmp.eq.s32.totalorder %s27, 1
      %p108 = por %p106, %p107
      %p109 = scmp.ne.s32.totalorder %s100, %s101
      %p110 = scmp.eq.s32.totalorder %s27, 0
      %p111 = por %p109, %p110
      %p112 = scmp.ne.s32.totalorder %s100, %s101
      %p113 = scmp.eq.s32.totalorder %s28, 1
      %p114 = por %p112, %p113
      %p116 = scmp.ne.s32.totalorder %s101, %s115
      %p117 = scmp.eq.s32.totalorder %s28, 0
      %p118 = por %p116, %p117
      %s120 = sadd.s32 %s119, 1
      %p123 = scmp.eq.s32.totalorder %s22, 1
      %p124 = scmp.ne.s32.totalorder %s119, %s121
      %p125 = scmp.eq.s32.totalorder %s22, 0
      %p126 = por %p124, %p125
      %p127 = scmp.ne.s32.totalorder %s119, %s121
      %p128 = scmp.eq.s32.totalorder %s27, 1
      %p129 = por %p127, %p128
      %p130 = scmp.ne.s32.totalorder %s121, %s122
      %p131 = scmp.eq.s32.totalorder %s27, 0
      %p132 = por %p130, %p131
      %p133 = scmp.ne.s32.totalorder %s121, %s122
      %p134 = scmp.eq.s32.totalorder %s28, 1
      %p135 = por %p133, %p134
      %p137 = scmp.ne.s32.totalorder %s122, %s136
      %p138 = scmp.eq.s32.totalorder %s28, 0
      %p139 = por %p137, %p138
      %s141 = sadd.s32 %s140, 1
      %p144 = scmp.eq.s32.totalorder %s22, 1
      %p145 = scmp.ne.s32.totalorder %s140, %s142
      %p146 = scmp.eq.s32.totalorder %s22, 0
      %p147 = por %p145, %p146
      %p148 = scmp.ne.s32.totalorder %s140, %s142
      %p149 = scmp.eq.s32.totalorder %s27, 1
      %p150 = por %p148, %p149
      %p151 = scmp.ne.s32.totalorder %s142, %s143
      %p152 = scmp.eq.s32.totalorder %s27, 0
      %p153 = por %p151, %p152
      %p154 = scmp.ne.s32.totalorder %s142, %s143
      %p155 = scmp.eq.s32.totalorder %s28, 1
      %p156 = por %p154, %p155
      %p158 = scmp.ne.s32.totalorder %s143, %s157
      %p159 = scmp.eq.s32.totalorder %s28, 0
      %p160 = por %p158, %p159
      %s162 = sadd.s32 %s161, 1
      %p165 = scmp.eq.s32.totalorder %s22, 1
      %p166 = scmp.ne.s32.totalorder %s161, %s163
      %p167 = scmp.eq.s32.totalorder %s22, 0
      %p168 = por %p166, %p167
      %p169 = scmp.ne.s32.totalorder %s161, %s163
      %p170 = scmp.eq.s32.totalorder %s27, 1
      %p171 = por %p169, %p170
      %p172 = scmp.ne.s32.totalorder %s163, %s164
      %p173 = scmp.eq.s32.totalorder %s27, 0
      %p174 = por %p172, %p173
      %p175 = scmp.ne.s32.totalorder %s163, %s164
      %p176 = scmp.eq.s32.totalorder %s28, 1
      %p177 = por %p175, %p176
      %p179 = scmp.ne.s32.totalorder %s164, %s178
      %p180 = scmp.eq.s32.totalorder %s28, 0
      %p181 = por %p179, %p180
      %s183 = sadd.s32 %s182, 1
      %p186 = scmp.eq.s32.totalorder %s22, 1
      %p187 = scmp.ne.s32.totalorder %s182, %s184
      %p188 = scmp.eq.s32.totalorder %s22, 0
      %p189 = por %p187, %p188
      %p190 = scmp.ne.s32.totalorder %s182, %s184
      %p191 = scmp.eq.s32.totalorder %s27, 1
      %p192 = por %p190, %p191
      %p193 = scmp.ne.s32.totalorder %s184, %s185
      %p194 = scmp.eq.s32.totalorder %s27, 0
      %p195 = por %p193, %p194
      %p196 = scmp.ne.s32.totalorder %s184, %s185
      %p197 = scmp.eq.s32.totalorder %s28, 1
      %p198 = por %p196, %p197
      %p200 = scmp.ne.s32.totalorder %s185, %s199
      %p201 = scmp.eq.s32.totalorder %s28, 0
      %p202 = por %p200, %p201
      %s204 = sadd.s32 %s203, 1
      %p207 = scmp.eq.s32.totalorder %s22, 1
      %p208 = scmp.ne.s32.totalorder %s203, %s205
      %p209 = scmp.eq.s32.totalorder %s22, 0
      %p210 = por %p208, %p209
      %p211 = scmp.ne.s32.totalorder %s203, %s205
      %p212 = scmp.eq.s32.totalorder %s27, 1
      %p213 = por %p211, %p212
      %p214 = scmp.ne.s32.totalorder %s205, %s206
      %p215 = scmp.eq.s32.totalorder %s27, 0
      %p216 = por %p214, %p215
      %p217 = scmp.ne.s32.totalorder %s205, %s206
      %p218 = scmp.eq.s32.totalorder %s28, 1
      %p219 = por %p217, %p218
      %p221 = scmp.ne.s32.totalorder %s206, %s220
      %p222 = scmp.eq.s32.totalorder %s28, 0
      %p223 = por %p221, %p222
      %s225 = sadd.s32 %s224, 1
      %p228 = scmp.eq.s32.totalorder %s22, 1
      %p229 = scmp.ne.s32.totalorder %s224, %s226
      %p230 = scmp.eq.s32.totalorder %s22, 0
      %p231 = por %p229, %p230
      %p232 = scmp.ne.s32.totalorder %s224, %s226
      %p233 = scmp.eq.s32.totalorder %s27, 1
      %p234 = por %p232, %p233
      %p235 = scmp.ne.s32.totalorder %s226, %s227
      %p236 = scmp.eq.s32.totalorder %s27, 0
      %p237 = por %p235, %p236
      %p238 = scmp.ne.s32.totalorder %s226, %s227
      %p239 = scmp.eq.s32.totalorder %s28, 1
      %p240 = por %p238, %p239
      %p242 = scmp.ne.s32.totalorder %s227, %s241
      %p243 = scmp.eq.s32.totalorder %s28, 0
      %p244 = por %p242, %p243
      %s246 = sadd.s32 %s245, 1
      %p249 = scmp.eq.s32.totalorder %s22, 1
      %p250 = scmp.ne.s32.totalorder %s245, %s247
      %p251 = scmp.eq.s32.totalorder %s22, 0
      %p252 = por %p250, %p251
      %p253 = scmp.ne.s32.totalorder %s245, %s247
      %p254 = scmp.eq.s32.totalorder %s27, 1
      %p255 = por %p253, %p254
      %p256 = scmp.ne.s32.totalorder %s247, %s248
      %p257 = scmp.eq.s32.totalorder %s27, 0
      %p258 = por %p256, %p257
      %p259 = scmp.ne.s32.totalorder %s247, %s248
      %p260 = scmp.eq.s32.totalorder %s28, 1
      %p261 = por %p259, %p260
      %p263 = scmp.ne.s32.totalorder %s248, %s262
      %p264 = scmp.eq.s32.totalorder %s28, 0
      %p265 = por %p263, %p264
      %s267 = sadd.s32 %s266, 1
      %p270 = scmp.eq.s32.totalorder %s22, 1
      %p271 = scmp.ne.s32.totalorder %s266, %s268
      %p272 = scmp.eq.s32.totalorder %s22, 0
      %p273 = por %p271, %p272
      %p274 = scmp.ne.s32.totalorder %s266, %s268
      %p275 = scmp.eq.s32.totalorder %s27, 1
      %p276 = por %p274, %p275
      %p277 = scmp.ne.s32.totalorder %s268, %s269
      %p278 = scmp.eq.s32.totalorder %s27, 0
      %p279 = por %p277, %p278
      %p280 = scmp.ne.s32.totalorder %s268, %s269
      %p281 = scmp.eq.s32.totalorder %s28, 1
      %p282 = por %p280, %p281
      %p284 = scmp.ne.s32.totalorder %s269, %s283
      %p285 = scmp.eq.s32.totalorder %s28, 0
      %p286 = por %p284, %p285
      %s288 = sadd.s32 %s287, 1
      %p291 = scmp.eq.s32.totalorder %s22, 1
      %p292 = scmp.ne.s32.totalorder %s287, %s289
      %p293 = scmp.eq.s32.totalorder %s22, 0
      %p294 = por %p292, %p293
      %p295 = scmp.ne.s32.totalorder %s287, %s289
      %p296 = scmp.eq.s32.totalorder %s27, 1
      %p297 = por %p295, %p296
      %p298 = scmp.ne.s32.totalorder %s289, %s290
      %p299 = scmp.eq.s32.totalorder %s27, 0
      %p300 = por %p298, %p299
      %p301 = scmp.ne.s32.totalorder %s289, %s290
      %p302 = scmp.eq.s32.totalorder %s28, 1
      %p303 = por %p301, %p302
      %p305 = scmp.ne.s32.totalorder %s290, %s304
      %p306 = scmp.eq.s32.totalorder %s28, 0
      %p307 = por %p305, %p306
      %s308 = ssub.s32 %s22, %s29
      %p309 = scmp.eq.s32.totalorder %s308, 0
      %s311 = sadd.s32 %s310, 1
      %s312 = scalar_select %p309, %s310, %s311
      %p315 = pneg %p309
      %p316 = scmp.eq.s32.totalorder %s22, 1
      %p317 = por %p315, %p316
      %p318 = scmp.ne.s32.totalorder %s310, %s313
      %p319 = scmp.eq.s32.totalorder %s22, 0
      %p320 = por %p318, %p319
      %p321 = scmp.ne.s32.totalorder %s310, %s313
      %p322 = scmp.eq.s32.totalorder %s27, 1
      %p323 = por %p321, %p322
      %p324 = scmp.ne.s32.totalorder %s313, %s314
      %p325 = scmp.eq.s32.totalorder %s27, 0
      %p326 = por %p324, %p325
      %p327 = scmp.ne.s32.totalorder %s313, %s314
      %p328 = scmp.eq.s32.totalorder %s28, 1
      %p329 = por %p327, %p328
      %p331 = scmp.ne.s32.totalorder %s314, %s330
      %p332 = scmp.eq.s32.totalorder %s28, 0
      %p333 = por %p331, %p332
      %p334 = scmp.le.s32.totalorder 1, %s22
      %p335 = scmp.lt.s32.totalorder %s22, 3
      %p336 = pnand %p334, %p335
      %p337 = pneg %p336
      // Predicated region
      $region9: #{forward.1} parent=5 // pred_check
        _
      $region10: #{forward.1} parent=5 // pred_check_branch
        %339 = sbr.rel (%p336) target = $region12
      $region11: #{forward.1} parent=5 // pred_region
        %s340 = ssub.s32 %s22, 1
        // Predicated region
        $region13: #{forward.1} parent=11 // pred_check
          %p341 = pneg %p69
        $region14: #{forward.1} parent=11 // pred_check_branch
          %343 = sbr.rel (%p341) target = $region16
        $region15: #{forward.1} parent=11 // pred_region
          _
        $region16: #{forward.1} parent=11 // pred_fallthru
          _
        // Predicated region
        $region17: #{forward.1} parent=11 // pred_check
          %p344 = pneg %p90
        $region18: #{forward.1} parent=11 // pred_check_branch
          %346 = sbr.rel (%p344) target = $region20
        $region19: #{forward.1} parent=11 // pred_region
          _
        $region20: #{forward.1} parent=11 // pred_fallthru
          _
        // Predicated region
        $region21: #{forward.1} parent=11 // pred_check
          %p347 = pneg %p111
        $region22: #{forward.1} parent=11 // pred_check_branch
          %349 = sbr.rel (%p347) target = $region24
        $region23: #{forward.1} parent=11 // pred_region
          _
        $region24: #{forward.1} parent=11 // pred_fallthru
          _
        // Predicated region
        $region25: #{forward.1} parent=11 // pred_check
          %p350 = pneg %p132
        $region26: #{forward.1} parent=11 // pred_check_branch
          %352 = sbr.rel (%p350) target = $region28
        $region27: #{forward.1} parent=11 // pred_region
          _
        $region28: #{forward.1} parent=11 // pred_fallthru
          _
        // Predicated region
        $region29: #{forward.1} parent=11 // pred_check
          %p353 = pneg %p153
        $region30: #{forward.1} parent=11 // pred_check_branch
          %355 = sbr.rel (%p353) target = $region32
        $region31: #{forward.1} parent=11 // pred_region
          _
        $region32: #{forward.1} parent=11 // pred_fallthru
          _
        // Predicated region
        $region33: #{forward.1} parent=11 // pred_check
          %p356 = pneg %p174
        $region34: #{forward.1} parent=11 // pred_check_branch
          %358 = sbr.rel (%p356) target = $region36
        $region35: #{forward.1} parent=11 // pred_region
          _
        $region36: #{forward.1} parent=11 // pred_fallthru
          _
        // Predicated region
        $region37: #{forward.1} parent=11 // pred_check
          %p359 = pneg %p195
        $region38: #{forward.1} parent=11 // pred_check_branch
          %361 = sbr.rel (%p359) target = $region40
        $region39: #{forward.1} parent=11 // pred_region
          _
        $region40: #{forward.1} parent=11 // pred_fallthru
          _
        // Predicated region
        $region41: #{forward.1} parent=11 // pred_check
          %p362 = pneg %p216
        $region42: #{forward.1} parent=11 // pred_check_branch
          %364 = sbr.rel (%p362) target = $region44
        $region43: #{forward.1} parent=11 // pred_region
          _
        $region44: #{forward.1} parent=11 // pred_fallthru
          _
        // Predicated region
        $region45: #{forward.1} parent=11 // pred_check
          %p365 = pneg %p237
        $region46: #{forward.1} parent=11 // pred_check_branch
          %367 = sbr.rel (%p365) target = $region48
        $region47: #{forward.1} parent=11 // pred_region
          _
        $region48: #{forward.1} parent=11 // pred_fallthru
          _
        // Predicated region
        $region49: #{forward.1} parent=11 // pred_check
          %p368 = pneg %p258
        $region50: #{forward.1} parent=11 // pred_check_branch
          %370 = sbr.rel (%p368) target = $region52
        $region51: #{forward.1} parent=11 // pred_region
          _
        $region52: #{forward.1} parent=11 // pred_fallthru
          _
        // Predicated region
        $region53: #{forward.1} parent=11 // pred_check
          %p371 = pneg %p279
        $region54: #{forward.1} parent=11 // pred_check_branch
          %373 = sbr.rel (%p371) target = $region56
        $region55: #{forward.1} parent=11 // pred_region
          _
        $region56: #{forward.1} parent=11 // pred_fallthru
          _
        // Predicated region
        $region57: #{forward.1} parent=11 // pred_check
          %p374 = pneg %p300
        $region58: #{forward.1} parent=11 // pred_check_branch
          %376 = sbr.rel (%p374) target = $region60
        $region59: #{forward.1} parent=11 // pred_region
          _
        $region60: #{forward.1} parent=11 // pred_fallthru
          _
      $region12: #{forward.1} parent=5 // pred_fallthru
        _
      %p377 = scmp.lt.s32.totalorder %s22, 2
      // Predicated region
      $region61: #{forward.1} parent=5 // pred_check
        %p378 = pneg %p377
      $region62: #{forward.1} parent=5 // pred_check_branch
        %380 = sbr.rel (%p378) target = $region64
      $region63: #{forward.1} parent=5 // pred_region
        // Predicated region
        $region65: #{forward.1} parent=63 // pred_check
          %p381 = pneg %p42
        $region66: #{forward.1} parent=63 // pred_check_branch
          %383 = sbr.rel (%p381) target = $region68
        $region67: #{forward.1} parent=63 // pred_region
          %p384 = scmp.lt.s32.totalorder %s22, 1
          %s385 = scalar_select %p384, %s22, 1
          %s386 = smul.addr %s385, 112
          %s387 = smul.addr %s386, 8
          %s388 = scalar_lea.vmem %s0, %s387
        $region68: #{forward.1} parent=63 // pred_fallthru
          _
      $region64: #{forward.1} parent=5 // pred_fallthru
        _
      %p389 = scmp.le.s32.totalorder 1, %s22
      %p390 = scmp.lt.s32.totalorder %s22, 3
      %p391 = pnand %p389, %p390
      %p392 = pneg %p391
      // Predicated region
      $region69: #{forward.1} parent=5 // pred_check
        _
      $region70: #{forward.1} parent=5 // pred_check_branch
        %394 = sbr.rel (%p391) target = $region72
      $region71: #{forward.1} parent=5 // pred_region
        %s395 = ssub.s32 %s22, 1
        %p396 = scmp.lt.s32.totalorder %s27, 1
        %s397 = scalar_select %p396, %s27, 1
        %s398 = smul.addr %s397, 112
        %s399 = smul.addr %s398, 8
        %s400 = scalar_lea.vmem %s0, %s399
        %p401 = pneg %p48
        %p402 = pneg %p45
        %p403 = pneg %p69
        %p404 = pneg %p66
        %p405 = pneg %p90
        %p406 = pneg %p87
        %p407 = pneg %p111
        %p408 = pneg %p108
        %p409 = pneg %p132
        %p410 = pneg %p129
        %p411 = pneg %p153
        %p412 = pneg %p150
        %p413 = pneg %p174
        %p414 = pneg %p171
        %p415 = pneg %p195
        %p416 = pneg %p192
        %p417 = pneg %p216
        %p418 = pneg %p213
        %p419 = pneg %p237
        %p420 = pneg %p234
        %p421 = pneg %p258
        %p422 = pneg %p255
        %p423 = pneg %p279
        %p424 = pneg %p276
        %p425 = pneg %p300
        %p426 = pneg %p297
        %p427 = pneg %p326
        %p428 = pneg %p323
        %s429 = sand.u32 %s313, 1
        %s430 = scalar_lea.sflag [#allocation8], %s429
        %s431 = sand.u32 %s313, 1
        %s432 = scalar_lea.vmem [#allocation7], %s431
        %p433 = scmp.lt.s32.totalorder %s27, 1
        %s434 = scalar_select %p433, %s27, 1
        %s435 = smul.addr %s434, 112
        %s436 = smul.addr %s435, 8
        %s437 = scalar_lea.vmem %s0, %s436
        %v438 = vld [vmem:[%s2] sm:$0x1]
        loop: start=0, step=1, limit=26
        $region73: #{forward.1} parent=71 // loop_pre_header
          _
        $region74: #{forward.1} parent=71 // loop_header
          %s440 = sphi 0, %s444
          %p441 = scmp.ge.s32.totalorder %s440, 26
        $region75: #{forward.1} parent=71 // loop_header_branch
          %443 = sbr.rel (%p441) target = $region79
        $region76: #{forward.1} parent=71 // loop_body
          %s445 = smul.u32 %s440, 32
          %s446 = scalar_lea.vmem %s437, %s445
          %v447 = vld [vmem:[%s446] sm:$0xff]
          %v448 = vld [vmem:[%s446 + $0x8] sm:$0xff]
          %v449 = vld [vmem:[%s446 + $0x10] sm:$0xff]
          %v450 = vld [vmem:[%s446 + $0x18] sm:$0x3]
          %v451 = vld [vmem:[%s1] sm:$0x1]
          %453 = vset.pattern.permute.xlu0 0
          %454 = vperm.xlu0 %453, %v447
          %v455 = vpop.permute.xlu0 %454
          %458 = vset.pattern.permute.xlu0 0
          %459 = vperm.xlu0 %458, %v448
          %v460 = vpop.permute.xlu0 %459
          %463 = vset.pattern.permute.xlu0 0
          %464 = vperm.xlu0 %463, %v449
          %v465 = vpop.permute.xlu0 %464
          %468 = vset.pattern.permute.xlu0 0
          %469 = vperm.xlu0 %468, %v450
          %v470 = vpop.permute.xlu0 %469
          %v473 = vlaneseq
          %v474 = vshrl.u32 %v473, 7
          %v475 = vsub.s32 0, %v474
          %v476 = vrot.slane %v451, %v475
          %v478 = vmul.f32 %v455, %v476
          %v479 = vmul.f32 %v460, %v476
          %v480 = vmul.f32 %v465, %v476
          %v481 = vmul.f32 %v470, %v476
          %v482 = vadd.f32 %v478, 0.0
          %v483 = vadd.f32 %v479, 0.0
          %v484 = vadd.f32 %v480, 0.0
          %v485 = vadd.f32 %v481, 0.0
          %v486 = vld [vmem:[%s446 + $0x1] sm:$0xff]
          %v487 = vld [vmem:[%s446 + $0x9] sm:$0xff]
          %v488 = vld [vmem:[%s446 + $0x11] sm:$0xff]
          %v489 = vld [vmem:[%s446 + $0x19] sm:$0x3]
          %s490 = scalar_lea.vmem %s1, 1
          %v491 = vld [vmem:[%s490] sm:$0x1]
          %493 = vset.pattern.permute.xlu0 0
          %494 = vperm.xlu0 %493, %v486
          %v495 = vpop.permute.xlu0 %494
          %498 = vset.pattern.permute.xlu0 0
          %499 = vperm.xlu0 %498, %v487
          %v500 = vpop.permute.xlu0 %499
          %503 = vset.pattern.permute.xlu0 0
          %504 = vperm.xlu0 %503, %v488
          %v505 = vpop.permute.xlu0 %504
          %508 = vset.pattern.permute.xlu0 0
          %509 = vperm.xlu0 %508, %v489
          %v510 = vpop.permute.xlu0 %509
          %v513 = vlaneseq
          %v514 = vshrl.u32 %v513, 7
          %v515 = vsub.s32 0, %v514
          %v516 = vrot.slane %v491, %v515
          %v518 = vmul.f32 %v495, %v516
          %v519 = vmul.f32 %v500, %v516
          %v520 = vmul.f32 %v505, %v516
          %v521 = vmul.f32 %v510, %v516
          %v522 = vadd.f32 %v482, %v518
          %v523 = vadd.f32 %v483, %v519
          %v524 = vadd.f32 %v484, %v520
          %v525 = vadd.f32 %v485, %v521
          %v526 = vld [vmem:[%s446 + $0x2] sm:$0xff]
          %v527 = vld [vmem:[%s446 + $0xa] sm:$0xff]
          %v528 = vld [vmem:[%s446 + $0x12] sm:$0xff]
          %v529 = vld [vmem:[%s446 + $0x1a] sm:$0x3]
          %s530 = scalar_lea.vmem %s1, 2
          %v531 = vld [vmem:[%s530] sm:$0x1]
          %533 = vset.pattern.permute.xlu0 0
          %534 = vperm.xlu0 %533, %v526
          %v535 = vpop.permute.xlu0 %534
          %538 = vset.pattern.permute.xlu0 0
          %539 = vperm.xlu0 %538, %v527
          %v540 = vpop.permute.xlu0 %539
          %543 = vset.pattern.permute.xlu0 0
          %544 = vperm.xlu0 %543, %v528
          %v545 = vpop.permute.xlu0 %544
          %548 = vset.pattern.permute.xlu0 0
          %549 = vperm.xlu0 %548, %v529
          %v550 = vpop.permute.xlu0 %549
          %v553 = vlaneseq
          %v554 = vshrl.u32 %v553, 7
          %v555 = vsub.s32 0, %v554
          %v556 = vrot.slane %v531, %v555
          %v558 = vmul.f32 %v535, %v556
          %v559 = vmul.f32 %v540, %v556
          %v560 = vmul.f32 %v545, %v556
          %v561 = vmul.f32 %v550, %v556
          %v562 = vadd.f32 %v522, %v558
          %v563 = vadd.f32 %v523, %v559
          %v564 = vadd.f32 %v524, %v560
          %v565 = vadd.f32 %v525, %v561
          %s566 = sadd.s32 %s440, 1
          %s567 = smul.u32 %s566, 32
          %s568 = scalar_lea.vmem %s437, %s567
          %v569 = vld [vmem:[%s568] sm:$0xff]
          %v570 = vld [vmem:[%s568 + $0x8] sm:$0xff]
          %v571 = vld [vmem:[%s568 + $0x10] sm:$0xff]
          %v572 = vld [vmem:[%s568 + $0x18] sm:$0x3]
          %s573 = scalar_lea.vmem %s1, 3
          %v574 = vld [vmem:[%s573] sm:$0x1]
          %576 = vset.pattern.permute.xlu0 0
          %577 = vperm.xlu0 %576, %v569
          %v578 = vpop.permute.xlu0 %577
          %581 = vset.pattern.permute.xlu0 0
          %582 = vperm.xlu0 %581, %v570
          %v583 = vpop.permute.xlu0 %582
          %586 = vset.pattern.permute.xlu0 0
          %587 = vperm.xlu0 %586, %v571
          %v588 = vpop.permute.xlu0 %587
          %591 = vset.pattern.permute.xlu0 0
          %592 = vperm.xlu0 %591, %v572
          %v593 = vpop.permute.xlu0 %592
          %v596 = vlaneseq
          %v597 = vshrl.u32 %v596, 7
          %v598 = vsub.s32 0, %v597
          %v599 = vrot.slane %v574, %v598
          %v601 = vmul.f32 %v578, %v599
          %v602 = vmul.f32 %v583, %v599
          %v603 = vmul.f32 %v588, %v599
          %v604 = vmul.f32 %v593, %v599
          %v605 = vadd.f32 %v562, %v601
          %v606 = vadd.f32 %v563, %v602
          %v607 = vadd.f32 %v564, %v603
          %v608 = vadd.f32 %v565, %v604
          %v609 = vld [vmem:[%s568 + $0x1] sm:$0xff]
          %v610 = vld [vmem:[%s568 + $0x9] sm:$0xff]
          %v611 = vld [vmem:[%s568 + $0x11] sm:$0xff]
          %v612 = vld [vmem:[%s568 + $0x19] sm:$0x3]
          %s613 = scalar_lea.vmem %s1, 4
          %v614 = vld [vmem:[%s613] sm:$0x1]
          %616 = vset.pattern.permute.xlu0 0
          %617 = vperm.xlu0 %616, %v609
          %v618 = vpop.permute.xlu0 %617
          %621 = vset.pattern.permute.xlu0 0
          %622 = vperm.xlu0 %621, %v610
          %v623 = vpop.permute.xlu0 %622
          %626 = vset.pattern.permute.xlu0 0
          %627 = vperm.xlu0 %626, %v611
          %v628 = vpop.permute.xlu0 %627
          %631 = vset.pattern.permute.xlu0 0
          %632 = vperm.xlu0 %631, %v612
          %v633 = vpop.permute.xlu0 %632
          %v636 = vlaneseq
          %v637 = vshrl.u32 %v636, 7
          %v638 = vsub.s32 0, %v637
          %v639 = vrot.slane %v614, %v638
          %v641 = vmul.f32 %v618, %v639
          %v642 = vmul.f32 %v623, %v639
          %v643 = vmul.f32 %v628, %v639
          %v644 = vmul.f32 %v633, %v639
          %v645 = vadd.f32 %v605, %v641
          %v646 = vadd.f32 %v606, %v642
          %v647 = vadd.f32 %v607, %v643
          %v648 = vadd.f32 %v608, %v644
          %v649 = vld [vmem:[%s568 + $0x2] sm:$0xff]
          %v650 = vld [vmem:[%s568 + $0xa] sm:$0xff]
          %v651 = vld [vmem:[%s568 + $0x12] sm:$0xff]
          %v652 = vld [vmem:[%s568 + $0x1a] sm:$0x3]
          %s653 = scalar_lea.vmem %s1, 5
          %v654 = vld [vmem:[%s653] sm:$0x1]
          %656 = vset.pattern.permute.xlu0 0
          %657 = vperm.xlu0 %656, %v649
          %v658 = vpop.permute.xlu0 %657
          %661 = vset.pattern.permute.xlu0 0
          %662 = vperm.xlu0 %661, %v650
          %v663 = vpop.permute.xlu0 %662
          %666 = vset.pattern.permute.xlu0 0
          %667 = vperm.xlu0 %666, %v651
          %v668 = vpop.permute.xlu0 %667
          %671 = vset.pattern.permute.xlu0 0
          %672 = vperm.xlu0 %671, %v652
          %v673 = vpop.permute.xlu0 %672
          %v676 = vlaneseq
          %v677 = vshrl.u32 %v676, 7
          %v678 = vsub.s32 0, %v677
          %v679 = vrot.slane %v654, %v678
          %v681 = vmul.f32 %v658, %v679
          %v682 = vmul.f32 %v663, %v679
          %v683 = vmul.f32 %v668, %v679
          %v684 = vmul.f32 %v673, %v679
          %v685 = vadd.f32 %v645, %v681
          %v686 = vadd.f32 %v646, %v682
          %v687 = vadd.f32 %v647, %v683
          %v688 = vadd.f32 %v648, %v684
          %s689 = sadd.s32 %s440, 2
          %s690 = smul.u32 %s689, 32
          %s691 = scalar_lea.vmem %s437, %s690
          %v692 = vld [vmem:[%s691] sm:$0xff]
          %v693 = vld [vmem:[%s691 + $0x8] sm:$0xff]
          %v694 = vld [vmem:[%s691 + $0x10] sm:$0xff]
          %v695 = vld [vmem:[%s691 + $0x18] sm:$0x3]
          %s696 = scalar_lea.vmem %s1, 6
          %v697 = vld [vmem:[%s696] sm:$0x1]
          %699 = vset.pattern.permute.xlu0 0
          %700 = vperm.xlu0 %699, %v692
          %v701 = vpop.permute.xlu0 %700
          %704 = vset.pattern.permute.xlu0 0
          %705 = vperm.xlu0 %704, %v693
          %v706 = vpop.permute.xlu0 %705
          %709 = vset.pattern.permute.xlu0 0
          %710 = vperm.xlu0 %709, %v694
          %v711 = vpop.permute.xlu0 %710
          %714 = vset.pattern.permute.xlu0 0
          %715 = vperm.xlu0 %714, %v695
          %v716 = vpop.permute.xlu0 %715
          %v719 = vlaneseq
          %v720 = vshrl.u32 %v719, 7
          %v721 = vsub.s32 0, %v720
          %v722 = vrot.slane %v697, %v721
          %v724 = vmul.f32 %v701, %v722
          %v725 = vmul.f32 %v706, %v722
          %v726 = vmul.f32 %v711, %v722
          %v727 = vmul.f32 %v716, %v722
          %v728 = vadd.f32 %v685, %v724
          %v729 = vadd.f32 %v686, %v725
          %v730 = vadd.f32 %v687, %v726
          %v731 = vadd.f32 %v688, %v727
          %v732 = vld [vmem:[%s691 + $0x1] sm:$0xff]
          %v733 = vld [vmem:[%s691 + $0x9] sm:$0xff]
          %v734 = vld [vmem:[%s691 + $0x11] sm:$0xff]
          %v735 = vld [vmem:[%s691 + $0x19] sm:$0x3]
          %s736 = scalar_lea.vmem %s1, 7
          %v737 = vld [vmem:[%s736] sm:$0x1]
          %739 = vset.pattern.permute.xlu0 0
          %740 = vperm.xlu0 %739, %v732
          %v741 = vpop.permute.xlu0 %740
          %744 = vset.pattern.permute.xlu0 0
          %745 = vperm.xlu0 %744, %v733
          %v746 = vpop.permute.xlu0 %745
          %749 = vset.pattern.permute.xlu0 0
          %750 = vperm.xlu0 %749, %v734
          %v751 = vpop.permute.xlu0 %750
          %754 = vset.pattern.permute.xlu0 0
          %755 = vperm.xlu0 %754, %v735
          %v756 = vpop.permute.xlu0 %755
          %v759 = vlaneseq
          %v760 = vshrl.u32 %v759, 7
          %v761 = vsub.s32 0, %v760
          %v762 = vrot.slane %v737, %v761
          %v764 = vmul.f32 %v741, %v762
          %v765 = vmul.f32 %v746, %v762
          %v766 = vmul.f32 %v751, %v762
          %v767 = vmul.f32 %v756, %v762
          %v768 = vadd.f32 %v728, %v764
          %v769 = vadd.f32 %v729, %v765
          %v770 = vadd.f32 %v730, %v766
          %v771 = vadd.f32 %v731, %v767
          %v772 = vld [vmem:[%s691 + $0x2] sm:$0xff]
          %v773 = vld [vmem:[%s691 + $0xa] sm:$0xff]
          %v774 = vld [vmem:[%s691 + $0x12] sm:$0xff]
          %v775 = vld [vmem:[%s691 + $0x1a] sm:$0x3]
          %s776 = scalar_lea.vmem %s1, 8
          %v777 = vld [vmem:[%s776] sm:$0x1]
          %779 = vset.pattern.permute.xlu0 0
          %780 = vperm.xlu0 %779, %v772
          %v781 = vpop.permute.xlu0 %780
          %784 = vset.pattern.permute.xlu0 0
          %785 = vperm.xlu0 %784, %v773
          %v786 = vpop.permute.xlu0 %785
          %789 = vset.pattern.permute.xlu0 0
          %790 = vperm.xlu0 %789, %v774
          %v791 = vpop.permute.xlu0 %790
          %794 = vset.pattern.permute.xlu0 0
          %795 = vperm.xlu0 %794, %v775
          %v796 = vpop.permute.xlu0 %795
          %v799 = vlaneseq
          %v800 = vshrl.u32 %v799, 7
          %v801 = vsub.s32 0, %v800
          %v802 = vrot.slane %v777, %v801
          %v804 = vmul.f32 %v781, %v802
          %v805 = vmul.f32 %v786, %v802
          %v806 = vmul.f32 %v791, %v802
          %v807 = vmul.f32 %v796, %v802
          %v808 = vadd.f32 %v768, %v804
          %v809 = vadd.f32 %v769, %v805
          %v810 = vadd.f32 %v770, %v806
          %v811 = vadd.f32 %v771, %v807
          %v813 = vlaneseq
          %v814 = vshrl.u32 %v813, 7
          %v815 = vsub.s32 0, %v814
          %v816 = vrot.slane %v438, %v815
          %v818 = vadd.f32 %v808, %v816
          %v819 = vadd.f32 %v809, %v816
          %v820 = vadd.f32 %v810, %v816
          %v821 = vadd.f32 %v811, %v816
          %v822 = vmax.f32 %v818, 0.0
          %v823 = vmax.f32 %v819, 0.0
          %v824 = vmax.f32 %v820, 0.0
          %v825 = vmax.f32 %v821, 0.0
          %s826 = scalar_lea.vmem [#allocation2], %s445
          %vm827 = vcmask 48128
          %828 = vst.msk [vmem:[%s826] sm:$0xff] %vm827, %v822
          %829 = vst.msk [vmem:[%s826 + $0x8] sm:$0xff] %vm827, %v823
          %830 = vst.msk [vmem:[%s826 + $0x10] sm:$0xff] %vm827, %v824
          %vm831 = vcmask 41984
          %832 = vst.msk [vmem:[%s826 + $0x18] sm:$0x3] %vm831, %v825
        $region77: #{forward.1} parent=71 // loop_footer
          %s444 = sadd.s32 1, %s440
        $region78: #{forward.1} parent=71 // loop_footer_branch
          %439 = sbr.rel target = $region74
        $region79: #{forward.1} parent=71 // loop_exit
          _
        %v833 = vld [vmem:[%s4] sm:$0x1]
        loop: start=0, step=1, limit=24
        $region80: #{forward.1} parent=71 // loop_pre_header
          _
        $region81: #{forward.1} parent=71 // loop_header
          %s835 = sphi 0, %s839
          %p836 = scmp.ge.s32.totalorder %s835, 24
        $region82: #{forward.1} parent=71 // loop_header_branch
          %838 = sbr.rel (%p836) target = $region86
        $region83: #{forward.1} parent=71 // loop_body
          %s840 = smul.u32 %s835, 32
          %s841 = scalar_lea.vmem [#allocation2], %s840
          %v842 = vld [vmem:[%s841] sm:$0xff]
          %v843 = vld [vmem:[%s841 + $0x8] sm:$0xff]
          %v844 = vld [vmem:[%s841 + $0x10] sm:$0xff]
          %v845 = vld [vmem:[%s3] sm:$0x3f]
          %v846 = vld [vmem:[%s841 + $0x1] sm:$0xff]
          %v847 = vld [vmem:[%s841 + $0x9] sm:$0xff]
          %v848 = vld [vmem:[%s841 + $0x11] sm:$0xff]
          %s849 = scalar_lea.vmem %s3, 8
          %v850 = vld [vmem:[%s849] sm:$0x3f]
          %vm851 = vcmask 48128
          %v853 = vsel %vm851, %v846, 0
          %v856 = vsel %vm851, %v847, 0
          %v859 = vsel %vm851, %v848, 0
          %vm861 = vcmask 1045504
          %v863 = vsel %vm861, %v850, 0
          %865 = vmatprep.subr.mxu0 0.0
          %866 = vmatpush1.msra.mxu0 0.0
          %867 = vmatprep.subr.mxu0 0.0
          %868 = vmatpush1.msra.mxu0 0.0
          %869 = vmatprep.subr.mxu0 0.0
          %870 = vmatpush1.msra.mxu0 0.0
          %871 = vmatprep.subr.mxu0 0.0
          %872 = vmatpush1.msra.mxu0 0.0
          %873 = vmatprep.subr.mxu0 0.0
          %874 = vmatpush1.msra.mxu0 0.0
          %875 = vmatprep.subr.mxu0 0.0
          %876 = vmatpush1.msra.mxu0 0.0
          %877 = vmatprep.subr.mxu0 0.0
          %878 = vmatpush1.msra.mxu0 0.0
          %879 = vmatprep.subr.mxu0 0.0
          %880 = vmatpush1.msra.mxu0 0.0
          %881 = vmatprep.subr.mxu0 0.0
          %882 = vmatpush1.msra.mxu0 0.0
          %883 = vmatprep.subr.mxu0 0.0
          %884 = vmatpush1.msra.mxu0 0.0
          %885 = vmatprep.subr.mxu0 0.0
          %886 = vmatpush1.msra.mxu0 0.0
          %887 = vmatprep.subr.mxu0 0.0
          %888 = vmatpush1.msra.mxu0 0.0
          %889 = vmatprep.subr.mxu0 0.0
          %890 = vmatpush1.msra.mxu0 0.0
          %891 = vmatprep.subr.mxu0 0.0
          %892 = vmatpush1.msra.mxu0 0.0
          %893 = vmatprep.subr.mxu0 0.0
          %894 = vmatpush1.msra.mxu0 0.0
          %895 = vmatprep.subr.mxu0 0.0
          %896 = vmatpush1.msra.mxu0 %v863
          %897 = vmatprep.subr.mxu0 0.0
          %898 = vmatpush2.msra.mxu0 0.0
          %899 = vmatprep.subr.mxu0 0.0
          %900 = vmatpush2.msra.mxu0 0.0
          %901 = vmatprep.subr.mxu0 0.0
          %902 = vmatpush2.msra.mxu0 0.0
          %903 = vmatprep.subr.mxu0 0.0
          %904 = vmatpush2.msra.mxu0 0.0
          %905 = vmatprep.subr.mxu0 0.0
          %906 = vmatpush2.msra.mxu0 0.0
          %907 = vmatprep.subr.mxu0 0.0
          %908 = vmatpush2.msra.mxu0 0.0
          %909 = vmatprep.subr.mxu0 0.0
          %910 = vmatpush2.msra.mxu0 0.0
          %911 = vmatprep.subr.mxu0 0.0
          %912 = vmatpush2.msra.mxu0 0.0
          %913 = vmatprep.subr.mxu0 0.0
          %914 = vmatpush2.msra.mxu0 0.0
          %915 = vmatprep.subr.mxu0 0.0
          %916 = vmatpush2.msra.mxu0 0.0
          %917 = vmatprep.subr.mxu0 0.0
          %918 = vmatpush2.msra.mxu0 0.0
          %919 = vmatprep.subr.mxu0 0.0
          %920 = vmatpush2.msra.mxu0 0.0
          %921 = vmatprep.subr.mxu0 0.0
          %922 = vmatpush2.msra.mxu0 0.0
          %923 = vmatprep.subr.mxu0 0.0
          %924 = vmatpush2.msra.mxu0 0.0
          %925 = vmatprep.subr.mxu0 0.0
          %926 = vmatpush2.msra.mxu0 0.0
          %927 = vmatprep.subr.mxu0 0.0
          %928 = vmatpush2.msra.mxu0 0.0
          %929 = vmatprep.mubr.f32.mxu0 0.0
          %930 = vmatmul.mubr.f32.gmra.mxu0 %v853
          %v931 = vpop.f32.mrf.mxu0
          %v932 = vadd.f32 0.0, %v931
          %v933 = vpop.f32.mrf.mxu0
          %934 = vmatprep.mubr.f32.mxu0 0.0
          %935 = vmatmul.mubr.f32.gmra.mxu0 %v856
          %v936 = vpop.f32.mrf.mxu0
          %v937 = vadd.f32 0.0, %v936
          %v938 = vpop.f32.mrf.mxu0
          %939 = vmatprep.mubr.f32.mxu0 0.0
          %940 = vmatmul.mubr.f32.gmra.mxu0 %v859
          %v941 = vpop.f32.mrf.mxu0
          %v942 = vadd.f32 0.0, %v941
          %v943 = vpop.f32.mrf.mxu0
          %944 = vdwg.mxu0
          %v946 = vsel %vm851, %v842, 0
          %v949 = vsel %vm851, %v843, 0
          %v952 = vsel %vm851, %v844, 0
          %v955 = vsel %vm861, %v845, 0
          %957 = vmatprep.subr.mxu0 0.0
          %958 = vmatpush1.msra.mxu0 0.0
          %959 = vmatprep.subr.mxu0 0.0
          %960 = vmatpush1.msra.mxu0 0.0
          %961 = vmatprep.subr.mxu0 0.0
          %962 = vmatpush1.msra.mxu0 0.0
          %963 = vmatprep.subr.mxu0 0.0
          %964 = vmatpush1.msra.mxu0 0.0
          %965 = vmatprep.subr.mxu0 0.0
          %966 = vmatpush1.msra.mxu0 0.0
          %967 = vmatprep.subr.mxu0 0.0
          %968 = vmatpush1.msra.mxu0 0.0
          %969 = vmatprep.subr.mxu0 0.0
          %970 = vmatpush1.msra.mxu0 0.0
          %971 = vmatprep.subr.mxu0 0.0
          %972 = vmatpush1.msra.mxu0 0.0
          %973 = vmatprep.subr.mxu0 0.0
          %974 = vmatpush1.msra.mxu0 0.0
          %975 = vmatprep.subr.mxu0 0.0
          %976 = vmatpush1.msra.mxu0 0.0
          %977 = vmatprep.subr.mxu0 0.0
          %978 = vmatpush1.msra.mxu0 0.0
          %979 = vmatprep.subr.mxu0 0.0
          %980 = vmatpush1.msra.mxu0 0.0
          %981 = vmatprep.subr.mxu0 0.0
          %982 = vmatpush1.msra.mxu0 0.0
          %983 = vmatprep.subr.mxu0 0.0
          %984 = vmatpush1.msra.mxu0 0.0
          %985 = vmatprep.subr.mxu0 0.0
          %986 = vmatpush1.msra.mxu0 0.0
          %987 = vmatprep.subr.mxu0 0.0
          %988 = vmatpush1.msra.mxu0 %v955
          %989 = vmatprep.subr.mxu0 0.0
          %990 = vmatpush2.msra.mxu0 0.0
          %991 = vmatprep.subr.mxu0 0.0
          %992 = vmatpush2.msra.mxu0 0.0
          %993 = vmatprep.subr.mxu0 0.0
          %994 = vmatpush2.msra.mxu0 0.0
          %995 = vmatprep.subr.mxu0 0.0
          %996 = vmatpush2.msra.mxu0 0.0
          %997 = vmatprep.subr.mxu0 0.0
          %998 = vmatpush2.msra.mxu0 0.0
          %999 = vmatprep.subr.mxu0 0.0
          %1000 = vmatpush2.msra.mxu0 0.0
          %1001 = vmatprep.subr.mxu0 0.0
          %1002 = vmatpush2.msra.mxu0 0.0
          %1003 = vmatprep.subr.mxu0 0.0
          %1004 = vmatpush2.msra.mxu0 0.0
          %1005 = vmatprep.subr.mxu0 0.0
          %1006 = vmatpush2.msra.mxu0 0.0
          %1007 = vmatprep.subr.mxu0 0.0
          %1008 = vmatpush2.msra.mxu0 0.0
          %1009 = vmatprep.subr.mxu0 0.0
          %1010 = vmatpush2.msra.mxu0 0.0
          %1011 = vmatprep.subr.mxu0 0.0
          %1012 = vmatpush2.msra.mxu0 0.0
          %1013 = vmatprep.subr.mxu0 0.0
          %1014 = vmatpush2.msra.mxu0 0.0
          %1015 = vmatprep.subr.mxu0 0.0
          %1016 = vmatpush2.msra.mxu0 0.0
          %1017 = vmatprep.subr.mxu0 0.0
          %1018 = vmatpush2.msra.mxu0 0.0
          %1019 = vmatprep.subr.mxu0 0.0
          %1020 = vmatpush2.msra.mxu0 0.0
          %1021 = vmatprep.mubr.f32.mxu0 0.0
          %1022 = vmatmul.mubr.f32.gmra.mxu0 %v946
          %v1023 = vpop.f32.mrf.mxu0
          %v1024 = vadd.f32 %v932, %v1023
          %v1025 = vpop.f32.mrf.mxu0
          %1026 = vmatprep.mubr.f32.mxu0 0.0
          %1027 = vmatmul.mubr.f32.gmra.mxu0 %v949
          %v1028 = vpop.f32.mrf.mxu0
          %v1029 = vadd.f32 %v937, %v1028
          %v1030 = vpop.f32.mrf.mxu0
          %1031 = vmatprep.mubr.f32.mxu0 0.0
          %1032 = vmatmul.mubr.f32.gmra.mxu0 %v952
          %v1033 = vpop.f32.mrf.mxu0
          %v1034 = vadd.f32 %v942, %v1033
          %v1035 = vpop.f32.mrf.mxu0
          %1036 = vdwg.mxu0
          %v1037 = vld [vmem:[%s841 + $0x2] sm:$0xff]
          %v1038 = vld [vmem:[%s841 + $0xa] sm:$0xff]
          %v1039 = vld [vmem:[%s841 + $0x12] sm:$0xff]
          %s1040 = scalar_lea.vmem %s3, 16
          %v1041 = vld [vmem:[%s1040] sm:$0x3f]
          %v1043 = vsel %vm851, %v1037, 0
          %v1046 = vsel %vm851, %v1038, 0
          %v1049 = vsel %vm851, %v1039, 0
          %v1052 = vsel %vm861, %v1041, 0
          %1054 = vmatprep.subr.mxu0 0.0
          %1055 = vmatpush1.msra.mxu0 0.0
          %1056 = vmatprep.subr.mxu0 0.0
          %1057 = vmatpush1.msra.mxu0 0.0
          %1058 = vmatprep.subr.mxu0 0.0
          %1059 = vmatpush1.msra.mxu0 0.0
          %1060 = vmatprep.subr.mxu0 0.0
          %1061 = vmatpush1.msra.mxu0 0.0
          %1062 = vmatprep.subr.mxu0 0.0
          %1063 = vmatpush1.msra.mxu0 0.0
          %1064 = vmatprep.subr.mxu0 0.0
          %1065 = vmatpush1.msra.mxu0 0.0
          %1066 = vmatprep.subr.mxu0 0.0
          %1067 = vmatpush1.msra.mxu0 0.0
          %1068 = vmatprep.subr.mxu0 0.0
          %1069 = vmatpush1.msra.mxu0 0.0
          %1070 = vmatprep.subr.mxu0 0.0
          %1071 = vmatpush1.msra.mxu0 0.0
          %1072 = vmatprep.subr.mxu0 0.0
          %1073 = vmatpush1.msra.mxu0 0.0
          %1074 = vmatprep.subr.mxu0 0.0
          %1075 = vmatpush1.msra.mxu0 0.0
          %1076 = vmatprep.subr.mxu0 0.0
          %1077 = vmatpush1.msra.mxu0 0.0
          %1078 = vmatprep.subr.mxu0 0.0
          %1079 = vmatpush1.msra.mxu0 0.0
          %1080 = vmatprep.subr.mxu0 0.0
          %1081 = vmatpush1.msra.mxu0 0.0
          %1082 = vmatprep.subr.mxu0 0.0
          %1083 = vmatpush1.msra.mxu0 0.0
          %1084 = vmatprep.subr.mxu0 0.0
          %1085 = vmatpush1.msra.mxu0 %v1052
          %1086 = vmatprep.subr.mxu0 0.0
          %1087 = vmatpush2.msra.mxu0 0.0
          %1088 = vmatprep.subr.mxu0 0.0
          %1089 = vmatpush2.msra.mxu0 0.0
          %1090 = vmatprep.subr.mxu0 0.0
          %1091 = vmatpush2.msra.mxu0 0.0
          %1092 = vmatprep.subr.mxu0 0.0
          %1093 = vmatpush2.msra.mxu0 0.0
          %1094 = vmatprep.subr.mxu0 0.0
          %1095 = vmatpush2.msra.mxu0 0.0
          %1096 = vmatprep.subr.mxu0 0.0
          %1097 = vmatpush2.msra.mxu0 0.0
          %1098 = vmatprep.subr.mxu0 0.0
          %1099 = vmatpush2.msra.mxu0 0.0
          %1100 = vmatprep.subr.mxu0 0.0
          %1101 = vmatpush2.msra.mxu0 0.0
          %1102 = vmatprep.subr.mxu0 0.0
          %1103 = vmatpush2.msra.mxu0 0.0
          %1104 = vmatprep.subr.mxu0 0.0
          %1105 = vmatpush2.msra.mxu0 0.0
          %1106 = vmatprep.subr.mxu0 0.0
          %1107 = vmatpush2.msra.mxu0 0.0
          %1108 = vmatprep.subr.mxu0 0.0
          %1109 = vmatpush2.msra.mxu0 0.0
          %1110 = vmatprep.subr.mxu0 0.0
          %1111 = vmatpush2.msra.mxu0 0.0
          %1112 = vmatprep.subr.mxu0 0.0
          %1113 = vmatpush2.msra.mxu0 0.0
          %1114 = vmatprep.subr.mxu0 0.0
          %1115 = vmatpush2.msra.mxu0 0.0
          %1116 = vmatprep.subr.mxu0 0.0
          %1117 = vmatpush2.msra.mxu0 0.0
          %1118 = vmatprep.mubr.f32.mxu0 0.0
          %1119 = vmatmul.mubr.f32.gmra.mxu0 %v1043
          %v1120 = vpop.f32.mrf.mxu0
          %v1121 = vadd.f32 0.0, %v1120
          %v1122 = vpop.f32.mrf.mxu0
          %1123 = vmatprep.mubr.f32.mxu0 0.0
          %1124 = vmatmul.mubr.f32.gmra.mxu0 %v1046
          %v1125 = vpop.f32.mrf.mxu0
          %v1126 = vadd.f32 0.0, %v1125
          %v1127 = vpop.f32.mrf.mxu0
          %1128 = vmatprep.mubr.f32.mxu0 0.0
          %1129 = vmatmul.mubr.f32.gmra.mxu0 %v1049
          %v1130 = vpop.f32.mrf.mxu0
          %v1131 = vadd.f32 0.0, %v1130
          %v1132 = vpop.f32.mrf.mxu0
          %1133 = vdwg.mxu0
          %v1134 = vadd.f32 %v1024, %v1121
          %v1135 = vadd.f32 %v1029, %v1126
          %v1136 = vadd.f32 %v1034, %v1131
          %s1137 = sadd.s32 %s835, 1
          %s1138 = smul.u32 %s1137, 32
          %s1139 = scalar_lea.vmem [#allocation2], %s1138
          %v1140 = vld [vmem:[%s1139] sm:$0xff]
          %v1141 = vld [vmem:[%s1139 + $0x8] sm:$0xff]
          %v1142 = vld [vmem:[%s1139 + $0x10] sm:$0xff]
          %s1143 = scalar_lea.vmem %s3, 24
          %v1144 = vld [vmem:[%s1143] sm:$0x3f]
          %v1146 = vsel %vm851, %v1140, 0
          %v1149 = vsel %vm851, %v1141, 0
          %v1152 = vsel %vm851, %v1142, 0
          %v1155 = vsel %vm861, %v1144, 0
          %1157 = vmatprep.subr.mxu0 0.0
          %1158 = vmatpush1.msra.mxu0 0.0
          %1159 = vmatprep.subr.mxu0 0.0
          %1160 = vmatpush1.msra.mxu0 0.0
          %1161 = vmatprep.subr.mxu0 0.0
          %1162 = vmatpush1.msra.mxu0 0.0
          %1163 = vmatprep.subr.mxu0 0.0
          %1164 = vmatpush1.msra.mxu0 0.0
          %1165 = vmatprep.subr.mxu0 0.0
          %1166 = vmatpush1.msra.mxu0 0.0
          %1167 = vmatprep.subr.mxu0 0.0
          %1168 = vmatpush1.msra.mxu0 0.0
          %1169 = vmatprep.subr.mxu0 0.0
          %1170 = vmatpush1.msra.mxu0 0.0
          %1171 = vmatprep.subr.mxu0 0.0
          %1172 = vmatpush1.msra.mxu0 0.0
          %1173 = vmatprep.subr.mxu0 0.0
          %1174 = vmatpush1.msra.mxu0 0.0
          %1175 = vmatprep.subr.mxu0 0.0
          %1176 = vmatpush1.msra.mxu0 0.0
          %1177 = vmatprep.subr.mxu0 0.0
          %1178 = vmatpush1.msra.mxu0 0.0
          %1179 = vmatprep.subr.mxu0 0.0
          %1180 = vmatpush1.msra.mxu0 0.0
          %1181 = vmatprep.subr.mxu0 0.0
          %1182 = vmatpush1.msra.mxu0 0.0
          %1183 = vmatprep.subr.mxu0 0.0
          %1184 = vmatpush1.msra.mxu0 0.0
          %1185 = vmatprep.subr.mxu0 0.0
          %1186 = vmatpush1.msra.mxu0 0.0
          %1187 = vmatprep.subr.mxu0 0.0
          %1188 = vmatpush1.msra.mxu0 %v1155
          %1189 = vmatprep.subr.mxu0 0.0
          %1190 = vmatpush2.msra.mxu0 0.0
          %1191 = vmatprep.subr.mxu0 0.0
          %1192 = vmatpush2.msra.mxu0 0.0
          %1193 = vmatprep.subr.mxu0 0.0
          %1194 = vmatpush2.msra.mxu0 0.0
          %1195 = vmatprep.subr.mxu0 0.0
          %1196 = vmatpush2.msra.mxu0 0.0
          %1197 = vmatprep.subr.mxu0 0.0
          %1198 = vmatpush2.msra.mxu0 0.0
          %1199 = vmatprep.subr.mxu0 0.0
          %1200 = vmatpush2.msra.mxu0 0.0
          %1201 = vmatprep.subr.mxu0 0.0
          %1202 = vmatpush2.msra.mxu0 0.0
          %1203 = vmatprep.subr.mxu0 0.0
          %1204 = vmatpush2.msra.mxu0 0.0
          %1205 = vmatprep.subr.mxu0 0.0
          %1206 = vmatpush2.msra.mxu0 0.0
          %1207 = vmatprep.subr.mxu0 0.0
          %1208 = vmatpush2.msra.mxu0 0.0
          %1209 = vmatprep.subr.mxu0 0.0
          %1210 = vmatpush2.msra.mxu0 0.0
          %1211 = vmatprep.subr.mxu0 0.0
          %1212 = vmatpush2.msra.mxu0 0.0
          %1213 = vmatprep.subr.mxu0 0.0
          %1214 = vmatpush2.msra.mxu0 0.0
          %1215 = vmatprep.subr.mxu0 0.0
          %1216 = vmatpush2.msra.mxu0 0.0
          %1217 = vmatprep.subr.mxu0 0.0
          %1218 = vmatpush2.msra.mxu0 0.0
          %1219 = vmatprep.subr.mxu0 0.0
          %1220 = vmatpush2.msra.mxu0 0.0
          %1221 = vmatprep.mubr.f32.mxu0 0.0
          %1222 = vmatmul.mubr.f32.gmra.mxu0 %v1146
          %v1223 = vpop.f32.mrf.mxu0
          %v1224 = vadd.f32 0.0, %v1223
          %v1225 = vpop.f32.mrf.mxu0
          %1226 = vmatprep.mubr.f32.mxu0 0.0
          %1227 = vmatmul.mubr.f32.gmra.mxu0 %v1149
          %v1228 = vpop.f32.mrf.mxu0
          %v1229 = vadd.f32 0.0, %v1228
          %v1230 = vpop.f32.mrf.mxu0
          %1231 = vmatprep.mubr.f32.mxu0 0.0
          %1232 = vmatmul.mubr.f32.gmra.mxu0 %v1152
          %v1233 = vpop.f32.mrf.mxu0
          %v1234 = vadd.f32 0.0, %v1233
          %v1235 = vpop.f32.mrf.mxu0
          %1236 = vdwg.mxu0
          %v1237 = vadd.f32 %v1134, %v1224
          %v1238 = vadd.f32 %v1135, %v1229
          %v1239 = vadd.f32 %v1136, %v1234
          %v1240 = vld [vmem:[%s1139 + $0x1] sm:$0xff]
          %v1241 = vld [vmem:[%s1139 + $0x9] sm:$0xff]
          %v1242 = vld [vmem:[%s1139 + $0x11] sm:$0xff]
          %s1243 = scalar_lea.vmem %s3, 32
          %v1244 = vld [vmem:[%s1243] sm:$0x3f]
          %v1246 = vsel %vm851, %v1240, 0
          %v1249 = vsel %vm851, %v1241, 0
          %v1252 = vsel %vm851, %v1242, 0
          %v1255 = vsel %vm861, %v1244, 0
          %1257 = vmatprep.subr.mxu0 0.0
          %1258 = vmatpush1.msra.mxu0 0.0
          %1259 = vmatprep.subr.mxu0 0.0
          %1260 = vmatpush1.msra.mxu0 0.0
          %1261 = vmatprep.subr.mxu0 0.0
          %1262 = vmatpush1.msra.mxu0 0.0
          %1263 = vmatprep.subr.mxu0 0.0
          %1264 = vmatpush1.msra.mxu0 0.0
          %1265 = vmatprep.subr.mxu0 0.0
          %1266 = vmatpush1.msra.mxu0 0.0
          %1267 = vmatprep.subr.mxu0 0.0
          %1268 = vmatpush1.msra.mxu0 0.0
          %1269 = vmatprep.subr.mxu0 0.0
          %1270 = vmatpush1.msra.mxu0 0.0
          %1271 = vmatprep.subr.mxu0 0.0
          %1272 = vmatpush1.msra.mxu0 0.0
          %1273 = vmatprep.subr.mxu0 0.0
          %1274 = vmatpush1.msra.mxu0 0.0
          %1275 = vmatprep.subr.mxu0 0.0
          %1276 = vmatpush1.msra.mxu0 0.0
          %1277 = vmatprep.subr.mxu0 0.0
          %1278 = vmatpush1.msra.mxu0 0.0
          %1279 = vmatprep.subr.mxu0 0.0
          %1280 = vmatpush1.msra.mxu0 0.0
          %1281 = vmatprep.subr.mxu0 0.0
          %1282 = vmatpush1.msra.mxu0 0.0
          %1283 = vmatprep.subr.mxu0 0.0
          %1284 = vmatpush1.msra.mxu0 0.0
          %1285 = vmatprep.subr.mxu0 0.0
          %1286 = vmatpush1.msra.mxu0 0.0
          %1287 = vmatprep.subr.mxu0 0.0
          %1288 = vmatpush1.msra.mxu0 %v1255
          %1289 = vmatprep.subr.mxu0 0.0
          %1290 = vmatpush2.msra.mxu0 0.0
          %1291 = vmatprep.subr.mxu0 0.0
          %1292 = vmatpush2.msra.mxu0 0.0
          %1293 = vmatprep.subr.mxu0 0.0
          %1294 = vmatpush2.msra.mxu0 0.0
          %1295 = vmatprep.subr.mxu0 0.0
          %1296 = vmatpush2.msra.mxu0 0.0
          %1297 = vmatprep.subr.mxu0 0.0
          %1298 = vmatpush2.msra.mxu0 0.0
          %1299 = vmatprep.subr.mxu0 0.0
          %1300 = vmatpush2.msra.mxu0 0.0
          %1301 = vmatprep.subr.mxu0 0.0
          %1302 = vmatpush2.msra.mxu0 0.0
          %1303 = vmatprep.subr.mxu0 0.0
          %1304 = vmatpush2.msra.mxu0 0.0
          %1305 = vmatprep.subr.mxu0 0.0
          %1306 = vmatpush2.msra.mxu0 0.0
          %1307 = vmatprep.subr.mxu0 0.0
          %1308 = vmatpush2.msra.mxu0 0.0
          %1309 = vmatprep.subr.mxu0 0.0
          %1310 = vmatpush2.msra.mxu0 0.0
          %1311 = vmatprep.subr.mxu0 0.0
          %1312 = vmatpush2.msra.mxu0 0.0
          %1313 = vmatprep.subr.mxu0 0.0
          %1314 = vmatpush2.msra.mxu0 0.0
          %1315 = vmatprep.subr.mxu0 0.0
          %1316 = vmatpush2.msra.mxu0 0.0
          %1317 = vmatprep.subr.mxu0 0.0
          %1318 = vmatpush2.msra.mxu0 0.0
          %1319 = vmatprep.subr.mxu0 0.0
          %1320 = vmatpush2.msra.mxu0 0.0
          %1321 = vmatprep.mubr.f32.mxu0 0.0
          %1322 = vmatmul.mubr.f32.gmra.mxu0 %v1246
          %v1323 = vpop.f32.mrf.mxu0
          %v1324 = vadd.f32 0.0, %v1323
          %v1325 = vpop.f32.mrf.mxu0
          %1326 = vmatprep.mubr.f32.mxu0 0.0
          %1327 = vmatmul.mubr.f32.gmra.mxu0 %v1249
          %v1328 = vpop.f32.mrf.mxu0
          %v1329 = vadd.f32 0.0, %v1328
          %v1330 = vpop.f32.mrf.mxu0
          %1331 = vmatprep.mubr.f32.mxu0 0.0
          %1332 = vmatmul.mubr.f32.gmra.mxu0 %v1252
          %v1333 = vpop.f32.mrf.mxu0
          %v1334 = vadd.f32 0.0, %v1333
          %v1335 = vpop.f32.mrf.mxu0
          %1336 = vdwg.mxu0
          %v1337 = vadd.f32 %v1237, %v1324
          %v1338 = vadd.f32 %v1238, %v1329
          %v1339 = vadd.f32 %v1239, %v1334
          %v1340 = vld [vmem:[%s1139 + $0x2] sm:$0xff]
          %v1341 = vld [vmem:[%s1139 + $0xa] sm:$0xff]
          %v1342 = vld [vmem:[%s1139 + $0x12] sm:$0xff]
          %s1343 = scalar_lea.vmem %s3, 40
          %v1344 = vld [vmem:[%s1343] sm:$0x3f]
          %v1346 = vsel %vm851, %v1340, 0
          %v1349 = vsel %vm851, %v1341, 0
          %v1352 = vsel %vm851, %v1342, 0
          %v1355 = vsel %vm861, %v1344, 0
          %1357 = vmatprep.subr.mxu0 0.0
          %1358 = vmatpush1.msra.mxu0 0.0
          %1359 = vmatprep.subr.mxu0 0.0
          %1360 = vmatpush1.msra.mxu0 0.0
          %1361 = vmatprep.subr.mxu0 0.0
          %1362 = vmatpush1.msra.mxu0 0.0
          %1363 = vmatprep.subr.mxu0 0.0
          %1364 = vmatpush1.msra.mxu0 0.0
          %1365 = vmatprep.subr.mxu0 0.0
          %1366 = vmatpush1.msra.mxu0 0.0
          %1367 = vmatprep.subr.mxu0 0.0
          %1368 = vmatpush1.msra.mxu0 0.0
          %1369 = vmatprep.subr.mxu0 0.0
          %1370 = vmatpush1.msra.mxu0 0.0
          %1371 = vmatprep.subr.mxu0 0.0
          %1372 = vmatpush1.msra.mxu0 0.0
          %1373 = vmatprep.subr.mxu0 0.0
          %1374 = vmatpush1.msra.mxu0 0.0
          %1375 = vmatprep.subr.mxu0 0.0
          %1376 = vmatpush1.msra.mxu0 0.0
          %1377 = vmatprep.subr.mxu0 0.0
          %1378 = vmatpush1.msra.mxu0 0.0
          %1379 = vmatprep.subr.mxu0 0.0
          %1380 = vmatpush1.msra.mxu0 0.0
          %1381 = vmatprep.subr.mxu0 0.0
          %1382 = vmatpush1.msra.mxu0 0.0
          %1383 = vmatprep.subr.mxu0 0.0
          %1384 = vmatpush1.msra.mxu0 0.0
          %1385 = vmatprep.subr.mxu0 0.0
          %1386 = vmatpush1.msra.mxu0 0.0
          %1387 = vmatprep.subr.mxu0 0.0
          %1388 = vmatpush1.msra.mxu0 %v1355
          %1389 = vmatprep.subr.mxu0 0.0
          %1390 = vmatpush2.msra.mxu0 0.0
          %1391 = vmatprep.subr.mxu0 0.0
          %1392 = vmatpush2.msra.mxu0 0.0
          %1393 = vmatprep.subr.mxu0 0.0
          %1394 = vmatpush2.msra.mxu0 0.0
          %1395 = vmatprep.subr.mxu0 0.0
          %1396 = vmatpush2.msra.mxu0 0.0
          %1397 = vmatprep.subr.mxu0 0.0
          %1398 = vmatpush2.msra.mxu0 0.0
          %1399 = vmatprep.subr.mxu0 0.0
          %1400 = vmatpush2.msra.mxu0 0.0
          %1401 = vmatprep.subr.mxu0 0.0
          %1402 = vmatpush2.msra.mxu0 0.0
          %1403 = vmatprep.subr.mxu0 0.0
          %1404 = vmatpush2.msra.mxu0 0.0
          %1405 = vmatprep.subr.mxu0 0.0
          %1406 = vmatpush2.msra.mxu0 0.0
          %1407 = vmatprep.subr.mxu0 0.0
          %1408 = vmatpush2.msra.mxu0 0.0
          %1409 = vmatprep.subr.mxu0 0.0
          %1410 = vmatpush2.msra.mxu0 0.0
          %1411 = vmatprep.subr.mxu0 0.0
          %1412 = vmatpush2.msra.mxu0 0.0
          %1413 = vmatprep.subr.mxu0 0.0
          %1414 = vmatpush2.msra.mxu0 0.0
          %1415 = vmatprep.subr.mxu0 0.0
          %1416 = vmatpush2.msra.mxu0 0.0
          %1417 = vmatprep.subr.mxu0 0.0
          %1418 = vmatpush2.msra.mxu0 0.0
          %1419 = vmatprep.subr.mxu0 0.0
          %1420 = vmatpush2.msra.mxu0 0.0
          %1421 = vmatprep.mubr.f32.mxu0 0.0
          %1422 = vmatmul.mubr.f32.gmra.mxu0 %v1346
          %v1423 = vpop.f32.mrf.mxu0
          %v1424 = vadd.f32 0.0, %v1423
          %v1425 = vpop.f32.mrf.mxu0
          %1426 = vmatprep.mubr.f32.mxu0 0.0
          %1427 = vmatmul.mubr.f32.gmra.mxu0 %v1349
          %v1428 = vpop.f32.mrf.mxu0
          %v1429 = vadd.f32 0.0, %v1428
          %v1430 = vpop.f32.mrf.mxu0
          %1431 = vmatprep.mubr.f32.mxu0 0.0
          %1432 = vmatmul.mubr.f32.gmra.mxu0 %v1352
          %v1433 = vpop.f32.mrf.mxu0
          %v1434 = vadd.f32 0.0, %v1433
          %v1435 = vpop.f32.mrf.mxu0
          %1436 = vdwg.mxu0
          %v1437 = vadd.f32 %v1337, %v1424
          %v1438 = vadd.f32 %v1338, %v1429
          %v1439 = vadd.f32 %v1339, %v1434
          %s1440 = sadd.s32 %s835, 2
          %s1441 = smul.u32 %s1440, 32
          %s1442 = scalar_lea.vmem [#allocation2], %s1441
          %v1443 = vld [vmem:[%s1442] sm:$0xff]
          %v1444 = vld [vmem:[%s1442 + $0x8] sm:$0xff]
          %v1445 = vld [vmem:[%s1442 + $0x10] sm:$0xff]
          %s1446 = scalar_lea.vmem %s3, 48
          %v1447 = vld [vmem:[%s1446] sm:$0x3f]
          %v1449 = vsel %vm851, %v1443, 0
          %v1452 = vsel %vm851, %v1444, 0
          %v1455 = vsel %vm851, %v1445, 0
          %v1458 = vsel %vm861, %v1447, 0
          %1460 = vmatprep.subr.mxu0 0.0
          %1461 = vmatpush1.msra.mxu0 0.0
          %1462 = vmatprep.subr.mxu0 0.0
          %1463 = vmatpush1.msra.mxu0 0.0
          %1464 = vmatprep.subr.mxu0 0.0
          %1465 = vmatpush1.msra.mxu0 0.0
          %1466 = vmatprep.subr.mxu0 0.0
          %1467 = vmatpush1.msra.mxu0 0.0
          %1468 = vmatprep.subr.mxu0 0.0
          %1469 = vmatpush1.msra.mxu0 0.0
          %1470 = vmatprep.subr.mxu0 0.0
          %1471 = vmatpush1.msra.mxu0 0.0
          %1472 = vmatprep.subr.mxu0 0.0
          %1473 = vmatpush1.msra.mxu0 0.0
          %1474 = vmatprep.subr.mxu0 0.0
          %1475 = vmatpush1.msra.mxu0 0.0
          %1476 = vmatprep.subr.mxu0 0.0
          %1477 = vmatpush1.msra.mxu0 0.0
          %1478 = vmatprep.subr.mxu0 0.0
          %1479 = vmatpush1.msra.mxu0 0.0
          %1480 = vmatprep.subr.mxu0 0.0
          %1481 = vmatpush1.msra.mxu0 0.0
          %1482 = vmatprep.subr.mxu0 0.0
          %1483 = vmatpush1.msra.mxu0 0.0
          %1484 = vmatprep.subr.mxu0 0.0
          %1485 = vmatpush1.msra.mxu0 0.0
          %1486 = vmatprep.subr.mxu0 0.0
          %1487 = vmatpush1.msra.mxu0 0.0
          %1488 = vmatprep.subr.mxu0 0.0
          %1489 = vmatpush1.msra.mxu0 0.0
          %1490 = vmatprep.subr.mxu0 0.0
          %1491 = vmatpush1.msra.mxu0 %v1458
          %1492 = vmatprep.subr.mxu0 0.0
          %1493 = vmatpush2.msra.mxu0 0.0
          %1494 = vmatprep.subr.mxu0 0.0
          %1495 = vmatpush2.msra.mxu0 0.0
          %1496 = vmatprep.subr.mxu0 0.0
          %1497 = vmatpush2.msra.mxu0 0.0
          %1498 = vmatprep.subr.mxu0 0.0
          %1499 = vmatpush2.msra.mxu0 0.0
          %1500 = vmatprep.subr.mxu0 0.0
          %1501 = vmatpush2.msra.mxu0 0.0
          %1502 = vmatprep.subr.mxu0 0.0
          %1503 = vmatpush2.msra.mxu0 0.0
          %1504 = vmatprep.subr.mxu0 0.0
          %1505 = vmatpush2.msra.mxu0 0.0
          %1506 = vmatprep.subr.mxu0 0.0
          %1507 = vmatpush2.msra.mxu0 0.0
          %1508 = vmatprep.subr.mxu0 0.0
          %1509 = vmatpush2.msra.mxu0 0.0
          %1510 = vmatprep.subr.mxu0 0.0
          %1511 = vmatpush2.msra.mxu0 0.0
          %1512 = vmatprep.subr.mxu0 0.0
          %1513 = vmatpush2.msra.mxu0 0.0
          %1514 = vmatprep.subr.mxu0 0.0
          %1515 = vmatpush2.msra.mxu0 0.0
          %1516 = vmatprep.subr.mxu0 0.0
          %1517 = vmatpush2.msra.mxu0 0.0
          %1518 = vmatprep.subr.mxu0 0.0
          %1519 = vmatpush2.msra.mxu0 0.0
          %1520 = vmatprep.subr.mxu0 0.0
          %1521 = vmatpush2.msra.mxu0 0.0
          %1522 = vmatprep.subr.mxu0 0.0
          %1523 = vmatpush2.msra.mxu0 0.0
          %1524 = vmatprep.mubr.f32.mxu0 0.0
          %1525 = vmatmul.mubr.f32.gmra.mxu0 %v1449
          %v1526 = vpop.f32.mrf.mxu0
          %v1527 = vadd.f32 0.0, %v1526
          %v1528 = vpop.f32.mrf.mxu0
          %1529 = vmatprep.mubr.f32.mxu0 0.0
          %1530 = vmatmul.mubr.f32.gmra.mxu0 %v1452
          %v1531 = vpop.f32.mrf.mxu0
          %v1532 = vadd.f32 0.0, %v1531
          %v1533 = vpop.f32.mrf.mxu0
          %1534 = vmatprep.mubr.f32.mxu0 0.0
          %1535 = vmatmul.mubr.f32.gmra.mxu0 %v1455
          %v1536 = vpop.f32.mrf.mxu0
          %v1537 = vadd.f32 0.0, %v1536
          %v1538 = vpop.f32.mrf.mxu0
          %1539 = vdwg.mxu0
          %v1540 = vadd.f32 %v1437, %v1527
          %v1541 = vadd.f32 %v1438, %v1532
          %v1542 = vadd.f32 %v1439, %v1537
          %v1543 = vld [vmem:[%s1442 + $0x1] sm:$0xff]
          %v1544 = vld [vmem:[%s1442 + $0x9] sm:$0xff]
          %v1545 = vld [vmem:[%s1442 + $0x11] sm:$0xff]
          %s1546 = scalar_lea.vmem %s3, 56
          %v1547 = vld [vmem:[%s1546] sm:$0x3f]
          %v1549 = vsel %vm851, %v1543, 0
          %v1552 = vsel %vm851, %v1544, 0
          %v1555 = vsel %vm851, %v1545, 0
          %v1558 = vsel %vm861, %v1547, 0
          %1560 = vmatprep.subr.mxu0 0.0
          %1561 = vmatpush1.msra.mxu0 0.0
          %1562 = vmatprep.subr.mxu0 0.0
          %1563 = vmatpush1.msra.mxu0 0.0
          %1564 = vmatprep.subr.mxu0 0.0
          %1565 = vmatpush1.msra.mxu0 0.0
          %1566 = vmatprep.subr.mxu0 0.0
          %1567 = vmatpush1.msra.mxu0 0.0
          %1568 = vmatprep.subr.mxu0 0.0
          %1569 = vmatpush1.msra.mxu0 0.0
          %1570 = vmatprep.subr.mxu0 0.0
          %1571 = vmatpush1.msra.mxu0 0.0
          %1572 = vmatprep.subr.mxu0 0.0
          %1573 = vmatpush1.msra.mxu0 0.0
          %1574 = vmatprep.subr.mxu0 0.0
          %1575 = vmatpush1.msra.mxu0 0.0
          %1576 = vmatprep.subr.mxu0 0.0
          %1577 = vmatpush1.msra.mxu0 0.0
          %1578 = vmatprep.subr.mxu0 0.0
          %1579 = vmatpush1.msra.mxu0 0.0
          %1580 = vmatprep.subr.mxu0 0.0
          %1581 = vmatpush1.msra.mxu0 0.0
          %1582 = vmatprep.subr.mxu0 0.0
          %1583 = vmatpush1.msra.mxu0 0.0
          %1584 = vmatprep.subr.mxu0 0.0
          %1585 = vmatpush1.msra.mxu0 0.0
          %1586 = vmatprep.subr.mxu0 0.0
          %1587 = vmatpush1.msra.mxu0 0.0
          %1588 = vmatprep.subr.mxu0 0.0
          %1589 = vmatpush1.msra.mxu0 0.0
          %1590 = vmatprep.subr.mxu0 0.0
          %1591 = vmatpush1.msra.mxu0 %v1558
          %1592 = vmatprep.subr.mxu0 0.0
          %1593 = vmatpush2.msra.mxu0 0.0
          %1594 = vmatprep.subr.mxu0 0.0
          %1595 = vmatpush2.msra.mxu0 0.0
          %1596 = vmatprep.subr.mxu0 0.0
          %1597 = vmatpush2.msra.mxu0 0.0
          %1598 = vmatprep.subr.mxu0 0.0
          %1599 = vmatpush2.msra.mxu0 0.0
          %1600 = vmatprep.subr.mxu0 0.0
          %1601 = vmatpush2.msra.mxu0 0.0
          %1602 = vmatprep.subr.mxu0 0.0
          %1603 = vmatpush2.msra.mxu0 0.0
          %1604 = vmatprep.subr.mxu0 0.0
          %1605 = vmatpush2.msra.mxu0 0.0
          %1606 = vmatprep.subr.mxu0 0.0
          %1607 = vmatpush2.msra.mxu0 0.0
          %1608 = vmatprep.subr.mxu0 0.0
          %1609 = vmatpush2.msra.mxu0 0.0
          %1610 = vmatprep.subr.mxu0 0.0
          %1611 = vmatpush2.msra.mxu0 0.0
          %1612 = vmatprep.subr.mxu0 0.0
          %1613 = vmatpush2.msra.mxu0 0.0
          %1614 = vmatprep.subr.mxu0 0.0
          %1615 = vmatpush2.msra.mxu0 0.0
          %1616 = vmatprep.subr.mxu0 0.0
          %1617 = vmatpush2.msra.mxu0 0.0
          %1618 = vmatprep.subr.mxu0 0.0
          %1619 = vmatpush2.msra.mxu0 0.0
          %1620 = vmatprep.subr.mxu0 0.0
          %1621 = vmatpush2.msra.mxu0 0.0
          %1622 = vmatprep.subr.mxu0 0.0
          %1623 = vmatpush2.msra.mxu0 0.0
          %1624 = vmatprep.mubr.f32.mxu0 0.0
          %1625 = vmatmul.mubr.f32.gmra.mxu0 %v1549
          %v1626 = vpop.f32.mrf.mxu0
          %v1627 = vadd.f32 0.0, %v1626
          %v1628 = vpop.f32.mrf.mxu0
          %1629 = vmatprep.mubr.f32.mxu0 0.0
          %1630 = vmatmul.mubr.f32.gmra.mxu0 %v1552
          %v1631 = vpop.f32.mrf.mxu0
          %v1632 = vadd.f32 0.0, %v1631
          %v1633 = vpop.f32.mrf.mxu0
          %1634 = vmatprep.mubr.f32.mxu0 0.0
          %1635 = vmatmul.mubr.f32.gmra.mxu0 %v1555
          %v1636 = vpop.f32.mrf.mxu0
          %v1637 = vadd.f32 0.0, %v1636
          %v1638 = vpop.f32.mrf.mxu0
          %1639 = vdwg.mxu0
          %v1640 = vadd.f32 %v1540, %v1627
          %v1641 = vadd.f32 %v1541, %v1632
          %v1642 = vadd.f32 %v1542, %v1637
          %v1643 = vld [vmem:[%s1442 + $0x2] sm:$0xff]
          %v1644 = vld [vmem:[%s1442 + $0xa] sm:$0xff]
          %v1645 = vld [vmem:[%s1442 + $0x12] sm:$0xff]
          %s1646 = scalar_lea.vmem %s3, 64
          %v1647 = vld [vmem:[%s1646] sm:$0x3f]
          %v1649 = vsel %vm851, %v1643, 0
          %v1652 = vsel %vm851, %v1644, 0
          %v1655 = vsel %vm851, %v1645, 0
          %v1658 = vsel %vm861, %v1647, 0
          %1660 = vmatprep.subr.mxu0 0.0
          %1661 = vmatpush1.msra.mxu0 0.0
          %1662 = vmatprep.subr.mxu0 0.0
          %1663 = vmatpush1.msra.mxu0 0.0
          %1664 = vmatprep.subr.mxu0 0.0
          %1665 = vmatpush1.msra.mxu0 0.0
          %1666 = vmatprep.subr.mxu0 0.0
          %1667 = vmatpush1.msra.mxu0 0.0
          %1668 = vmatprep.subr.mxu0 0.0
          %1669 = vmatpush1.msra.mxu0 0.0
          %1670 = vmatprep.subr.mxu0 0.0
          %1671 = vmatpush1.msra.mxu0 0.0
          %1672 = vmatprep.subr.mxu0 0.0
          %1673 = vmatpush1.msra.mxu0 0.0
          %1674 = vmatprep.subr.mxu0 0.0
          %1675 = vmatpush1.msra.mxu0 0.0
          %1676 = vmatprep.subr.mxu0 0.0
          %1677 = vmatpush1.msra.mxu0 0.0
          %1678 = vmatprep.subr.mxu0 0.0
          %1679 = vmatpush1.msra.mxu0 0.0
          %1680 = vmatprep.subr.mxu0 0.0
          %1681 = vmatpush1.msra.mxu0 0.0
          %1682 = vmatprep.subr.mxu0 0.0
          %1683 = vmatpush1.msra.mxu0 0.0
          %1684 = vmatprep.subr.mxu0 0.0
          %1685 = vmatpush1.msra.mxu0 0.0
          %1686 = vmatprep.subr.mxu0 0.0
          %1687 = vmatpush1.msra.mxu0 0.0
          %1688 = vmatprep.subr.mxu0 0.0
          %1689 = vmatpush1.msra.mxu0 0.0
          %1690 = vmatprep.subr.mxu0 0.0
          %1691 = vmatpush1.msra.mxu0 %v1658
          %1692 = vmatprep.subr.mxu0 0.0
          %1693 = vmatpush2.msra.mxu0 0.0
          %1694 = vmatprep.subr.mxu0 0.0
          %1695 = vmatpush2.msra.mxu0 0.0
          %1696 = vmatprep.subr.mxu0 0.0
          %1697 = vmatpush2.msra.mxu0 0.0
          %1698 = vmatprep.subr.mxu0 0.0
          %1699 = vmatpush2.msra.mxu0 0.0
          %1700 = vmatprep.subr.mxu0 0.0
          %1701 = vmatpush2.msra.mxu0 0.0
          %1702 = vmatprep.subr.mxu0 0.0
          %1703 = vmatpush2.msra.mxu0 0.0
          %1704 = vmatprep.subr.mxu0 0.0
          %1705 = vmatpush2.msra.mxu0 0.0
          %1706 = vmatprep.subr.mxu0 0.0
          %1707 = vmatpush2.msra.mxu0 0.0
          %1708 = vmatprep.subr.mxu0 0.0
          %1709 = vmatpush2.msra.mxu0 0.0
          %1710 = vmatprep.subr.mxu0 0.0
          %1711 = vmatpush2.msra.mxu0 0.0
          %1712 = vmatprep.subr.mxu0 0.0
          %1713 = vmatpush2.msra.mxu0 0.0
          %1714 = vmatprep.subr.mxu0 0.0
          %1715 = vmatpush2.msra.mxu0 0.0
          %1716 = vmatprep.subr.mxu0 0.0
          %1717 = vmatpush2.msra.mxu0 0.0
          %1718 = vmatprep.subr.mxu0 0.0
          %1719 = vmatpush2.msra.mxu0 0.0
          %1720 = vmatprep.subr.mxu0 0.0
          %1721 = vmatpush2.msra.mxu0 0.0
          %1722 = vmatprep.subr.mxu0 0.0
          %1723 = vmatpush2.msra.mxu0 0.0
          %1724 = vmatprep.mubr.f32.mxu0 0.0
          %1725 = vmatmul.mubr.f32.gmra.mxu0 %v1649
          %v1726 = vpop.f32.mrf.mxu0
          %v1727 = vadd.f32 0.0, %v1726
          %v1728 = vpop.f32.mrf.mxu0
          %1729 = vmatprep.mubr.f32.mxu0 0.0
          %1730 = vmatmul.mubr.f32.gmra.mxu0 %v1652
          %v1731 = vpop.f32.mrf.mxu0
          %v1732 = vadd.f32 0.0, %v1731
          %v1733 = vpop.f32.mrf.mxu0
          %1734 = vmatprep.mubr.f32.mxu0 0.0
          %1735 = vmatmul.mubr.f32.gmra.mxu0 %v1655
          %v1736 = vpop.f32.mrf.mxu0
          %v1737 = vadd.f32 0.0, %v1736
          %v1738 = vpop.f32.mrf.mxu0
          %1739 = vdwg.mxu0
          %v1740 = vadd.f32 %v1640, %v1727
          %v1741 = vadd.f32 %v1641, %v1732
          %v1742 = vadd.f32 %v1642, %v1737
          %v1744 = vlaneseq
          %v1745 = vshrl.u32 %v1744, 7
          %v1746 = vsub.s32 0, %v1745
          %v1747 = vrot.slane %v833, %v1746
          %v1749 = vadd.f32 %v1740, %v1747
          %v1750 = vadd.f32 %v1741, %v1747
          %v1751 = vadd.f32 %v1742, %v1747
          %v1752 = vmax.f32 %v1749, 0.0
          %v1753 = vmax.f32 %v1750, 0.0
          %v1754 = vmax.f32 %v1751, 0.0
          %s1755 = smul.u32 %s835, 24
          %s1756 = scalar_lea.vmem [#allocation3], %s1755
          %1757 = vst.msk [vmem:[%s1756] sm:$0xff] %vm851, %v1752
          %1758 = vst.msk [vmem:[%s1756 + $0x8] sm:$0xff] %vm851, %v1753
          %1759 = vst.msk [vmem:[%s1756 + $0x10] sm:$0xff] %vm851, %v1754
        $region84: #{forward.1} parent=71 // loop_footer
          %s839 = sadd.s32 1, %s835
        $region85: #{forward.1} parent=71 // loop_footer_branch
          %834 = sbr.rel target = $region81
        $region86: #{forward.1} parent=71 // loop_exit
          _
        loop: start=0, step=1, limit=12
        $region87: #{forward.1} parent=71 // loop_pre_header
          _
        $region88: #{forward.1} parent=71 // loop_header
          %s1761 = sphi 0, %s1765
          %p1762 = scmp.ge.s32.totalorder %s1761, 12
        $region89: #{forward.1} parent=71 // loop_header_branch
          %1764 = sbr.rel (%p1762) target = $region93
        $region90: #{forward.1} parent=71 // loop_body
          %s1766 = smul.u32 %s1761, 2
          %s1767 = smul.u32 %s1766, 24
          %s1768 = scalar_lea.vmem [#allocation3], %s1767
          %v1769 = vld [vmem:[%s1768] sm:$0xff]
          %v1770 = vld [vmem:[%s1768 + $0x8] sm:$0xff]
          %v1771 = vld [vmem:[%s1768 + $0x10] sm:$0xff]
          %s1772 = sadd.s32 %s1766, 1
          %s1773 = smul.u32 %s1772, 24
          %s1774 = scalar_lea.vmem [#allocation3], %s1773
          %v1775 = vld [vmem:[%s1774] sm:$0xff]
          %v1776 = vld [vmem:[%s1774 + $0x8] sm:$0xff]
          %v1777 = vld [vmem:[%s1774 + $0x10] sm:$0xff]
          %v1778 = vmax.f32 %v1769, %v1775
          %v1779 = vmax.f32 %v1770, %v1776
          %v1780 = vmax.f32 %v1771, %v1777
          %v1782 = vrot.slane %v1778, 1
          %v1784 = vmax.f32 %v1778, %v1782
          %s1785 = smul.u32 %s1761, 16
          %s1786 = scalar_lea.vmem [#allocation4], %s1785
          %vm1787 = vcmask 40960
          %1788 = vst.msk [vmem:[%s1786] sm:$0x1] %vm1787, %v1784
          %vm1789 = vcmask 43010
          %1790 = vst.msk [vmem:[%s1786 - $0x1] sm:$0x4] %vm1789, %v1784
          %vm1791 = vcmask 45060
          %1792 = vst.msk [vmem:[%s1786 - $0x2] sm:$0x10] %vm1791, %v1784
          %vm1793 = vcmask 47110
          %1794 = vst.msk [vmem:[%s1786 - $0x3] sm:$0x40] %vm1793, %v1784
          %v1796 = vrot.slane %v1779, 1
          %v1798 = vmax.f32 %v1779, %v1796
          %1799 = vst.msk [vmem:[%s1786 + $0x4] sm:$0x1] %vm1787, %v1798
          %1800 = vst.msk [vmem:[%s1786 + $0x3] sm:$0x4] %vm1789, %v1798
          %1801 = vst.msk [vmem:[%s1786 + $0x2] sm:$0x10] %vm1791, %v1798
          %1802 = vst.msk [vmem:[%s1786 + $0x1] sm:$0x40] %vm1793, %v1798
          %v1804 = vrot.slane %v1780, 1
          %v1806 = vmax.f32 %v1780, %v1804
          %1807 = vst.msk [vmem:[%s1786 + $0x8] sm:$0x1] %vm1787, %v1806
          %1808 = vst.msk [vmem:[%s1786 + $0x7] sm:$0x4] %vm1789, %v1806
          %1809 = vst.msk [vmem:[%s1786 + $0x6] sm:$0x10] %vm1791, %v1806
          %1810 = vst.msk [vmem:[%s1786 + $0x5] sm:$0x40] %vm1793, %v1806
        $region91: #{forward.1} parent=71 // loop_footer
          %s1765 = sadd.s32 1, %s1761
        $region92: #{forward.1} parent=71 // loop_footer_branch
          %1760 = sbr.rel target = $region88
        $region93: #{forward.1} parent=71 // loop_exit
          _
        %v1811 = vld [vmem:[%s6] sm:$0x1]
        loop: start=0, step=1, limit=10
        $region94: #{forward.1} parent=71 // loop_pre_header
          _
        $region95: #{forward.1} parent=71 // loop_header
          %s1813 = sphi 0, %s1817
          %p1814 = scmp.ge.s32.totalorder %s1813, 10
        $region96: #{forward.1} parent=71 // loop_header_branch
          %1816 = sbr.rel (%p1814) target = $region100
        $region97: #{forward.1} parent=71 // loop_body
          %s1818 = smul.u32 %s1813, 16
          %s1819 = scalar_lea.vmem [#allocation4], %s1818
          %v1820 = vld [vmem:[%s1819] sm:$0xff]
          %v1821 = vld [vmem:[%s1819 + $0x8] sm:$0x3]
          %v1822 = vld [vmem:[%s5] sm:$0x3f]
          %v1823 = vld [vmem:[%s1819 + $0x1] sm:$0xff]
          %v1824 = vld [vmem:[%s1819 + $0x9] sm:$0x3]
          %s1825 = scalar_lea.vmem %s5, 8
          %v1826 = vld [vmem:[%s1825] sm:$0x3f]
          %vm1827 = vcmask 48128
          %v1829 = vsel %vm1827, %v1823, 0
          %v1832 = vsel %vm1827, %v1824, 0
          %vm1834 = vcmask 1045504
          %v1836 = vsel %vm1834, %v1826, 0
          %1838 = vmatprep.subr.mxu0 0.0
          %1839 = vmatpush1.msra.mxu0 0.0
          %1840 = vmatprep.subr.mxu0 0.0
          %1841 = vmatpush1.msra.mxu0 0.0
          %1842 = vmatprep.subr.mxu0 0.0
          %1843 = vmatpush1.msra.mxu0 0.0
          %1844 = vmatprep.subr.mxu0 0.0
          %1845 = vmatpush1.msra.mxu0 0.0
          %1846 = vmatprep.subr.mxu0 0.0
          %1847 = vmatpush1.msra.mxu0 0.0
          %1848 = vmatprep.subr.mxu0 0.0
          %1849 = vmatpush1.msra.mxu0 0.0
          %1850 = vmatprep.subr.mxu0 0.0
          %1851 = vmatpush1.msra.mxu0 0.0
          %1852 = vmatprep.subr.mxu0 0.0
          %1853 = vmatpush1.msra.mxu0 0.0
          %1854 = vmatprep.subr.mxu0 0.0
          %1855 = vmatpush1.msra.mxu0 0.0
          %1856 = vmatprep.subr.mxu0 0.0
          %1857 = vmatpush1.msra.mxu0 0.0
          %1858 = vmatprep.subr.mxu0 0.0
          %1859 = vmatpush1.msra.mxu0 0.0
          %1860 = vmatprep.subr.mxu0 0.0
          %1861 = vmatpush1.msra.mxu0 0.0
          %1862 = vmatprep.subr.mxu0 0.0
          %1863 = vmatpush1.msra.mxu0 0.0
          %1864 = vmatprep.subr.mxu0 0.0
          %1865 = vmatpush1.msra.mxu0 0.0
          %1866 = vmatprep.subr.mxu0 0.0
          %1867 = vmatpush1.msra.mxu0 0.0
          %1868 = vmatprep.subr.mxu0 0.0
          %1869 = vmatpush1.msra.mxu0 %v1836
          %1870 = vmatprep.subr.mxu0 0.0
          %1871 = vmatpush2.msra.mxu0 0.0
          %1872 = vmatprep.subr.mxu0 0.0
          %1873 = vmatpush2.msra.mxu0 0.0
          %1874 = vmatprep.subr.mxu0 0.0
          %1875 = vmatpush2.msra.mxu0 0.0
          %1876 = vmatprep.subr.mxu0 0.0
          %1877 = vmatpush2.msra.mxu0 0.0
          %1878 = vmatprep.subr.mxu0 0.0
          %1879 = vmatpush2.msra.mxu0 0.0
          %1880 = vmatprep.subr.mxu0 0.0
          %1881 = vmatpush2.msra.mxu0 0.0
          %1882 = vmatprep.subr.mxu0 0.0
          %1883 = vmatpush2.msra.mxu0 0.0
          %1884 = vmatprep.subr.mxu0 0.0
          %1885 = vmatpush2.msra.mxu0 0.0
          %1886 = vmatprep.subr.mxu0 0.0
          %1887 = vmatpush2.msra.mxu0 0.0
          %1888 = vmatprep.subr.mxu0 0.0
          %1889 = vmatpush2.msra.mxu0 0.0
          %1890 = vmatprep.subr.mxu0 0.0
          %1891 = vmatpush2.msra.mxu0 0.0
          %1892 = vmatprep.subr.mxu0 0.0
          %1893 = vmatpush2.msra.mxu0 0.0
          %1894 = vmatprep.subr.mxu0 0.0
          %1895 = vmatpush2.msra.mxu0 0.0
          %1896 = vmatprep.subr.mxu0 0.0
          %1897 = vmatpush2.msra.mxu0 0.0
          %1898 = vmatprep.subr.mxu0 0.0
          %1899 = vmatpush2.msra.mxu0 0.0
          %1900 = vmatprep.subr.mxu0 0.0
          %1901 = vmatpush2.msra.mxu0 0.0
          %1902 = vmatprep.mubr.f32.mxu0 0.0
          %1903 = vmatmul.mubr.f32.gmra.mxu0 %v1829
          %v1904 = vpop.f32.mrf.mxu0
          %v1905 = vadd.f32 0.0, %v1904
          %v1906 = vpop.f32.mrf.mxu0
          %1907 = vmatprep.mubr.f32.mxu0 0.0
          %1908 = vmatmul.mubr.f32.gmra.mxu0 %v1832
          %v1909 = vpop.f32.mrf.mxu0
          %v1910 = vadd.f32 0.0, %v1909
          %v1911 = vpop.f32.mrf.mxu0
          %1912 = vdwg.mxu0
          %v1914 = vsel %vm1827, %v1820, 0
          %v1917 = vsel %vm1827, %v1821, 0
          %v1920 = vsel %vm1834, %v1822, 0
          %1922 = vmatprep.subr.mxu0 0.0
          %1923 = vmatpush1.msra.mxu0 0.0
          %1924 = vmatprep.subr.mxu0 0.0
          %1925 = vmatpush1.msra.mxu0 0.0
          %1926 = vmatprep.subr.mxu0 0.0
          %1927 = vmatpush1.msra.mxu0 0.0
          %1928 = vmatprep.subr.mxu0 0.0
          %1929 = vmatpush1.msra.mxu0 0.0
          %1930 = vmatprep.subr.mxu0 0.0
          %1931 = vmatpush1.msra.mxu0 0.0
          %1932 = vmatprep.subr.mxu0 0.0
          %1933 = vmatpush1.msra.mxu0 0.0
          %1934 = vmatprep.subr.mxu0 0.0
          %1935 = vmatpush1.msra.mxu0 0.0
          %1936 = vmatprep.subr.mxu0 0.0
          %1937 = vmatpush1.msra.mxu0 0.0
          %1938 = vmatprep.subr.mxu0 0.0
          %1939 = vmatpush1.msra.mxu0 0.0
          %1940 = vmatprep.subr.mxu0 0.0
          %1941 = vmatpush1.msra.mxu0 0.0
          %1942 = vmatprep.subr.mxu0 0.0
          %1943 = vmatpush1.msra.mxu0 0.0
          %1944 = vmatprep.subr.mxu0 0.0
          %1945 = vmatpush1.msra.mxu0 0.0
          %1946 = vmatprep.subr.mxu0 0.0
          %1947 = vmatpush1.msra.mxu0 0.0
          %1948 = vmatprep.subr.mxu0 0.0
          %1949 = vmatpush1.msra.mxu0 0.0
          %1950 = vmatprep.subr.mxu0 0.0
          %1951 = vmatpush1.msra.mxu0 0.0
          %1952 = vmatprep.subr.mxu0 0.0
          %1953 = vmatpush1.msra.mxu0 %v1920
          %1954 = vmatprep.subr.mxu0 0.0
          %1955 = vmatpush2.msra.mxu0 0.0
          %1956 = vmatprep.subr.mxu0 0.0
          %1957 = vmatpush2.msra.mxu0 0.0
          %1958 = vmatprep.subr.mxu0 0.0
          %1959 = vmatpush2.msra.mxu0 0.0
          %1960 = vmatprep.subr.mxu0 0.0
          %1961 = vmatpush2.msra.mxu0 0.0
          %1962 = vmatprep.subr.mxu0 0.0
          %1963 = vmatpush2.msra.mxu0 0.0
          %1964 = vmatprep.subr.mxu0 0.0
          %1965 = vmatpush2.msra.mxu0 0.0
          %1966 = vmatprep.subr.mxu0 0.0
          %1967 = vmatpush2.msra.mxu0 0.0
          %1968 = vmatprep.subr.mxu0 0.0
          %1969 = vmatpush2.msra.mxu0 0.0
          %1970 = vmatprep.subr.mxu0 0.0
          %1971 = vmatpush2.msra.mxu0 0.0
          %1972 = vmatprep.subr.mxu0 0.0
          %1973 = vmatpush2.msra.mxu0 0.0
          %1974 = vmatprep.subr.mxu0 0.0
          %1975 = vmatpush2.msra.mxu0 0.0
          %1976 = vmatprep.subr.mxu0 0.0
          %1977 = vmatpush2.msra.mxu0 0.0
          %1978 = vmatprep.subr.mxu0 0.0
          %1979 = vmatpush2.msra.mxu0 0.0
          %1980 = vmatprep.subr.mxu0 0.0
          %1981 = vmatpush2.msra.mxu0 0.0
          %1982 = vmatprep.subr.mxu0 0.0
          %1983 = vmatpush2.msra.mxu0 0.0
          %1984 = vmatprep.subr.mxu0 0.0
          %1985 = vmatpush2.msra.mxu0 0.0
          %1986 = vmatprep.mubr.f32.mxu0 0.0
          %1987 = vmatmul.mubr.f32.gmra.mxu0 %v1914
          %v1988 = vpop.f32.mrf.mxu0
          %v1989 = vadd.f32 %v1905, %v1988
          %v1990 = vpop.f32.mrf.mxu0
          %1991 = vmatprep.mubr.f32.mxu0 0.0
          %1992 = vmatmul.mubr.f32.gmra.mxu0 %v1917
          %v1993 = vpop.f32.mrf.mxu0
          %v1994 = vadd.f32 %v1910, %v1993
          %v1995 = vpop.f32.mrf.mxu0
          %1996 = vdwg.mxu0
          %v1997 = vld [vmem:[%s1819 + $0x2] sm:$0xff]
          %v1998 = vld [vmem:[%s1819 + $0xa] sm:$0x3]
          %s1999 = scalar_lea.vmem %s5, 16
          %v2000 = vld [vmem:[%s1999] sm:$0x3f]
          %v2002 = vsel %vm1827, %v1997, 0
          %v2005 = vsel %vm1827, %v1998, 0
          %v2008 = vsel %vm1834, %v2000, 0
          %2010 = vmatprep.subr.mxu0 0.0
          %2011 = vmatpush1.msra.mxu0 0.0
          %2012 = vmatprep.subr.mxu0 0.0
          %2013 = vmatpush1.msra.mxu0 0.0
          %2014 = vmatprep.subr.mxu0 0.0
          %2015 = vmatpush1.msra.mxu0 0.0
          %2016 = vmatprep.subr.mxu0 0.0
          %2017 = vmatpush1.msra.mxu0 0.0
          %2018 = vmatprep.subr.mxu0 0.0
          %2019 = vmatpush1.msra.mxu0 0.0
          %2020 = vmatprep.subr.mxu0 0.0
          %2021 = vmatpush1.msra.mxu0 0.0
          %2022 = vmatprep.subr.mxu0 0.0
          %2023 = vmatpush1.msra.mxu0 0.0
          %2024 = vmatprep.subr.mxu0 0.0
          %2025 = vmatpush1.msra.mxu0 0.0
          %2026 = vmatprep.subr.mxu0 0.0
          %2027 = vmatpush1.msra.mxu0 0.0
          %2028 = vmatprep.subr.mxu0 0.0
          %2029 = vmatpush1.msra.mxu0 0.0
          %2030 = vmatprep.subr.mxu0 0.0
          %2031 = vmatpush1.msra.mxu0 0.0
          %2032 = vmatprep.subr.mxu0 0.0
          %2033 = vmatpush1.msra.mxu0 0.0
          %2034 = vmatprep.subr.mxu0 0.0
          %2035 = vmatpush1.msra.mxu0 0.0
          %2036 = vmatprep.subr.mxu0 0.0
          %2037 = vmatpush1.msra.mxu0 0.0
          %2038 = vmatprep.subr.mxu0 0.0
          %2039 = vmatpush1.msra.mxu0 0.0
          %2040 = vmatprep.subr.mxu0 0.0
          %2041 = vmatpush1.msra.mxu0 %v2008
          %2042 = vmatprep.subr.mxu0 0.0
          %2043 = vmatpush2.msra.mxu0 0.0
          %2044 = vmatprep.subr.mxu0 0.0
          %2045 = vmatpush2.msra.mxu0 0.0
          %2046 = vmatprep.subr.mxu0 0.0
          %2047 = vmatpush2.msra.mxu0 0.0
          %2048 = vmatprep.subr.mxu0 0.0
          %2049 = vmatpush2.msra.mxu0 0.0
          %2050 = vmatprep.subr.mxu0 0.0
          %2051 = vmatpush2.msra.mxu0 0.0
          %2052 = vmatprep.subr.mxu0 0.0
          %2053 = vmatpush2.msra.mxu0 0.0
          %2054 = vmatprep.subr.mxu0 0.0
          %2055 = vmatpush2.msra.mxu0 0.0
          %2056 = vmatprep.subr.mxu0 0.0
          %2057 = vmatpush2.msra.mxu0 0.0
          %2058 = vmatprep.subr.mxu0 0.0
          %2059 = vmatpush2.msra.mxu0 0.0
          %2060 = vmatprep.subr.mxu0 0.0
          %2061 = vmatpush2.msra.mxu0 0.0
          %2062 = vmatprep.subr.mxu0 0.0
          %2063 = vmatpush2.msra.mxu0 0.0
          %2064 = vmatprep.subr.mxu0 0.0
          %2065 = vmatpush2.msra.mxu0 0.0
          %2066 = vmatprep.subr.mxu0 0.0
          %2067 = vmatpush2.msra.mxu0 0.0
          %2068 = vmatprep.subr.mxu0 0.0
          %2069 = vmatpush2.msra.mxu0 0.0
          %2070 = vmatprep.subr.mxu0 0.0
          %2071 = vmatpush2.msra.mxu0 0.0
          %2072 = vmatprep.subr.mxu0 0.0
          %2073 = vmatpush2.msra.mxu0 0.0
          %2074 = vmatprep.mubr.f32.mxu0 0.0
          %2075 = vmatmul.mubr.f32.gmra.mxu0 %v2002
          %v2076 = vpop.f32.mrf.mxu0
          %v2077 = vadd.f32 0.0, %v2076
          %v2078 = vpop.f32.mrf.mxu0
          %2079 = vmatprep.mubr.f32.mxu0 0.0
          %2080 = vmatmul.mubr.f32.gmra.mxu0 %v2005
          %v2081 = vpop.f32.mrf.mxu0
          %v2082 = vadd.f32 0.0, %v2081
          %v2083 = vpop.f32.mrf.mxu0
          %2084 = vdwg.mxu0
          %v2085 = vadd.f32 %v1989, %v2077
          %v2086 = vadd.f32 %v1994, %v2082
          %s2087 = sadd.s32 %s1813, 1
          %s2088 = smul.u32 %s2087, 16
          %s2089 = scalar_lea.vmem [#allocation4], %s2088
          %v2090 = vld [vmem:[%s2089] sm:$0xff]
          %v2091 = vld [vmem:[%s2089 + $0x8] sm:$0x3]
          %s2092 = scalar_lea.vmem %s5, 24
          %v2093 = vld [vmem:[%s2092] sm:$0x3f]
          %v2095 = vsel %vm1827, %v2090, 0
          %v2098 = vsel %vm1827, %v2091, 0
          %v2101 = vsel %vm1834, %v2093, 0
          %2103 = vmatprep.subr.mxu0 0.0
          %2104 = vmatpush1.msra.mxu0 0.0
          %2105 = vmatprep.subr.mxu0 0.0
          %2106 = vmatpush1.msra.mxu0 0.0
          %2107 = vmatprep.subr.mxu0 0.0
          %2108 = vmatpush1.msra.mxu0 0.0
          %2109 = vmatprep.subr.mxu0 0.0
          %2110 = vmatpush1.msra.mxu0 0.0
          %2111 = vmatprep.subr.mxu0 0.0
          %2112 = vmatpush1.msra.mxu0 0.0
          %2113 = vmatprep.subr.mxu0 0.0
          %2114 = vmatpush1.msra.mxu0 0.0
          %2115 = vmatprep.subr.mxu0 0.0
          %2116 = vmatpush1.msra.mxu0 0.0
          %2117 = vmatprep.subr.mxu0 0.0
          %2118 = vmatpush1.msra.mxu0 0.0
          %2119 = vmatprep.subr.mxu0 0.0
          %2120 = vmatpush1.msra.mxu0 0.0
          %2121 = vmatprep.subr.mxu0 0.0
          %2122 = vmatpush1.msra.mxu0 0.0
          %2123 = vmatprep.subr.mxu0 0.0
          %2124 = vmatpush1.msra.mxu0 0.0
          %2125 = vmatprep.subr.mxu0 0.0
          %2126 = vmatpush1.msra.mxu0 0.0
          %2127 = vmatprep.subr.mxu0 0.0
          %2128 = vmatpush1.msra.mxu0 0.0
          %2129 = vmatprep.subr.mxu0 0.0
          %2130 = vmatpush1.msra.mxu0 0.0
          %2131 = vmatprep.subr.mxu0 0.0
          %2132 = vmatpush1.msra.mxu0 0.0
          %2133 = vmatprep.subr.mxu0 0.0
          %2134 = vmatpush1.msra.mxu0 %v2101
          %2135 = vmatprep.subr.mxu0 0.0
          %2136 = vmatpush2.msra.mxu0 0.0
          %2137 = vmatprep.subr.mxu0 0.0
          %2138 = vmatpush2.msra.mxu0 0.0
          %2139 = vmatprep.subr.mxu0 0.0
          %2140 = vmatpush2.msra.mxu0 0.0
          %2141 = vmatprep.subr.mxu0 0.0
          %2142 = vmatpush2.msra.mxu0 0.0
          %2143 = vmatprep.subr.mxu0 0.0
          %2144 = vmatpush2.msra.mxu0 0.0
          %2145 = vmatprep.subr.mxu0 0.0
          %2146 = vmatpush2.msra.mxu0 0.0
          %2147 = vmatprep.subr.mxu0 0.0
          %2148 = vmatpush2.msra.mxu0 0.0
          %2149 = vmatprep.subr.mxu0 0.0
          %2150 = vmatpush2.msra.mxu0 0.0
          %2151 = vmatprep.subr.mxu0 0.0
          %2152 = vmatpush2.msra.mxu0 0.0
          %2153 = vmatprep.subr.mxu0 0.0
          %2154 = vmatpush2.msra.mxu0 0.0
          %2155 = vmatprep.subr.mxu0 0.0
          %2156 = vmatpush2.msra.mxu0 0.0
          %2157 = vmatprep.subr.mxu0 0.0
          %2158 = vmatpush2.msra.mxu0 0.0
          %2159 = vmatprep.subr.mxu0 0.0
          %2160 = vmatpush2.msra.mxu0 0.0
          %2161 = vmatprep.subr.mxu0 0.0
          %2162 = vmatpush2.msra.mxu0 0.0
          %2163 = vmatprep.subr.mxu0 0.0
          %2164 = vmatpush2.msra.mxu0 0.0
          %2165 = vmatprep.subr.mxu0 0.0
          %2166 = vmatpush2.msra.mxu0 0.0
          %2167 = vmatprep.mubr.f32.mxu0 0.0
          %2168 = vmatmul.mubr.f32.gmra.mxu0 %v2095
          %v2169 = vpop.f32.mrf.mxu0
          %v2170 = vadd.f32 0.0, %v2169
          %v2171 = vpop.f32.mrf.mxu0
          %2172 = vmatprep.mubr.f32.mxu0 0.0
          %2173 = vmatmul.mubr.f32.gmra.mxu0 %v2098
          %v2174 = vpop.f32.mrf.mxu0
          %v2175 = vadd.f32 0.0, %v2174
          %v2176 = vpop.f32.mrf.mxu0
          %2177 = vdwg.mxu0
          %v2178 = vadd.f32 %v2085, %v2170
          %v2179 = vadd.f32 %v2086, %v2175
          %v2180 = vld [vmem:[%s2089 + $0x1] sm:$0xff]
          %v2181 = vld [vmem:[%s2089 + $0x9] sm:$0x3]
          %s2182 = scalar_lea.vmem %s5, 32
          %v2183 = vld [vmem:[%s2182] sm:$0x3f]
          %v2185 = vsel %vm1827, %v2180, 0
          %v2188 = vsel %vm1827, %v2181, 0
          %v2191 = vsel %vm1834, %v2183, 0
          %2193 = vmatprep.subr.mxu0 0.0
          %2194 = vmatpush1.msra.mxu0 0.0
          %2195 = vmatprep.subr.mxu0 0.0
          %2196 = vmatpush1.msra.mxu0 0.0
          %2197 = vmatprep.subr.mxu0 0.0
          %2198 = vmatpush1.msra.mxu0 0.0
          %2199 = vmatprep.subr.mxu0 0.0
          %2200 = vmatpush1.msra.mxu0 0.0
          %2201 = vmatprep.subr.mxu0 0.0
          %2202 = vmatpush1.msra.mxu0 0.0
          %2203 = vmatprep.subr.mxu0 0.0
          %2204 = vmatpush1.msra.mxu0 0.0
          %2205 = vmatprep.subr.mxu0 0.0
          %2206 = vmatpush1.msra.mxu0 0.0
          %2207 = vmatprep.subr.mxu0 0.0
          %2208 = vmatpush1.msra.mxu0 0.0
          %2209 = vmatprep.subr.mxu0 0.0
          %2210 = vmatpush1.msra.mxu0 0.0
          %2211 = vmatprep.subr.mxu0 0.0
          %2212 = vmatpush1.msra.mxu0 0.0
          %2213 = vmatprep.subr.mxu0 0.0
          %2214 = vmatpush1.msra.mxu0 0.0
          %2215 = vmatprep.subr.mxu0 0.0
          %2216 = vmatpush1.msra.mxu0 0.0
          %2217 = vmatprep.subr.mxu0 0.0
          %2218 = vmatpush1.msra.mxu0 0.0
          %2219 = vmatprep.subr.mxu0 0.0
          %2220 = vmatpush1.msra.mxu0 0.0
          %2221 = vmatprep.subr.mxu0 0.0
          %2222 = vmatpush1.msra.mxu0 0.0
          %2223 = vmatprep.subr.mxu0 0.0
          %2224 = vmatpush1.msra.mxu0 %v2191
          %2225 = vmatprep.subr.mxu0 0.0
          %2226 = vmatpush2.msra.mxu0 0.0
          %2227 = vmatprep.subr.mxu0 0.0
          %2228 = vmatpush2.msra.mxu0 0.0
          %2229 = vmatprep.subr.mxu0 0.0
          %2230 = vmatpush2.msra.mxu0 0.0
          %2231 = vmatprep.subr.mxu0 0.0
          %2232 = vmatpush2.msra.mxu0 0.0
          %2233 = vmatprep.subr.mxu0 0.0
          %2234 = vmatpush2.msra.mxu0 0.0
          %2235 = vmatprep.subr.mxu0 0.0
          %2236 = vmatpush2.msra.mxu0 0.0
          %2237 = vmatprep.subr.mxu0 0.0
          %2238 = vmatpush2.msra.mxu0 0.0
          %2239 = vmatprep.subr.mxu0 0.0
          %2240 = vmatpush2.msra.mxu0 0.0
          %2241 = vmatprep.subr.mxu0 0.0
          %2242 = vmatpush2.msra.mxu0 0.0
          %2243 = vmatprep.subr.mxu0 0.0
          %2244 = vmatpush2.msra.mxu0 0.0
          %2245 = vmatprep.subr.mxu0 0.0
          %2246 = vmatpush2.msra.mxu0 0.0
          %2247 = vmatprep.subr.mxu0 0.0
          %2248 = vmatpush2.msra.mxu0 0.0
          %2249 = vmatprep.subr.mxu0 0.0
          %2250 = vmatpush2.msra.mxu0 0.0
          %2251 = vmatprep.subr.mxu0 0.0
          %2252 = vmatpush2.msra.mxu0 0.0
          %2253 = vmatprep.subr.mxu0 0.0
          %2254 = vmatpush2.msra.mxu0 0.0
          %2255 = vmatprep.subr.mxu0 0.0
          %2256 = vmatpush2.msra.mxu0 0.0
          %2257 = vmatprep.mubr.f32.mxu0 0.0
          %2258 = vmatmul.mubr.f32.gmra.mxu0 %v2185
          %v2259 = vpop.f32.mrf.mxu0
          %v2260 = vadd.f32 0.0, %v2259
          %v2261 = vpop.f32.mrf.mxu0
          %2262 = vmatprep.mubr.f32.mxu0 0.0
          %2263 = vmatmul.mubr.f32.gmra.mxu0 %v2188
          %v2264 = vpop.f32.mrf.mxu0
          %v2265 = vadd.f32 0.0, %v2264
          %v2266 = vpop.f32.mrf.mxu0
          %2267 = vdwg.mxu0
          %v2268 = vadd.f32 %v2178, %v2260
          %v2269 = vadd.f32 %v2179, %v2265
          %v2270 = vld [vmem:[%s2089 + $0x2] sm:$0xff]
          %v2271 = vld [vmem:[%s2089 + $0xa] sm:$0x3]
          %s2272 = scalar_lea.vmem %s5, 40
          %v2273 = vld [vmem:[%s2272] sm:$0x3f]
          %v2275 = vsel %vm1827, %v2270, 0
          %v2278 = vsel %vm1827, %v2271, 0
          %v2281 = vsel %vm1834, %v2273, 0
          %2283 = vmatprep.subr.mxu0 0.0
          %2284 = vmatpush1.msra.mxu0 0.0
          %2285 = vmatprep.subr.mxu0 0.0
          %2286 = vmatpush1.msra.mxu0 0.0
          %2287 = vmatprep.subr.mxu0 0.0
          %2288 = vmatpush1.msra.mxu0 0.0
          %2289 = vmatprep.subr.mxu0 0.0
          %2290 = vmatpush1.msra.mxu0 0.0
          %2291 = vmatprep.subr.mxu0 0.0
          %2292 = vmatpush1.msra.mxu0 0.0
          %2293 = vmatprep.subr.mxu0 0.0
          %2294 = vmatpush1.msra.mxu0 0.0
          %2295 = vmatprep.subr.mxu0 0.0
          %2296 = vmatpush1.msra.mxu0 0.0
          %2297 = vmatprep.subr.mxu0 0.0
          %2298 = vmatpush1.msra.mxu0 0.0
          %2299 = vmatprep.subr.mxu0 0.0
          %2300 = vmatpush1.msra.mxu0 0.0
          %2301 = vmatprep.subr.mxu0 0.0
          %2302 = vmatpush1.msra.mxu0 0.0
          %2303 = vmatprep.subr.mxu0 0.0
          %2304 = vmatpush1.msra.mxu0 0.0
          %2305 = vmatprep.subr.mxu0 0.0
          %2306 = vmatpush1.msra.mxu0 0.0
          %2307 = vmatprep.subr.mxu0 0.0
          %2308 = vmatpush1.msra.mxu0 0.0
          %2309 = vmatprep.subr.mxu0 0.0
          %2310 = vmatpush1.msra.mxu0 0.0
          %2311 = vmatprep.subr.mxu0 0.0
          %2312 = vmatpush1.msra.mxu0 0.0
          %2313 = vmatprep.subr.mxu0 0.0
          %2314 = vmatpush1.msra.mxu0 %v2281
          %2315 = vmatprep.subr.mxu0 0.0
          %2316 = vmatpush2.msra.mxu0 0.0
          %2317 = vmatprep.subr.mxu0 0.0
          %2318 = vmatpush2.msra.mxu0 0.0
          %2319 = vmatprep.subr.mxu0 0.0
          %2320 = vmatpush2.msra.mxu0 0.0
          %2321 = vmatprep.subr.mxu0 0.0
          %2322 = vmatpush2.msra.mxu0 0.0
          %2323 = vmatprep.subr.mxu0 0.0
          %2324 = vmatpush2.msra.mxu0 0.0
          %2325 = vmatprep.subr.mxu0 0.0
          %2326 = vmatpush2.msra.mxu0 0.0
          %2327 = vmatprep.subr.mxu0 0.0
          %2328 = vmatpush2.msra.mxu0 0.0
          %2329 = vmatprep.subr.mxu0 0.0
          %2330 = vmatpush2.msra.mxu0 0.0
          %2331 = vmatprep.subr.mxu0 0.0
          %2332 = vmatpush2.msra.mxu0 0.0
          %2333 = vmatprep.subr.mxu0 0.0
          %2334 = vmatpush2.msra.mxu0 0.0
          %2335 = vmatprep.subr.mxu0 0.0
          %2336 = vmatpush2.msra.mxu0 0.0
          %2337 = vmatprep.subr.mxu0 0.0
          %2338 = vmatpush2.msra.mxu0 0.0
          %2339 = vmatprep.subr.mxu0 0.0
          %2340 = vmatpush2.msra.mxu0 0.0
          %2341 = vmatprep.subr.mxu0 0.0
          %2342 = vmatpush2.msra.mxu0 0.0
          %2343 = vmatprep.subr.mxu0 0.0
          %2344 = vmatpush2.msra.mxu0 0.0
          %2345 = vmatprep.subr.mxu0 0.0
          %2346 = vmatpush2.msra.mxu0 0.0
          %2347 = vmatprep.mubr.f32.mxu0 0.0
          %2348 = vmatmul.mubr.f32.gmra.mxu0 %v2275
          %v2349 = vpop.f32.mrf.mxu0
          %v2350 = vadd.f32 0.0, %v2349
          %v2351 = vpop.f32.mrf.mxu0
          %2352 = vmatprep.mubr.f32.mxu0 0.0
          %2353 = vmatmul.mubr.f32.gmra.mxu0 %v2278
          %v2354 = vpop.f32.mrf.mxu0
          %v2355 = vadd.f32 0.0, %v2354
          %v2356 = vpop.f32.mrf.mxu0
          %2357 = vdwg.mxu0
          %v2358 = vadd.f32 %v2268, %v2350
          %v2359 = vadd.f32 %v2269, %v2355
          %s2360 = sadd.s32 %s1813, 2
          %s2361 = smul.u32 %s2360, 16
          %s2362 = scalar_lea.vmem [#allocation4], %s2361
          %v2363 = vld [vmem:[%s2362] sm:$0xff]
          %v2364 = vld [vmem:[%s2362 + $0x8] sm:$0x3]
          %s2365 = scalar_lea.vmem %s5, 48
          %v2366 = vld [vmem:[%s2365] sm:$0x3f]
          %v2368 = vsel %vm1827, %v2363, 0
          %v2371 = vsel %vm1827, %v2364, 0
          %v2374 = vsel %vm1834, %v2366, 0
          %2376 = vmatprep.subr.mxu0 0.0
          %2377 = vmatpush1.msra.mxu0 0.0
          %2378 = vmatprep.subr.mxu0 0.0
          %2379 = vmatpush1.msra.mxu0 0.0
          %2380 = vmatprep.subr.mxu0 0.0
          %2381 = vmatpush1.msra.mxu0 0.0
          %2382 = vmatprep.subr.mxu0 0.0
          %2383 = vmatpush1.msra.mxu0 0.0
          %2384 = vmatprep.subr.mxu0 0.0
          %2385 = vmatpush1.msra.mxu0 0.0
          %2386 = vmatprep.subr.mxu0 0.0
          %2387 = vmatpush1.msra.mxu0 0.0
          %2388 = vmatprep.subr.mxu0 0.0
          %2389 = vmatpush1.msra.mxu0 0.0
          %2390 = vmatprep.subr.mxu0 0.0
          %2391 = vmatpush1.msra.mxu0 0.0
          %2392 = vmatprep.subr.mxu0 0.0
          %2393 = vmatpush1.msra.mxu0 0.0
          %2394 = vmatprep.subr.mxu0 0.0
          %2395 = vmatpush1.msra.mxu0 0.0
          %2396 = vmatprep.subr.mxu0 0.0
          %2397 = vmatpush1.msra.mxu0 0.0
          %2398 = vmatprep.subr.mxu0 0.0
          %2399 = vmatpush1.msra.mxu0 0.0
          %2400 = vmatprep.subr.mxu0 0.0
          %2401 = vmatpush1.msra.mxu0 0.0
          %2402 = vmatprep.subr.mxu0 0.0
          %2403 = vmatpush1.msra.mxu0 0.0
          %2404 = vmatprep.subr.mxu0 0.0
          %2405 = vmatpush1.msra.mxu0 0.0
          %2406 = vmatprep.subr.mxu0 0.0
          %2407 = vmatpush1.msra.mxu0 %v2374
          %2408 = vmatprep.subr.mxu0 0.0
          %2409 = vmatpush2.msra.mxu0 0.0
          %2410 = vmatprep.subr.mxu0 0.0
          %2411 = vmatpush2.msra.mxu0 0.0
          %2412 = vmatprep.subr.mxu0 0.0
          %2413 = vmatpush2.msra.mxu0 0.0
          %2414 = vmatprep.subr.mxu0 0.0
          %2415 = vmatpush2.msra.mxu0 0.0
          %2416 = vmatprep.subr.mxu0 0.0
          %2417 = vmatpush2.msra.mxu0 0.0
          %2418 = vmatprep.subr.mxu0 0.0
          %2419 = vmatpush2.msra.mxu0 0.0
          %2420 = vmatprep.subr.mxu0 0.0
          %2421 = vmatpush2.msra.mxu0 0.0
          %2422 = vmatprep.subr.mxu0 0.0
          %2423 = vmatpush2.msra.mxu0 0.0
          %2424 = vmatprep.subr.mxu0 0.0
          %2425 = vmatpush2.msra.mxu0 0.0
          %2426 = vmatprep.subr.mxu0 0.0
          %2427 = vmatpush2.msra.mxu0 0.0
          %2428 = vmatprep.subr.mxu0 0.0
          %2429 = vmatpush2.msra.mxu0 0.0
          %2430 = vmatprep.subr.mxu0 0.0
          %2431 = vmatpush2.msra.mxu0 0.0
          %2432 = vmatprep.subr.mxu0 0.0
          %2433 = vmatpush2.msra.mxu0 0.0
          %2434 = vmatprep.subr.mxu0 0.0
          %2435 = vmatpush2.msra.mxu0 0.0
          %2436 = vmatprep.subr.mxu0 0.0
          %2437 = vmatpush2.msra.mxu0 0.0
          %2438 = vmatprep.subr.mxu0 0.0
          %2439 = vmatpush2.msra.mxu0 0.0
          %2440 = vmatprep.mubr.f32.mxu0 0.0
          %2441 = vmatmul.mubr.f32.gmra.mxu0 %v2368
          %v2442 = vpop.f32.mrf.mxu0
          %v2443 = vadd.f32 0.0, %v2442
          %v2444 = vpop.f32.mrf.mxu0
          %2445 = vmatprep.mubr.f32.mxu0 0.0
          %2446 = vmatmul.mubr.f32.gmra.mxu0 %v2371
          %v2447 = vpop.f32.mrf.mxu0
          %v2448 = vadd.f32 0.0, %v2447
          %v2449 = vpop.f32.mrf.mxu0
          %2450 = vdwg.mxu0
          %v2451 = vadd.f32 %v2358, %v2443
          %v2452 = vadd.f32 %v2359, %v2448
          %v2453 = vld [vmem:[%s2362 + $0x1] sm:$0xff]
          %v2454 = vld [vmem:[%s2362 + $0x9] sm:$0x3]
          %s2455 = scalar_lea.vmem %s5, 56
          %v2456 = vld [vmem:[%s2455] sm:$0x3f]
          %v2458 = vsel %vm1827, %v2453, 0
          %v2461 = vsel %vm1827, %v2454, 0
          %v2464 = vsel %vm1834, %v2456, 0
          %2466 = vmatprep.subr.mxu0 0.0
          %2467 = vmatpush1.msra.mxu0 0.0
          %2468 = vmatprep.subr.mxu0 0.0
          %2469 = vmatpush1.msra.mxu0 0.0
          %2470 = vmatprep.subr.mxu0 0.0
          %2471 = vmatpush1.msra.mxu0 0.0
          %2472 = vmatprep.subr.mxu0 0.0
          %2473 = vmatpush1.msra.mxu0 0.0
          %2474 = vmatprep.subr.mxu0 0.0
          %2475 = vmatpush1.msra.mxu0 0.0
          %2476 = vmatprep.subr.mxu0 0.0
          %2477 = vmatpush1.msra.mxu0 0.0
          %2478 = vmatprep.subr.mxu0 0.0
          %2479 = vmatpush1.msra.mxu0 0.0
          %2480 = vmatprep.subr.mxu0 0.0
          %2481 = vmatpush1.msra.mxu0 0.0
          %2482 = vmatprep.subr.mxu0 0.0
          %2483 = vmatpush1.msra.mxu0 0.0
          %2484 = vmatprep.subr.mxu0 0.0
          %2485 = vmatpush1.msra.mxu0 0.0
          %2486 = vmatprep.subr.mxu0 0.0
          %2487 = vmatpush1.msra.mxu0 0.0
          %2488 = vmatprep.subr.mxu0 0.0
          %2489 = vmatpush1.msra.mxu0 0.0
          %2490 = vmatprep.subr.mxu0 0.0
          %2491 = vmatpush1.msra.mxu0 0.0
          %2492 = vmatprep.subr.mxu0 0.0
          %2493 = vmatpush1.msra.mxu0 0.0
          %2494 = vmatprep.subr.mxu0 0.0
          %2495 = vmatpush1.msra.mxu0 0.0
          %2496 = vmatprep.subr.mxu0 0.0
          %2497 = vmatpush1.msra.mxu0 %v2464
          %2498 = vmatprep.subr.mxu0 0.0
          %2499 = vmatpush2.msra.mxu0 0.0
          %2500 = vmatprep.subr.mxu0 0.0
          %2501 = vmatpush2.msra.mxu0 0.0
          %2502 = vmatprep.subr.mxu0 0.0
          %2503 = vmatpush2.msra.mxu0 0.0
          %2504 = vmatprep.subr.mxu0 0.0
          %2505 = vmatpush2.msra.mxu0 0.0
          %2506 = vmatprep.subr.mxu0 0.0
          %2507 = vmatpush2.msra.mxu0 0.0
          %2508 = vmatprep.subr.mxu0 0.0
          %2509 = vmatpush2.msra.mxu0 0.0
          %2510 = vmatprep.subr.mxu0 0.0
          %2511 = vmatpush2.msra.mxu0 0.0
          %2512 = vmatprep.subr.mxu0 0.0
          %2513 = vmatpush2.msra.mxu0 0.0
          %2514 = vmatprep.subr.mxu0 0.0
          %2515 = vmatpush2.msra.mxu0 0.0
          %2516 = vmatprep.subr.mxu0 0.0
          %2517 = vmatpush2.msra.mxu0 0.0
          %2518 = vmatprep.subr.mxu0 0.0
          %2519 = vmatpush2.msra.mxu0 0.0
          %2520 = vmatprep.subr.mxu0 0.0
          %2521 = vmatpush2.msra.mxu0 0.0
          %2522 = vmatprep.subr.mxu0 0.0
          %2523 = vmatpush2.msra.mxu0 0.0
          %2524 = vmatprep.subr.mxu0 0.0
          %2525 = vmatpush2.msra.mxu0 0.0
          %2526 = vmatprep.subr.mxu0 0.0
          %2527 = vmatpush2.msra.mxu0 0.0
          %2528 = vmatprep.subr.mxu0 0.0
          %2529 = vmatpush2.msra.mxu0 0.0
          %2530 = vmatprep.mubr.f32.mxu0 0.0
          %2531 = vmatmul.mubr.f32.gmra.mxu0 %v2458
          %v2532 = vpop.f32.mrf.mxu0
          %v2533 = vadd.f32 0.0, %v2532
          %v2534 = vpop.f32.mrf.mxu0
          %2535 = vmatprep.mubr.f32.mxu0 0.0
          %2536 = vmatmul.mubr.f32.gmra.mxu0 %v2461
          %v2537 = vpop.f32.mrf.mxu0
          %v2538 = vadd.f32 0.0, %v2537
          %v2539 = vpop.f32.mrf.mxu0
          %2540 = vdwg.mxu0
          %v2541 = vadd.f32 %v2451, %v2533
          %v2542 = vadd.f32 %v2452, %v2538
          %v2543 = vld [vmem:[%s2362 + $0x2] sm:$0xff]
          %v2544 = vld [vmem:[%s2362 + $0xa] sm:$0x3]
          %s2545 = scalar_lea.vmem %s5, 64
          %v2546 = vld [vmem:[%s2545] sm:$0x3f]
          %v2548 = vsel %vm1827, %v2543, 0
          %v2551 = vsel %vm1827, %v2544, 0
          %v2554 = vsel %vm1834, %v2546, 0
          %2556 = vmatprep.subr.mxu0 0.0
          %2557 = vmatpush1.msra.mxu0 0.0
          %2558 = vmatprep.subr.mxu0 0.0
          %2559 = vmatpush1.msra.mxu0 0.0
          %2560 = vmatprep.subr.mxu0 0.0
          %2561 = vmatpush1.msra.mxu0 0.0
          %2562 = vmatprep.subr.mxu0 0.0
          %2563 = vmatpush1.msra.mxu0 0.0
          %2564 = vmatprep.subr.mxu0 0.0
          %2565 = vmatpush1.msra.mxu0 0.0
          %2566 = vmatprep.subr.mxu0 0.0
          %2567 = vmatpush1.msra.mxu0 0.0
          %2568 = vmatprep.subr.mxu0 0.0
          %2569 = vmatpush1.msra.mxu0 0.0
          %2570 = vmatprep.subr.mxu0 0.0
          %2571 = vmatpush1.msra.mxu0 0.0
          %2572 = vmatprep.subr.mxu0 0.0
          %2573 = vmatpush1.msra.mxu0 0.0
          %2574 = vmatprep.subr.mxu0 0.0
          %2575 = vmatpush1.msra.mxu0 0.0
          %2576 = vmatprep.subr.mxu0 0.0
          %2577 = vmatpush1.msra.mxu0 0.0
          %2578 = vmatprep.subr.mxu0 0.0
          %2579 = vmatpush1.msra.mxu0 0.0
          %2580 = vmatprep.subr.mxu0 0.0
          %2581 = vmatpush1.msra.mxu0 0.0
          %2582 = vmatprep.subr.mxu0 0.0
          %2583 = vmatpush1.msra.mxu0 0.0
          %2584 = vmatprep.subr.mxu0 0.0
          %2585 = vmatpush1.msra.mxu0 0.0
          %2586 = vmatprep.subr.mxu0 0.0
          %2587 = vmatpush1.msra.mxu0 %v2554
          %2588 = vmatprep.subr.mxu0 0.0
          %2589 = vmatpush2.msra.mxu0 0.0
          %2590 = vmatprep.subr.mxu0 0.0
          %2591 = vmatpush2.msra.mxu0 0.0
          %2592 = vmatprep.subr.mxu0 0.0
          %2593 = vmatpush2.msra.mxu0 0.0
          %2594 = vmatprep.subr.mxu0 0.0
          %2595 = vmatpush2.msra.mxu0 0.0
          %2596 = vmatprep.subr.mxu0 0.0
          %2597 = vmatpush2.msra.mxu0 0.0
          %2598 = vmatprep.subr.mxu0 0.0
          %2599 = vmatpush2.msra.mxu0 0.0
          %2600 = vmatprep.subr.mxu0 0.0
          %2601 = vmatpush2.msra.mxu0 0.0
          %2602 = vmatprep.subr.mxu0 0.0
          %2603 = vmatpush2.msra.mxu0 0.0
          %2604 = vmatprep.subr.mxu0 0.0
          %2605 = vmatpush2.msra.mxu0 0.0
          %2606 = vmatprep.subr.mxu0 0.0
          %2607 = vmatpush2.msra.mxu0 0.0
          %2608 = vmatprep.subr.mxu0 0.0
          %2609 = vmatpush2.msra.mxu0 0.0
          %2610 = vmatprep.subr.mxu0 0.0
          %2611 = vmatpush2.msra.mxu0 0.0
          %2612 = vmatprep.subr.mxu0 0.0
          %2613 = vmatpush2.msra.mxu0 0.0
          %2614 = vmatprep.subr.mxu0 0.0
          %2615 = vmatpush2.msra.mxu0 0.0
          %2616 = vmatprep.subr.mxu0 0.0
          %2617 = vmatpush2.msra.mxu0 0.0
          %2618 = vmatprep.subr.mxu0 0.0
          %2619 = vmatpush2.msra.mxu0 0.0
          %2620 = vmatprep.mubr.f32.mxu0 0.0
          %2621 = vmatmul.mubr.f32.gmra.mxu0 %v2548
          %v2622 = vpop.f32.mrf.mxu0
          %v2623 = vadd.f32 0.0, %v2622
          %v2624 = vpop.f32.mrf.mxu0
          %2625 = vmatprep.mubr.f32.mxu0 0.0
          %2626 = vmatmul.mubr.f32.gmra.mxu0 %v2551
          %v2627 = vpop.f32.mrf.mxu0
          %v2628 = vadd.f32 0.0, %v2627
          %v2629 = vpop.f32.mrf.mxu0
          %2630 = vdwg.mxu0
          %v2631 = vadd.f32 %v2541, %v2623
          %v2632 = vadd.f32 %v2542, %v2628
          %v2634 = vlaneseq
          %v2635 = vshrl.u32 %v2634, 7
          %v2636 = vsub.s32 0, %v2635
          %v2637 = vrot.slane %v1811, %v2636
          %v2639 = vadd.f32 %v2631, %v2637
          %v2640 = vadd.f32 %v2632, %v2637
          %v2641 = vmax.f32 %v2639, 0.0
          %v2642 = vmax.f32 %v2640, 0.0
          %s2643 = scalar_lea.vmem [#allocation5], %s1818
          %vm2644 = vcmask 130048
          %2645 = vst.msk [vmem:[%s2643] sm:$0xff] %vm2644, %v2641
          %vm2646 = vcmask 123904
          %2647 = vst.msk [vmem:[%s2643 + $0x8] sm:$0x3] %vm2646, %v2642
        $region98: #{forward.1} parent=71 // loop_footer
          %s1817 = sadd.s32 1, %s1813
        $region99: #{forward.1} parent=71 // loop_footer_branch
          %1812 = sbr.rel target = $region95
        $region100: #{forward.1} parent=71 // loop_exit
          _
        loop: start=0, step=1, limit=5
        $region101: #{forward.1} parent=71 // loop_pre_header
          _
        $region102: #{forward.1} parent=71 // loop_header
          %s2649 = sphi 0, %s2653
          %p2650 = scmp.ge.s32.totalorder %s2649, 5
        $region103: #{forward.1} parent=71 // loop_header_branch
          %2652 = sbr.rel (%p2650) target = $region107
        $region104: #{forward.1} parent=71 // loop_body
          %s2654 = smul.u32 %s2649, 2
          %s2655 = smul.u32 %s2654, 16
          %s2656 = scalar_lea.vmem [#allocation5], %s2655
          %v2657 = vld [vmem:[%s2656] sm:$0xff]
          %v2658 = vld [vmem:[%s2656 + $0x8] sm:$0x3]
          %s2659 = sadd.s32 %s2654, 1
          %s2660 = smul.u32 %s2659, 16
          %s2661 = scalar_lea.vmem [#allocation5], %s2660
          %v2662 = vld [vmem:[%s2661] sm:$0xff]
          %v2663 = vld [vmem:[%s2661 + $0x8] sm:$0x3]
          %v2664 = vmax.f32 %v2657, %v2662
          %v2665 = vmax.f32 %v2658, %v2663
          %v2667 = vrot.slane %v2664, 1
          %v2669 = vmax.f32 %v2664, %v2667
          %s2670 = smul.u32 %s2649, 8
          %s2671 = scalar_lea.vmem [#allocation6], %s2670
          %vm2672 = vcmask 122880
          %2673 = vst.msk [vmem:[%s2671] sm:$0x1] %vm2672, %v2669
          %vm2674 = vcmask 124930
          %2675 = vst.msk [vmem:[%s2671 - $0x1] sm:$0x4] %vm2674, %v2669
          %vm2676 = vcmask 126980
          %2677 = vst.msk [vmem:[%s2671 - $0x2] sm:$0x10] %vm2676, %v2669
          %vm2678 = vcmask 129030
          %2679 = vst.msk [vmem:[%s2671 - $0x3] sm:$0x40] %vm2678, %v2669
          %v2681 = vrot.slane %v2665, 1
          %v2683 = vmax.f32 %v2665, %v2681
          %2684 = vst.msk [vmem:[%s2671 + $0x4] sm:$0x1] %vm2672, %v2683
        $region105: #{forward.1} parent=71 // loop_footer
          %s2653 = sadd.s32 1, %s2649
        $region106: #{forward.1} parent=71 // loop_footer_branch
          %2648 = sbr.rel target = $region102
        $region107: #{forward.1} parent=71 // loop_exit
          _
        %v2685 = vld [vmem:[#allocation6] sm:$0x1]
        %v2686 = vld [vmem:[%s7] sm:$0xff]
        %v2687 = vld [vmem:[%s7 + $0x8] sm:$0xff]
        %v2688 = vld [vmem:[#allocation6 + $0x1] sm:$0x1]
        %s2689 = scalar_lea.vmem %s7, 16
        %v2690 = vld [vmem:[%s2689] sm:$0xff]
        %v2691 = vld [vmem:[%s2689 + $0x8] sm:$0xff]
        %vm2692 = vcmask 130048
        %v2694 = vsel %vm2692, %v2688, 0
        %2696 = vmatprep.subr.mxu0 0.0
        %2697 = vmatpush1.msra.mxu0 0.0
        %2698 = vmatprep.subr.mxu0 0.0
        %2699 = vmatpush1.msra.mxu0 0.0
        %2700 = vmatprep.subr.mxu0 0.0
        %2701 = vmatpush1.msra.mxu0 0.0
        %2702 = vmatprep.subr.mxu0 0.0
        %2703 = vmatpush1.msra.mxu0 0.0
        %2704 = vmatprep.subr.mxu0 0.0
        %2705 = vmatpush1.msra.mxu0 0.0
        %2706 = vmatprep.subr.mxu0 0.0
        %2707 = vmatpush1.msra.mxu0 0.0
        %2708 = vmatprep.subr.mxu0 0.0
        %2709 = vmatpush1.msra.mxu0 0.0
        %2710 = vmatprep.subr.mxu0 0.0
        %2711 = vmatpush1.msra.mxu0 0.0
        %2712 = vmatprep.subr.mxu0 0.0
        %2713 = vmatpush1.msra.mxu0 0.0
        %2714 = vmatprep.subr.mxu0 0.0
        %2715 = vmatpush1.msra.mxu0 0.0
        %2716 = vmatprep.subr.mxu0 0.0
        %2717 = vmatpush1.msra.mxu0 0.0
        %2718 = vmatprep.subr.mxu0 0.0
        %2719 = vmatpush1.msra.mxu0 0.0
        %2720 = vmatprep.subr.mxu0 0.0
        %2721 = vmatpush1.msra.mxu0 0.0
        %2722 = vmatprep.subr.mxu0 0.0
        %2723 = vmatpush1.msra.mxu0 0.0
        %2724 = vmatprep.subr.mxu0 0.0
        %2725 = vmatpush1.msra.mxu0 %v2691
        %2726 = vmatprep.subr.mxu0 0.0
        %2727 = vmatpush1.msra.mxu0 %v2690
        %2728 = vmatprep.subr.mxu0 0.0
        %2729 = vmatpush2.msra.mxu0 0.0
        %2730 = vmatprep.subr.mxu0 0.0
        %2731 = vmatpush2.msra.mxu0 0.0
        %2732 = vmatprep.subr.mxu0 0.0
        %2733 = vmatpush2.msra.mxu0 0.0
        %2734 = vmatprep.subr.mxu0 0.0
        %2735 = vmatpush2.msra.mxu0 0.0
        %2736 = vmatprep.subr.mxu0 0.0
        %2737 = vmatpush2.msra.mxu0 0.0
        %2738 = vmatprep.subr.mxu0 0.0
        %2739 = vmatpush2.msra.mxu0 0.0
        %2740 = vmatprep.subr.mxu0 0.0
        %2741 = vmatpush2.msra.mxu0 0.0
        %2742 = vmatprep.subr.mxu0 0.0
        %2743 = vmatpush2.msra.mxu0 0.0
        %2744 = vmatprep.subr.mxu0 0.0
        %2745 = vmatpush2.msra.mxu0 0.0
        %2746 = vmatprep.subr.mxu0 0.0
        %2747 = vmatpush2.msra.mxu0 0.0
        %2748 = vmatprep.subr.mxu0 0.0
        %2749 = vmatpush2.msra.mxu0 0.0
        %2750 = vmatprep.subr.mxu0 0.0
        %2751 = vmatpush2.msra.mxu0 0.0
        %2752 = vmatprep.subr.mxu0 0.0
        %2753 = vmatpush2.msra.mxu0 0.0
        %2754 = vmatprep.subr.mxu0 0.0
        %2755 = vmatpush2.msra.mxu0 0.0
        %2756 = vmatprep.subr.mxu0 0.0
        %2757 = vmatpush2.msra.mxu0 0.0
        %2758 = vmatprep.subr.mxu0 0.0
        %2759 = vmatpush2.msra.mxu0 0.0
        %2760 = vmatprep.mubr.f32.mxu0 0.0
        %2761 = vmatmul.mubr.f32.gmra.mxu0 %v2694
        %v2762 = vpop.f32.mrf.mxu0
        %v2763 = vadd.f32 0.0, %v2762
        %v2764 = vpop.f32.mrf.mxu0
        %2765 = vdwg.mxu0
        %v2767 = vsel %vm2692, %v2685, 0
        %2769 = vmatprep.subr.mxu0 0.0
        %2770 = vmatpush1.msra.mxu0 0.0
        %2771 = vmatprep.subr.mxu0 0.0
        %2772 = vmatpush1.msra.mxu0 0.0
        %2773 = vmatprep.subr.mxu0 0.0
        %2774 = vmatpush1.msra.mxu0 0.0
        %2775 = vmatprep.subr.mxu0 0.0
        %2776 = vmatpush1.msra.mxu0 0.0
        %2777 = vmatprep.subr.mxu0 0.0
        %2778 = vmatpush1.msra.mxu0 0.0
        %2779 = vmatprep.subr.mxu0 0.0
        %2780 = vmatpush1.msra.mxu0 0.0
        %2781 = vmatprep.subr.mxu0 0.0
        %2782 = vmatpush1.msra.mxu0 0.0
        %2783 = vmatprep.subr.mxu0 0.0
        %2784 = vmatpush1.msra.mxu0 0.0
        %2785 = vmatprep.subr.mxu0 0.0
        %2786 = vmatpush1.msra.mxu0 0.0
        %2787 = vmatprep.subr.mxu0 0.0
        %2788 = vmatpush1.msra.mxu0 0.0
        %2789 = vmatprep.subr.mxu0 0.0
        %2790 = vmatpush1.msra.mxu0 0.0
        %2791 = vmatprep.subr.mxu0 0.0
        %2792 = vmatpush1.msra.mxu0 0.0
        %2793 = vmatprep.subr.mxu0 0.0
        %2794 = vmatpush1.msra.mxu0 0.0
        %2795 = vmatprep.subr.mxu0 0.0
        %2796 = vmatpush1.msra.mxu0 0.0
        %2797 = vmatprep.subr.mxu0 0.0
        %2798 = vmatpush1.msra.mxu0 %v2687
        %2799 = vmatprep.subr.mxu0 0.0
        %2800 = vmatpush1.msra.mxu0 %v2686
        %2801 = vmatprep.subr.mxu0 0.0
        %2802 = vmatpush2.msra.mxu0 0.0
        %2803 = vmatprep.subr.mxu0 0.0
        %2804 = vmatpush2.msra.mxu0 0.0
        %2805 = vmatprep.subr.mxu0 0.0
        %2806 = vmatpush2.msra.mxu0 0.0
        %2807 = vmatprep.subr.mxu0 0.0
        %2808 = vmatpush2.msra.mxu0 0.0
        %2809 = vmatprep.subr.mxu0 0.0
        %2810 = vmatpush2.msra.mxu0 0.0
        %2811 = vmatprep.subr.mxu0 0.0
        %2812 = vmatpush2.msra.mxu0 0.0
        %2813 = vmatprep.subr.mxu0 0.0
        %2814 = vmatpush2.msra.mxu0 0.0
        %2815 = vmatprep.subr.mxu0 0.0
        %2816 = vmatpush2.msra.mxu0 0.0
        %2817 = vmatprep.subr.mxu0 0.0
        %2818 = vmatpush2.msra.mxu0 0.0
        %2819 = vmatprep.subr.mxu0 0.0
        %2820 = vmatpush2.msra.mxu0 0.0
        %2821 = vmatprep.subr.mxu0 0.0
        %2822 = vmatpush2.msra.mxu0 0.0
        %2823 = vmatprep.subr.mxu0 0.0
        %2824 = vmatpush2.msra.mxu0 0.0
        %2825 = vmatprep.subr.mxu0 0.0
        %2826 = vmatpush2.msra.mxu0 0.0
        %2827 = vmatprep.subr.mxu0 0.0
        %2828 = vmatpush2.msra.mxu0 0.0
        %2829 = vmatprep.subr.mxu0 0.0
        %2830 = vmatpush2.msra.mxu0 0.0
        %2831 = vmatprep.subr.mxu0 0.0
        %2832 = vmatpush2.msra.mxu0 0.0
        %2833 = vmatprep.mubr.f32.mxu0 0.0
        %2834 = vmatmul.mubr.f32.gmra.mxu0 %v2767
        %v2835 = vpop.f32.mrf.mxu0
        %v2836 = vadd.f32 %v2763, %v2835
        %v2837 = vpop.f32.mrf.mxu0
        %2838 = vdwg.mxu0
        %v2839 = vld [vmem:[#allocation6 + $0x2] sm:$0x1]
        %s2840 = scalar_lea.vmem %s7, 32
        %v2841 = vld [vmem:[%s2840] sm:$0xff]
        %v2842 = vld [vmem:[%s2840 + $0x8] sm:$0xff]
        %v2844 = vsel %vm2692, %v2839, 0
        %2846 = vmatprep.subr.mxu0 0.0
        %2847 = vmatpush1.msra.mxu0 0.0
        %2848 = vmatprep.subr.mxu0 0.0
        %2849 = vmatpush1.msra.mxu0 0.0
        %2850 = vmatprep.subr.mxu0 0.0
        %2851 = vmatpush1.msra.mxu0 0.0
        %2852 = vmatprep.subr.mxu0 0.0
        %2853 = vmatpush1.msra.mxu0 0.0
        %2854 = vmatprep.subr.mxu0 0.0
        %2855 = vmatpush1.msra.mxu0 0.0
        %2856 = vmatprep.subr.mxu0 0.0
        %2857 = vmatpush1.msra.mxu0 0.0
        %2858 = vmatprep.subr.mxu0 0.0
        %2859 = vmatpush1.msra.mxu0 0.0
        %2860 = vmatprep.subr.mxu0 0.0
        %2861 = vmatpush1.msra.mxu0 0.0
        %2862 = vmatprep.subr.mxu0 0.0
        %2863 = vmatpush1.msra.mxu0 0.0
        %2864 = vmatprep.subr.mxu0 0.0
        %2865 = vmatpush1.msra.mxu0 0.0
        %2866 = vmatprep.subr.mxu0 0.0
        %2867 = vmatpush1.msra.mxu0 0.0
        %2868 = vmatprep.subr.mxu0 0.0
        %2869 = vmatpush1.msra.mxu0 0.0
        %2870 = vmatprep.subr.mxu0 0.0
        %2871 = vmatpush1.msra.mxu0 0.0
        %2872 = vmatprep.subr.mxu0 0.0
        %2873 = vmatpush1.msra.mxu0 0.0
        %2874 = vmatprep.subr.mxu0 0.0
        %2875 = vmatpush1.msra.mxu0 %v2842
        %2876 = vmatprep.subr.mxu0 0.0
        %2877 = vmatpush1.msra.mxu0 %v2841
        %2878 = vmatprep.subr.mxu0 0.0
        %2879 = vmatpush2.msra.mxu0 0.0
        %2880 = vmatprep.subr.mxu0 0.0
        %2881 = vmatpush2.msra.mxu0 0.0
        %2882 = vmatprep.subr.mxu0 0.0
        %2883 = vmatpush2.msra.mxu0 0.0
        %2884 = vmatprep.subr.mxu0 0.0
        %2885 = vmatpush2.msra.mxu0 0.0
        %2886 = vmatprep.subr.mxu0 0.0
        %2887 = vmatpush2.msra.mxu0 0.0
        %2888 = vmatprep.subr.mxu0 0.0
        %2889 = vmatpush2.msra.mxu0 0.0
        %2890 = vmatprep.subr.mxu0 0.0
        %2891 = vmatpush2.msra.mxu0 0.0
        %2892 = vmatprep.subr.mxu0 0.0
        %2893 = vmatpush2.msra.mxu0 0.0
        %2894 = vmatprep.subr.mxu0 0.0
        %2895 = vmatpush2.msra.mxu0 0.0
        %2896 = vmatprep.subr.mxu0 0.0
        %2897 = vmatpush2.msra.mxu0 0.0
        %2898 = vmatprep.subr.mxu0 0.0
        %2899 = vmatpush2.msra.mxu0 0.0
        %2900 = vmatprep.subr.mxu0 0.0
        %2901 = vmatpush2.msra.mxu0 0.0
        %2902 = vmatprep.subr.mxu0 0.0
        %2903 = vmatpush2.msra.mxu0 0.0
        %2904 = vmatprep.subr.mxu0 0.0
        %2905 = vmatpush2.msra.mxu0 0.0
        %2906 = vmatprep.subr.mxu0 0.0
        %2907 = vmatpush2.msra.mxu0 0.0
        %2908 = vmatprep.subr.mxu0 0.0
        %2909 = vmatpush2.msra.mxu0 0.0
        %2910 = vmatprep.mubr.f32.mxu0 0.0
        %2911 = vmatmul.mubr.f32.gmra.mxu0 %v2844
        %v2912 = vpop.f32.mrf.mxu0
        %v2913 = vadd.f32 0.0, %v2912
        %v2914 = vpop.f32.mrf.mxu0
        %2915 = vdwg.mxu0
        %v2916 = vadd.f32 %v2836, %v2913
        %v2917 = vld [vmem:[#allocation6 + $0x3] sm:$0x1]
        %s2918 = scalar_lea.vmem %s7, 48
        %v2919 = vld [vmem:[%s2918] sm:$0xff]
        %v2920 = vld [vmem:[%s2918 + $0x8] sm:$0xff]
        %v2922 = vsel %vm2692, %v2917, 0
        %2924 = vmatprep.subr.mxu0 0.0
        %2925 = vmatpush1.msra.mxu0 0.0
        %2926 = vmatprep.subr.mxu0 0.0
        %2927 = vmatpush1.msra.mxu0 0.0
        %2928 = vmatprep.subr.mxu0 0.0
        %2929 = vmatpush1.msra.mxu0 0.0
        %2930 = vmatprep.subr.mxu0 0.0
        %2931 = vmatpush1.msra.mxu0 0.0
        %2932 = vmatprep.subr.mxu0 0.0
        %2933 = vmatpush1.msra.mxu0 0.0
        %2934 = vmatprep.subr.mxu0 0.0
        %2935 = vmatpush1.msra.mxu0 0.0
        %2936 = vmatprep.subr.mxu0 0.0
        %2937 = vmatpush1.msra.mxu0 0.0
        %2938 = vmatprep.subr.mxu0 0.0
        %2939 = vmatpush1.msra.mxu0 0.0
        %2940 = vmatprep.subr.mxu0 0.0
        %2941 = vmatpush1.msra.mxu0 0.0
        %2942 = vmatprep.subr.mxu0 0.0
        %2943 = vmatpush1.msra.mxu0 0.0
        %2944 = vmatprep.subr.mxu0 0.0
        %2945 = vmatpush1.msra.mxu0 0.0
        %2946 = vmatprep.subr.mxu0 0.0
        %2947 = vmatpush1.msra.mxu0 0.0
        %2948 = vmatprep.subr.mxu0 0.0
        %2949 = vmatpush1.msra.mxu0 0.0
        %2950 = vmatprep.subr.mxu0 0.0
        %2951 = vmatpush1.msra.mxu0 0.0
        %2952 = vmatprep.subr.mxu0 0.0
        %2953 = vmatpush1.msra.mxu0 %v2920
        %2954 = vmatprep.subr.mxu0 0.0
        %2955 = vmatpush1.msra.mxu0 %v2919
        %2956 = vmatprep.subr.mxu0 0.0
        %2957 = vmatpush2.msra.mxu0 0.0
        %2958 = vmatprep.subr.mxu0 0.0
        %2959 = vmatpush2.msra.mxu0 0.0
        %2960 = vmatprep.subr.mxu0 0.0
        %2961 = vmatpush2.msra.mxu0 0.0
        %2962 = vmatprep.subr.mxu0 0.0
        %2963 = vmatpush2.msra.mxu0 0.0
        %2964 = vmatprep.subr.mxu0 0.0
        %2965 = vmatpush2.msra.mxu0 0.0
        %2966 = vmatprep.subr.mxu0 0.0
        %2967 = vmatpush2.msra.mxu0 0.0
        %2968 = vmatprep.subr.mxu0 0.0
        %2969 = vmatpush2.msra.mxu0 0.0
        %2970 = vmatprep.subr.mxu0 0.0
        %2971 = vmatpush2.msra.mxu0 0.0
        %2972 = vmatprep.subr.mxu0 0.0
        %2973 = vmatpush2.msra.mxu0 0.0
        %2974 = vmatprep.subr.mxu0 0.0
        %2975 = vmatpush2.msra.mxu0 0.0
        %2976 = vmatprep.subr.mxu0 0.0
        %2977 = vmatpush2.msra.mxu0 0.0
        %2978 = vmatprep.subr.mxu0 0.0
        %2979 = vmatpush2.msra.mxu0 0.0
        %2980 = vmatprep.subr.mxu0 0.0
        %2981 = vmatpush2.msra.mxu0 0.0
        %2982 = vmatprep.subr.mxu0 0.0
        %2983 = vmatpush2.msra.mxu0 0.0
        %2984 = vmatprep.subr.mxu0 0.0
        %2985 = vmatpush2.msra.mxu0 0.0
        %2986 = vmatprep.subr.mxu0 0.0
        %2987 = vmatpush2.msra.mxu0 0.0
        %2988 = vmatprep.mubr.f32.mxu0 0.0
        %2989 = vmatmul.mubr.f32.gmra.mxu0 %v2922
        %v2990 = vpop.f32.mrf.mxu0
        %v2991 = vadd.f32 0.0, %v2990
        %v2992 = vpop.f32.mrf.mxu0
        %2993 = vdwg.mxu0
        %v2994 = vadd.f32 %v2916, %v2991
        %v2995 = vld [vmem:[#allocation6 + $0x4] sm:$0x1]
        %s2996 = scalar_lea.vmem %s7, 64
        %v2997 = vld [vmem:[%s2996] sm:$0xff]
        %v2998 = vld [vmem:[%s2996 + $0x8] sm:$0xff]
        %v3000 = vsel %vm2692, %v2995, 0
        %3002 = vmatprep.subr.mxu0 0.0
        %3003 = vmatpush1.msra.mxu0 0.0
        %3004 = vmatprep.subr.mxu0 0.0
        %3005 = vmatpush1.msra.mxu0 0.0
        %3006 = vmatprep.subr.mxu0 0.0
        %3007 = vmatpush1.msra.mxu0 0.0
        %3008 = vmatprep.subr.mxu0 0.0
        %3009 = vmatpush1.msra.mxu0 0.0
        %3010 = vmatprep.subr.mxu0 0.0
        %3011 = vmatpush1.msra.mxu0 0.0
        %3012 = vmatprep.subr.mxu0 0.0
        %3013 = vmatpush1.msra.mxu0 0.0
        %3014 = vmatprep.subr.mxu0 0.0
        %3015 = vmatpush1.msra.mxu0 0.0
        %3016 = vmatprep.subr.mxu0 0.0
        %3017 = vmatpush1.msra.mxu0 0.0
        %3018 = vmatprep.subr.mxu0 0.0
        %3019 = vmatpush1.msra.mxu0 0.0
        %3020 = vmatprep.subr.mxu0 0.0
        %3021 = vmatpush1.msra.mxu0 0.0
        %3022 = vmatprep.subr.mxu0 0.0
        %3023 = vmatpush1.msra.mxu0 0.0
        %3024 = vmatprep.subr.mxu0 0.0
        %3025 = vmatpush1.msra.mxu0 0.0
        %3026 = vmatprep.subr.mxu0 0.0
        %3027 = vmatpush1.msra.mxu0 0.0
        %3028 = vmatprep.subr.mxu0 0.0
        %3029 = vmatpush1.msra.mxu0 0.0
        %3030 = vmatprep.subr.mxu0 0.0
        %3031 = vmatpush1.msra.mxu0 %v2998
        %3032 = vmatprep.subr.mxu0 0.0
        %3033 = vmatpush1.msra.mxu0 %v2997
        %3034 = vmatprep.subr.mxu0 0.0
        %3035 = vmatpush2.msra.mxu0 0.0
        %3036 = vmatprep.subr.mxu0 0.0
        %3037 = vmatpush2.msra.mxu0 0.0
        %3038 = vmatprep.subr.mxu0 0.0
        %3039 = vmatpush2.msra.mxu0 0.0
        %3040 = vmatprep.subr.mxu0 0.0
        %3041 = vmatpush2.msra.mxu0 0.0
        %3042 = vmatprep.subr.mxu0 0.0
        %3043 = vmatpush2.msra.mxu0 0.0
        %3044 = vmatprep.subr.mxu0 0.0
        %3045 = vmatpush2.msra.mxu0 0.0
        %3046 = vmatprep.subr.mxu0 0.0
        %3047 = vmatpush2.msra.mxu0 0.0
        %3048 = vmatprep.subr.mxu0 0.0
        %3049 = vmatpush2.msra.mxu0 0.0
        %3050 = vmatprep.subr.mxu0 0.0
        %3051 = vmatpush2.msra.mxu0 0.0
        %3052 = vmatprep.subr.mxu0 0.0
        %3053 = vmatpush2.msra.mxu0 0.0
        %3054 = vmatprep.subr.mxu0 0.0
        %3055 = vmatpush2.msra.mxu0 0.0
        %3056 = vmatprep.subr.mxu0 0.0
        %3057 = vmatpush2.msra.mxu0 0.0
        %3058 = vmatprep.subr.mxu0 0.0
        %3059 = vmatpush2.msra.mxu0 0.0
        %3060 = vmatprep.subr.mxu0 0.0
        %3061 = vmatpush2.msra.mxu0 0.0
        %3062 = vmatprep.subr.mxu0 0.0
        %3063 = vmatpush2.msra.mxu0 0.0
        %3064 = vmatprep.subr.mxu0 0.0
        %3065 = vmatpush2.msra.mxu0 0.0
        %3066 = vmatprep.mubr.f32.mxu0 0.0
        %3067 = vmatmul.mubr.f32.gmra.mxu0 %v3000
        %v3068 = vpop.f32.mrf.mxu0
        %v3069 = vadd.f32 0.0, %v3068
        %v3070 = vpop.f32.mrf.mxu0
        %3071 = vdwg.mxu0
        %v3072 = vadd.f32 %v2994, %v3069
        %s3073 = scalar_lea.vmem [#allocation6], 8
        %v3074 = vld [vmem:[%s3073] sm:$0x1]
        %s3075 = scalar_lea.vmem %s7, 80
        %v3076 = vld [vmem:[%s3075] sm:$0xff]
        %v3077 = vld [vmem:[%s3075 + $0x8] sm:$0xff]
        %v3079 = vsel %vm2692, %v3074, 0
        %3081 = vmatprep.subr.mxu0 0.0
        %3082 = vmatpush1.msra.mxu0 0.0
        %3083 = vmatprep.subr.mxu0 0.0
        %3084 = vmatpush1.msra.mxu0 0.0
        %3085 = vmatprep.subr.mxu0 0.0
        %3086 = vmatpush1.msra.mxu0 0.0
        %3087 = vmatprep.subr.mxu0 0.0
        %3088 = vmatpush1.msra.mxu0 0.0
        %3089 = vmatprep.subr.mxu0 0.0
        %3090 = vmatpush1.msra.mxu0 0.0
        %3091 = vmatprep.subr.mxu0 0.0
        %3092 = vmatpush1.msra.mxu0 0.0
        %3093 = vmatprep.subr.mxu0 0.0
        %3094 = vmatpush1.msra.mxu0 0.0
        %3095 = vmatprep.subr.mxu0 0.0
        %3096 = vmatpush1.msra.mxu0 0.0
        %3097 = vmatprep.subr.mxu0 0.0
        %3098 = vmatpush1.msra.mxu0 0.0
        %3099 = vmatprep.subr.mxu0 0.0
        %3100 = vmatpush1.msra.mxu0 0.0
        %3101 = vmatprep.subr.mxu0 0.0
        %3102 = vmatpush1.msra.mxu0 0.0
        %3103 = vmatprep.subr.mxu0 0.0
        %3104 = vmatpush1.msra.mxu0 0.0
        %3105 = vmatprep.subr.mxu0 0.0
        %3106 = vmatpush1.msra.mxu0 0.0
        %3107 = vmatprep.subr.mxu0 0.0
        %3108 = vmatpush1.msra.mxu0 0.0
        %3109 = vmatprep.subr.mxu0 0.0
        %3110 = vmatpush1.msra.mxu0 %v3077
        %3111 = vmatprep.subr.mxu0 0.0
        %3112 = vmatpush1.msra.mxu0 %v3076
        %3113 = vmatprep.subr.mxu0 0.0
        %3114 = vmatpush2.msra.mxu0 0.0
        %3115 = vmatprep.subr.mxu0 0.0
        %3116 = vmatpush2.msra.mxu0 0.0
        %3117 = vmatprep.subr.mxu0 0.0
        %3118 = vmatpush2.msra.mxu0 0.0
        %3119 = vmatprep.subr.mxu0 0.0
        %3120 = vmatpush2.msra.mxu0 0.0
        %3121 = vmatprep.subr.mxu0 0.0
        %3122 = vmatpush2.msra.mxu0 0.0
        %3123 = vmatprep.subr.mxu0 0.0
        %3124 = vmatpush2.msra.mxu0 0.0
        %3125 = vmatprep.subr.mxu0 0.0
        %3126 = vmatpush2.msra.mxu0 0.0
        %3127 = vmatprep.subr.mxu0 0.0
        %3128 = vmatpush2.msra.mxu0 0.0
        %3129 = vmatprep.subr.mxu0 0.0
        %3130 = vmatpush2.msra.mxu0 0.0
        %3131 = vmatprep.subr.mxu0 0.0
        %3132 = vmatpush2.msra.mxu0 0.0
        %3133 = vmatprep.subr.mxu0 0.0
        %3134 = vmatpush2.msra.mxu0 0.0
        %3135 = vmatprep.subr.mxu0 0.0
        %3136 = vmatpush2.msra.mxu0 0.0
        %3137 = vmatprep.subr.mxu0 0.0
        %3138 = vmatpush2.msra.mxu0 0.0
        %3139 = vmatprep.subr.mxu0 0.0
        %3140 = vmatpush2.msra.mxu0 0.0
        %3141 = vmatprep.subr.mxu0 0.0
        %3142 = vmatpush2.msra.mxu0 0.0
        %3143 = vmatprep.subr.mxu0 0.0
        %3144 = vmatpush2.msra.mxu0 0.0
        %3145 = vmatprep.mubr.f32.mxu0 0.0
        %3146 = vmatmul.mubr.f32.gmra.mxu0 %v3079
        %v3147 = vpop.f32.mrf.mxu0
        %v3148 = vadd.f32 0.0, %v3147
        %v3149 = vpop.f32.mrf.mxu0
        %3150 = vdwg.mxu0
        %v3151 = vadd.f32 %v3072, %v3148
        %v3152 = vld [vmem:[%s3073 + $0x1] sm:$0x1]
        %s3153 = scalar_lea.vmem %s7, 96
        %v3154 = vld [vmem:[%s3153] sm:$0xff]
        %v3155 = vld [vmem:[%s3153 + $0x8] sm:$0xff]
        %v3157 = vsel %vm2692, %v3152, 0
        %3159 = vmatprep.subr.mxu0 0.0
        %3160 = vmatpush1.msra.mxu0 0.0
        %3161 = vmatprep.subr.mxu0 0.0
        %3162 = vmatpush1.msra.mxu0 0.0
        %3163 = vmatprep.subr.mxu0 0.0
        %3164 = vmatpush1.msra.mxu0 0.0
        %3165 = vmatprep.subr.mxu0 0.0
        %3166 = vmatpush1.msra.mxu0 0.0
        %3167 = vmatprep.subr.mxu0 0.0
        %3168 = vmatpush1.msra.mxu0 0.0
        %3169 = vmatprep.subr.mxu0 0.0
        %3170 = vmatpush1.msra.mxu0 0.0
        %3171 = vmatprep.subr.mxu0 0.0
        %3172 = vmatpush1.msra.mxu0 0.0
        %3173 = vmatprep.subr.mxu0 0.0
        %3174 = vmatpush1.msra.mxu0 0.0
        %3175 = vmatprep.subr.mxu0 0.0
        %3176 = vmatpush1.msra.mxu0 0.0
        %3177 = vmatprep.subr.mxu0 0.0
        %3178 = vmatpush1.msra.mxu0 0.0
        %3179 = vmatprep.subr.mxu0 0.0
        %3180 = vmatpush1.msra.mxu0 0.0
        %3181 = vmatprep.subr.mxu0 0.0
        %3182 = vmatpush1.msra.mxu0 0.0
        %3183 = vmatprep.subr.mxu0 0.0
        %3184 = vmatpush1.msra.mxu0 0.0
        %3185 = vmatprep.subr.mxu0 0.0
        %3186 = vmatpush1.msra.mxu0 0.0
        %3187 = vmatprep.subr.mxu0 0.0
        %3188 = vmatpush1.msra.mxu0 %v3155
        %3189 = vmatprep.subr.mxu0 0.0
        %3190 = vmatpush1.msra.mxu0 %v3154
        %3191 = vmatprep.subr.mxu0 0.0
        %3192 = vmatpush2.msra.mxu0 0.0
        %3193 = vmatprep.subr.mxu0 0.0
        %3194 = vmatpush2.msra.mxu0 0.0
        %3195 = vmatprep.subr.mxu0 0.0
        %3196 = vmatpush2.msra.mxu0 0.0
        %3197 = vmatprep.subr.mxu0 0.0
        %3198 = vmatpush2.msra.mxu0 0.0
        %3199 = vmatprep.subr.mxu0 0.0
        %3200 = vmatpush2.msra.mxu0 0.0
        %3201 = vmatprep.subr.mxu0 0.0
        %3202 = vmatpush2.msra.mxu0 0.0
        %3203 = vmatprep.subr.mxu0 0.0
        %3204 = vmatpush2.msra.mxu0 0.0
        %3205 = vmatprep.subr.mxu0 0.0
        %3206 = vmatpush2.msra.mxu0 0.0
        %3207 = vmatprep.subr.mxu0 0.0
        %3208 = vmatpush2.msra.mxu0 0.0
        %3209 = vmatprep.subr.mxu0 0.0
        %3210 = vmatpush2.msra.mxu0 0.0
        %3211 = vmatprep.subr.mxu0 0.0
        %3212 = vmatpush2.msra.mxu0 0.0
        %3213 = vmatprep.subr.mxu0 0.0
        %3214 = vmatpush2.msra.mxu0 0.0
        %3215 = vmatprep.subr.mxu0 0.0
        %3216 = vmatpush2.msra.mxu0 0.0
        %3217 = vmatprep.subr.mxu0 0.0
        %3218 = vmatpush2.msra.mxu0 0.0
        %3219 = vmatprep.subr.mxu0 0.0
        %3220 = vmatpush2.msra.mxu0 0.0
        %3221 = vmatprep.subr.mxu0 0.0
        %3222 = vmatpush2.msra.mxu0 0.0
        %3223 = vmatprep.mubr.f32.mxu0 0.0
        %3224 = vmatmul.mubr.f32.gmra.mxu0 %v3157
        %v3225 = vpop.f32.mrf.mxu0
        %v3226 = vadd.f32 0.0, %v3225
        %v3227 = vpop.f32.mrf.mxu0
        %3228 = vdwg.mxu0
        %v3229 = vadd.f32 %v3151, %v3226
        %v3230 = vld [vmem:[%s3073 + $0x2] sm:$0x1]
        %s3231 = scalar_lea.vmem %s7, 112
        %v3232 = vld [vmem:[%s3231] sm:$0xff]
        %v3233 = vld [vmem:[%s3231 + $0x8] sm:$0xff]
        %v3235 = vsel %vm2692, %v3230, 0
        %3237 = vmatprep.subr.mxu0 0.0
        %3238 = vmatpush1.msra.mxu0 0.0
        %3239 = vmatprep.subr.mxu0 0.0
        %3240 = vmatpush1.msra.mxu0 0.0
        %3241 = vmatprep.subr.mxu0 0.0
        %3242 = vmatpush1.msra.mxu0 0.0
        %3243 = vmatprep.subr.mxu0 0.0
        %3244 = vmatpush1.msra.mxu0 0.0
        %3245 = vmatprep.subr.mxu0 0.0
        %3246 = vmatpush1.msra.mxu0 0.0
        %3247 = vmatprep.subr.mxu0 0.0
        %3248 = vmatpush1.msra.mxu0 0.0
        %3249 = vmatprep.subr.mxu0 0.0
        %3250 = vmatpush1.msra.mxu0 0.0
        %3251 = vmatprep.subr.mxu0 0.0
        %3252 = vmatpush1.msra.mxu0 0.0
        %3253 = vmatprep.subr.mxu0 0.0
        %3254 = vmatpush1.msra.mxu0 0.0
        %3255 = vmatprep.subr.mxu0 0.0
        %3256 = vmatpush1.msra.mxu0 0.0
        %3257 = vmatprep.subr.mxu0 0.0
        %3258 = vmatpush1.msra.mxu0 0.0
        %3259 = vmatprep.subr.mxu0 0.0
        %3260 = vmatpush1.msra.mxu0 0.0
        %3261 = vmatprep.subr.mxu0 0.0
        %3262 = vmatpush1.msra.mxu0 0.0
        %3263 = vmatprep.subr.mxu0 0.0
        %3264 = vmatpush1.msra.mxu0 0.0
        %3265 = vmatprep.subr.mxu0 0.0
        %3266 = vmatpush1.msra.mxu0 %v3233
        %3267 = vmatprep.subr.mxu0 0.0
        %3268 = vmatpush1.msra.mxu0 %v3232
        %3269 = vmatprep.subr.mxu0 0.0
        %3270 = vmatpush2.msra.mxu0 0.0
        %3271 = vmatprep.subr.mxu0 0.0
        %3272 = vmatpush2.msra.mxu0 0.0
        %3273 = vmatprep.subr.mxu0 0.0
        %3274 = vmatpush2.msra.mxu0 0.0
        %3275 = vmatprep.subr.mxu0 0.0
        %3276 = vmatpush2.msra.mxu0 0.0
        %3277 = vmatprep.subr.mxu0 0.0
        %3278 = vmatpush2.msra.mxu0 0.0
        %3279 = vmatprep.subr.mxu0 0.0
        %3280 = vmatpush2.msra.mxu0 0.0
        %3281 = vmatprep.subr.mxu0 0.0
        %3282 = vmatpush2.msra.mxu0 0.0
        %3283 = vmatprep.subr.mxu0 0.0
        %3284 = vmatpush2.msra.mxu0 0.0
        %3285 = vmatprep.subr.mxu0 0.0
        %3286 = vmatpush2.msra.mxu0 0.0
        %3287 = vmatprep.subr.mxu0 0.0
        %3288 = vmatpush2.msra.mxu0 0.0
        %3289 = vmatprep.subr.mxu0 0.0
        %3290 = vmatpush2.msra.mxu0 0.0
        %3291 = vmatprep.subr.mxu0 0.0
        %3292 = vmatpush2.msra.mxu0 0.0
        %3293 = vmatprep.subr.mxu0 0.0
        %3294 = vmatpush2.msra.mxu0 0.0
        %3295 = vmatprep.subr.mxu0 0.0
        %3296 = vmatpush2.msra.mxu0 0.0
        %3297 = vmatprep.subr.mxu0 0.0
        %3298 = vmatpush2.msra.mxu0 0.0
        %3299 = vmatprep.subr.mxu0 0.0
        %3300 = vmatpush2.msra.mxu0 0.0
        %3301 = vmatprep.mubr.f32.mxu0 0.0
        %3302 = vmatmul.mubr.f32.gmra.mxu0 %v3235
        %v3303 = vpop.f32.mrf.mxu0
        %v3304 = vadd.f32 0.0, %v3303
        %v3305 = vpop.f32.mrf.mxu0
        %3306 = vdwg.mxu0
        %v3307 = vadd.f32 %v3229, %v3304
        %v3308 = vld [vmem:[%s3073 + $0x3] sm:$0x1]
        %s3309 = scalar_lea.vmem %s7, 128
        %v3310 = vld [vmem:[%s3309] sm:$0xff]
        %v3311 = vld [vmem:[%s3309 + $0x8] sm:$0xff]
        %v3313 = vsel %vm2692, %v3308, 0
        %3315 = vmatprep.subr.mxu0 0.0
        %3316 = vmatpush1.msra.mxu0 0.0
        %3317 = vmatprep.subr.mxu0 0.0
        %3318 = vmatpush1.msra.mxu0 0.0
        %3319 = vmatprep.subr.mxu0 0.0
        %3320 = vmatpush1.msra.mxu0 0.0
        %3321 = vmatprep.subr.mxu0 0.0
        %3322 = vmatpush1.msra.mxu0 0.0
        %3323 = vmatprep.subr.mxu0 0.0
        %3324 = vmatpush1.msra.mxu0 0.0
        %3325 = vmatprep.subr.mxu0 0.0
        %3326 = vmatpush1.msra.mxu0 0.0
        %3327 = vmatprep.subr.mxu0 0.0
        %3328 = vmatpush1.msra.mxu0 0.0
        %3329 = vmatprep.subr.mxu0 0.0
        %3330 = vmatpush1.msra.mxu0 0.0
        %3331 = vmatprep.subr.mxu0 0.0
        %3332 = vmatpush1.msra.mxu0 0.0
        %3333 = vmatprep.subr.mxu0 0.0
        %3334 = vmatpush1.msra.mxu0 0.0
        %3335 = vmatprep.subr.mxu0 0.0
        %3336 = vmatpush1.msra.mxu0 0.0
        %3337 = vmatprep.subr.mxu0 0.0
        %3338 = vmatpush1.msra.mxu0 0.0
        %3339 = vmatprep.subr.mxu0 0.0
        %3340 = vmatpush1.msra.mxu0 0.0
        %3341 = vmatprep.subr.mxu0 0.0
        %3342 = vmatpush1.msra.mxu0 0.0
        %3343 = vmatprep.subr.mxu0 0.0
        %3344 = vmatpush1.msra.mxu0 %v3311
        %3345 = vmatprep.subr.mxu0 0.0
        %3346 = vmatpush1.msra.mxu0 %v3310
        %3347 = vmatprep.subr.mxu0 0.0
        %3348 = vmatpush2.msra.mxu0 0.0
        %3349 = vmatprep.subr.mxu0 0.0
        %3350 = vmatpush2.msra.mxu0 0.0
        %3351 = vmatprep.subr.mxu0 0.0
        %3352 = vmatpush2.msra.mxu0 0.0
        %3353 = vmatprep.subr.mxu0 0.0
        %3354 = vmatpush2.msra.mxu0 0.0
        %3355 = vmatprep.subr.mxu0 0.0
        %3356 = vmatpush2.msra.mxu0 0.0
        %3357 = vmatprep.subr.mxu0 0.0
        %3358 = vmatpush2.msra.mxu0 0.0
        %3359 = vmatprep.subr.mxu0 0.0
        %3360 = vmatpush2.msra.mxu0 0.0
        %3361 = vmatprep.subr.mxu0 0.0
        %3362 = vmatpush2.msra.mxu0 0.0
        %3363 = vmatprep.subr.mxu0 0.0
        %3364 = vmatpush2.msra.mxu0 0.0
        %3365 = vmatprep.subr.mxu0 0.0
        %3366 = vmatpush2.msra.mxu0 0.0
        %3367 = vmatprep.subr.mxu0 0.0
        %3368 = vmatpush2.msra.mxu0 0.0
        %3369 = vmatprep.subr.mxu0 0.0
        %3370 = vmatpush2.msra.mxu0 0.0
        %3371 = vmatprep.subr.mxu0 0.0
        %3372 = vmatpush2.msra.mxu0 0.0
        %3373 = vmatprep.subr.mxu0 0.0
        %3374 = vmatpush2.msra.mxu0 0.0
        %3375 = vmatprep.subr.mxu0 0.0
        %3376 = vmatpush2.msra.mxu0 0.0
        %3377 = vmatprep.subr.mxu0 0.0
        %3378 = vmatpush2.msra.mxu0 0.0
        %3379 = vmatprep.mubr.f32.mxu0 0.0
        %3380 = vmatmul.mubr.f32.gmra.mxu0 %v3313
        %v3381 = vpop.f32.mrf.mxu0
        %v3382 = vadd.f32 0.0, %v3381
        %v3383 = vpop.f32.mrf.mxu0
        %3384 = vdwg.mxu0
        %v3385 = vadd.f32 %v3307, %v3382
        %v3386 = vld [vmem:[%s3073 + $0x4] sm:$0x1]
        %s3387 = scalar_lea.vmem %s7, 144
        %v3388 = vld [vmem:[%s3387] sm:$0xff]
        %v3389 = vld [vmem:[%s3387 + $0x8] sm:$0xff]
        %v3391 = vsel %vm2692, %v3386, 0
        %3393 = vmatprep.subr.mxu0 0.0
        %3394 = vmatpush1.msra.mxu0 0.0
        %3395 = vmatprep.subr.mxu0 0.0
        %3396 = vmatpush1.msra.mxu0 0.0
        %3397 = vmatprep.subr.mxu0 0.0
        %3398 = vmatpush1.msra.mxu0 0.0
        %3399 = vmatprep.subr.mxu0 0.0
        %3400 = vmatpush1.msra.mxu0 0.0
        %3401 = vmatprep.subr.mxu0 0.0
        %3402 = vmatpush1.msra.mxu0 0.0
        %3403 = vmatprep.subr.mxu0 0.0
        %3404 = vmatpush1.msra.mxu0 0.0
        %3405 = vmatprep.subr.mxu0 0.0
        %3406 = vmatpush1.msra.mxu0 0.0
        %3407 = vmatprep.subr.mxu0 0.0
        %3408 = vmatpush1.msra.mxu0 0.0
        %3409 = vmatprep.subr.mxu0 0.0
        %3410 = vmatpush1.msra.mxu0 0.0
        %3411 = vmatprep.subr.mxu0 0.0
        %3412 = vmatpush1.msra.mxu0 0.0
        %3413 = vmatprep.subr.mxu0 0.0
        %3414 = vmatpush1.msra.mxu0 0.0
        %3415 = vmatprep.subr.mxu0 0.0
        %3416 = vmatpush1.msra.mxu0 0.0
        %3417 = vmatprep.subr.mxu0 0.0
        %3418 = vmatpush1.msra.mxu0 0.0
        %3419 = vmatprep.subr.mxu0 0.0
        %3420 = vmatpush1.msra.mxu0 0.0
        %3421 = vmatprep.subr.mxu0 0.0
        %3422 = vmatpush1.msra.mxu0 %v3389
        %3423 = vmatprep.subr.mxu0 0.0
        %3424 = vmatpush1.msra.mxu0 %v3388
        %3425 = vmatprep.subr.mxu0 0.0
        %3426 = vmatpush2.msra.mxu0 0.0
        %3427 = vmatprep.subr.mxu0 0.0
        %3428 = vmatpush2.msra.mxu0 0.0
        %3429 = vmatprep.subr.mxu0 0.0
        %3430 = vmatpush2.msra.mxu0 0.0
        %3431 = vmatprep.subr.mxu0 0.0
        %3432 = vmatpush2.msra.mxu0 0.0
        %3433 = vmatprep.subr.mxu0 0.0
        %3434 = vmatpush2.msra.mxu0 0.0
        %3435 = vmatprep.subr.mxu0 0.0
        %3436 = vmatpush2.msra.mxu0 0.0
        %3437 = vmatprep.subr.mxu0 0.0
        %3438 = vmatpush2.msra.mxu0 0.0
        %3439 = vmatprep.subr.mxu0 0.0
        %3440 = vmatpush2.msra.mxu0 0.0
        %3441 = vmatprep.subr.mxu0 0.0
        %3442 = vmatpush2.msra.mxu0 0.0
        %3443 = vmatprep.subr.mxu0 0.0
        %3444 = vmatpush2.msra.mxu0 0.0
        %3445 = vmatprep.subr.mxu0 0.0
        %3446 = vmatpush2.msra.mxu0 0.0
        %3447 = vmatprep.subr.mxu0 0.0
        %3448 = vmatpush2.msra.mxu0 0.0
        %3449 = vmatprep.subr.mxu0 0.0
        %3450 = vmatpush2.msra.mxu0 0.0
        %3451 = vmatprep.subr.mxu0 0.0
        %3452 = vmatpush2.msra.mxu0 0.0
        %3453 = vmatprep.subr.mxu0 0.0
        %3454 = vmatpush2.msra.mxu0 0.0
        %3455 = vmatprep.subr.mxu0 0.0
        %3456 = vmatpush2.msra.mxu0 0.0
        %3457 = vmatprep.mubr.f32.mxu0 0.0
        %3458 = vmatmul.mubr.f32.gmra.mxu0 %v3391
        %v3459 = vpop.f32.mrf.mxu0
        %v3460 = vadd.f32 0.0, %v3459
        %v3461 = vpop.f32.mrf.mxu0
        %3462 = vdwg.mxu0
        %v3463 = vadd.f32 %v3385, %v3460
        %s3464 = scalar_lea.vmem [#allocation6], 16
        %v3465 = vld [vmem:[%s3464] sm:$0x1]
        %s3466 = scalar_lea.vmem %s7, 160
        %v3467 = vld [vmem:[%s3466] sm:$0xff]
        %v3468 = vld [vmem:[%s3466 + $0x8] sm:$0xff]
        %v3470 = vsel %vm2692, %v3465, 0
        %3472 = vmatprep.subr.mxu0 0.0
        %3473 = vmatpush1.msra.mxu0 0.0
        %3474 = vmatprep.subr.mxu0 0.0
        %3475 = vmatpush1.msra.mxu0 0.0
        %3476 = vmatprep.subr.mxu0 0.0
        %3477 = vmatpush1.msra.mxu0 0.0
        %3478 = vmatprep.subr.mxu0 0.0
        %3479 = vmatpush1.msra.mxu0 0.0
        %3480 = vmatprep.subr.mxu0 0.0
        %3481 = vmatpush1.msra.mxu0 0.0
        %3482 = vmatprep.subr.mxu0 0.0
        %3483 = vmatpush1.msra.mxu0 0.0
        %3484 = vmatprep.subr.mxu0 0.0
        %3485 = vmatpush1.msra.mxu0 0.0
        %3486 = vmatprep.subr.mxu0 0.0
        %3487 = vmatpush1.msra.mxu0 0.0
        %3488 = vmatprep.subr.mxu0 0.0
        %3489 = vmatpush1.msra.mxu0 0.0
        %3490 = vmatprep.subr.mxu0 0.0
        %3491 = vmatpush1.msra.mxu0 0.0
        %3492 = vmatprep.subr.mxu0 0.0
        %3493 = vmatpush1.msra.mxu0 0.0
        %3494 = vmatprep.subr.mxu0 0.0
        %3495 = vmatpush1.msra.mxu0 0.0
        %3496 = vmatprep.subr.mxu0 0.0
        %3497 = vmatpush1.msra.mxu0 0.0
        %3498 = vmatprep.subr.mxu0 0.0
        %3499 = vmatpush1.msra.mxu0 0.0
        %3500 = vmatprep.subr.mxu0 0.0
        %3501 = vmatpush1.msra.mxu0 %v3468
        %3502 = vmatprep.subr.mxu0 0.0
        %3503 = vmatpush1.msra.mxu0 %v3467
        %3504 = vmatprep.subr.mxu0 0.0
        %3505 = vmatpush2.msra.mxu0 0.0
        %3506 = vmatprep.subr.mxu0 0.0
        %3507 = vmatpush2.msra.mxu0 0.0
        %3508 = vmatprep.subr.mxu0 0.0
        %3509 = vmatpush2.msra.mxu0 0.0
        %3510 = vmatprep.subr.mxu0 0.0
        %3511 = vmatpush2.msra.mxu0 0.0
        %3512 = vmatprep.subr.mxu0 0.0
        %3513 = vmatpush2.msra.mxu0 0.0
        %3514 = vmatprep.subr.mxu0 0.0
        %3515 = vmatpush2.msra.mxu0 0.0
        %3516 = vmatprep.subr.mxu0 0.0
        %3517 = vmatpush2.msra.mxu0 0.0
        %3518 = vmatprep.subr.mxu0 0.0
        %3519 = vmatpush2.msra.mxu0 0.0
        %3520 = vmatprep.subr.mxu0 0.0
        %3521 = vmatpush2.msra.mxu0 0.0
        %3522 = vmatprep.subr.mxu0 0.0
        %3523 = vmatpush2.msra.mxu0 0.0
        %3524 = vmatprep.subr.mxu0 0.0
        %3525 = vmatpush2.msra.mxu0 0.0
        %3526 = vmatprep.subr.mxu0 0.0
        %3527 = vmatpush2.msra.mxu0 0.0
        %3528 = vmatprep.subr.mxu0 0.0
        %3529 = vmatpush2.msra.mxu0 0.0
        %3530 = vmatprep.subr.mxu0 0.0
        %3531 = vmatpush2.msra.mxu0 0.0
        %3532 = vmatprep.subr.mxu0 0.0
        %3533 = vmatpush2.msra.mxu0 0.0
        %3534 = vmatprep.subr.mxu0 0.0
        %3535 = vmatpush2.msra.mxu0 0.0
        %3536 = vmatprep.mubr.f32.mxu0 0.0
        %3537 = vmatmul.mubr.f32.gmra.mxu0 %v3470
        %v3538 = vpop.f32.mrf.mxu0
        %v3539 = vadd.f32 0.0, %v3538
        %v3540 = vpop.f32.mrf.mxu0
        %3541 = vdwg.mxu0
        %v3542 = vadd.f32 %v3463, %v3539
        %v3543 = vld [vmem:[%s3464 + $0x1] sm:$0x1]
        %s3544 = scalar_lea.vmem %s7, 176
        %v3545 = vld [vmem:[%s3544] sm:$0xff]
        %v3546 = vld [vmem:[%s3544 + $0x8] sm:$0xff]
        %v3548 = vsel %vm2692, %v3543, 0
        %3550 = vmatprep.subr.mxu0 0.0
        %3551 = vmatpush1.msra.mxu0 0.0
        %3552 = vmatprep.subr.mxu0 0.0
        %3553 = vmatpush1.msra.mxu0 0.0
        %3554 = vmatprep.subr.mxu0 0.0
        %3555 = vmatpush1.msra.mxu0 0.0
        %3556 = vmatprep.subr.mxu0 0.0
        %3557 = vmatpush1.msra.mxu0 0.0
        %3558 = vmatprep.subr.mxu0 0.0
        %3559 = vmatpush1.msra.mxu0 0.0
        %3560 = vmatprep.subr.mxu0 0.0
        %3561 = vmatpush1.msra.mxu0 0.0
        %3562 = vmatprep.subr.mxu0 0.0
        %3563 = vmatpush1.msra.mxu0 0.0
        %3564 = vmatprep.subr.mxu0 0.0
        %3565 = vmatpush1.msra.mxu0 0.0
        %3566 = vmatprep.subr.mxu0 0.0
        %3567 = vmatpush1.msra.mxu0 0.0
        %3568 = vmatprep.subr.mxu0 0.0
        %3569 = vmatpush1.msra.mxu0 0.0
        %3570 = vmatprep.subr.mxu0 0.0
        %3571 = vmatpush1.msra.mxu0 0.0
        %3572 = vmatprep.subr.mxu0 0.0
        %3573 = vmatpush1.msra.mxu0 0.0
        %3574 = vmatprep.subr.mxu0 0.0
        %3575 = vmatpush1.msra.mxu0 0.0
        %3576 = vmatprep.subr.mxu0 0.0
        %3577 = vmatpush1.msra.mxu0 0.0
        %3578 = vmatprep.subr.mxu0 0.0
        %3579 = vmatpush1.msra.mxu0 %v3546
        %3580 = vmatprep.subr.mxu0 0.0
        %3581 = vmatpush1.msra.mxu0 %v3545
        %3582 = vmatprep.subr.mxu0 0.0
        %3583 = vmatpush2.msra.mxu0 0.0
        %3584 = vmatprep.subr.mxu0 0.0
        %3585 = vmatpush2.msra.mxu0 0.0
        %3586 = vmatprep.subr.mxu0 0.0
        %3587 = vmatpush2.msra.mxu0 0.0
        %3588 = vmatprep.subr.mxu0 0.0
        %3589 = vmatpush2.msra.mxu0 0.0
        %3590 = vmatprep.subr.mxu0 0.0
        %3591 = vmatpush2.msra.mxu0 0.0
        %3592 = vmatprep.subr.mxu0 0.0
        %3593 = vmatpush2.msra.mxu0 0.0
        %3594 = vmatprep.subr.mxu0 0.0
        %3595 = vmatpush2.msra.mxu0 0.0
        %3596 = vmatprep.subr.mxu0 0.0
        %3597 = vmatpush2.msra.mxu0 0.0
        %3598 = vmatprep.subr.mxu0 0.0
        %3599 = vmatpush2.msra.mxu0 0.0
        %3600 = vmatprep.subr.mxu0 0.0
        %3601 = vmatpush2.msra.mxu0 0.0
        %3602 = vmatprep.subr.mxu0 0.0
        %3603 = vmatpush2.msra.mxu0 0.0
        %3604 = vmatprep.subr.mxu0 0.0
        %3605 = vmatpush2.msra.mxu0 0.0
        %3606 = vmatprep.subr.mxu0 0.0
        %3607 = vmatpush2.msra.mxu0 0.0
        %3608 = vmatprep.subr.mxu0 0.0
        %3609 = vmatpush2.msra.mxu0 0.0
        %3610 = vmatprep.subr.mxu0 0.0
        %3611 = vmatpush2.msra.mxu0 0.0
        %3612 = vmatprep.subr.mxu0 0.0
        %3613 = vmatpush2.msra.mxu0 0.0
        %3614 = vmatprep.mubr.f32.mxu0 0.0
        %3615 = vmatmul.mubr.f32.gmra.mxu0 %v3548
        %v3616 = vpop.f32.mrf.mxu0
        %v3617 = vadd.f32 0.0, %v3616
        %v3618 = vpop.f32.mrf.mxu0
        %3619 = vdwg.mxu0
        %v3620 = vadd.f32 %v3542, %v3617
        %v3621 = vld [vmem:[%s3464 + $0x2] sm:$0x1]
        %s3622 = scalar_lea.vmem %s7, 192
        %v3623 = vld [vmem:[%s3622] sm:$0xff]
        %v3624 = vld [vmem:[%s3622 + $0x8] sm:$0xff]
        %v3626 = vsel %vm2692, %v3621, 0
        %3628 = vmatprep.subr.mxu0 0.0
        %3629 = vmatpush1.msra.mxu0 0.0
        %3630 = vmatprep.subr.mxu0 0.0
        %3631 = vmatpush1.msra.mxu0 0.0
        %3632 = vmatprep.subr.mxu0 0.0
        %3633 = vmatpush1.msra.mxu0 0.0
        %3634 = vmatprep.subr.mxu0 0.0
        %3635 = vmatpush1.msra.mxu0 0.0
        %3636 = vmatprep.subr.mxu0 0.0
        %3637 = vmatpush1.msra.mxu0 0.0
        %3638 = vmatprep.subr.mxu0 0.0
        %3639 = vmatpush1.msra.mxu0 0.0
        %3640 = vmatprep.subr.mxu0 0.0
        %3641 = vmatpush1.msra.mxu0 0.0
        %3642 = vmatprep.subr.mxu0 0.0
        %3643 = vmatpush1.msra.mxu0 0.0
        %3644 = vmatprep.subr.mxu0 0.0
        %3645 = vmatpush1.msra.mxu0 0.0
        %3646 = vmatprep.subr.mxu0 0.0
        %3647 = vmatpush1.msra.mxu0 0.0
        %3648 = vmatprep.subr.mxu0 0.0
        %3649 = vmatpush1.msra.mxu0 0.0
        %3650 = vmatprep.subr.mxu0 0.0
        %3651 = vmatpush1.msra.mxu0 0.0
        %3652 = vmatprep.subr.mxu0 0.0
        %3653 = vmatpush1.msra.mxu0 0.0
        %3654 = vmatprep.subr.mxu0 0.0
        %3655 = vmatpush1.msra.mxu0 0.0
        %3656 = vmatprep.subr.mxu0 0.0
        %3657 = vmatpush1.msra.mxu0 %v3624
        %3658 = vmatprep.subr.mxu0 0.0
        %3659 = vmatpush1.msra.mxu0 %v3623
        %3660 = vmatprep.subr.mxu0 0.0
        %3661 = vmatpush2.msra.mxu0 0.0
        %3662 = vmatprep.subr.mxu0 0.0
        %3663 = vmatpush2.msra.mxu0 0.0
        %3664 = vmatprep.subr.mxu0 0.0
        %3665 = vmatpush2.msra.mxu0 0.0
        %3666 = vmatprep.subr.mxu0 0.0
        %3667 = vmatpush2.msra.mxu0 0.0
        %3668 = vmatprep.subr.mxu0 0.0
        %3669 = vmatpush2.msra.mxu0 0.0
        %3670 = vmatprep.subr.mxu0 0.0
        %3671 = vmatpush2.msra.mxu0 0.0
        %3672 = vmatprep.subr.mxu0 0.0
        %3673 = vmatpush2.msra.mxu0 0.0
        %3674 = vmatprep.subr.mxu0 0.0
        %3675 = vmatpush2.msra.mxu0 0.0
        %3676 = vmatprep.subr.mxu0 0.0
        %3677 = vmatpush2.msra.mxu0 0.0
        %3678 = vmatprep.subr.mxu0 0.0
        %3679 = vmatpush2.msra.mxu0 0.0
        %3680 = vmatprep.subr.mxu0 0.0
        %3681 = vmatpush2.msra.mxu0 0.0
        %3682 = vmatprep.subr.mxu0 0.0
        %3683 = vmatpush2.msra.mxu0 0.0
        %3684 = vmatprep.subr.mxu0 0.0
        %3685 = vmatpush2.msra.mxu0 0.0
        %3686 = vmatprep.subr.mxu0 0.0
        %3687 = vmatpush2.msra.mxu0 0.0
        %3688 = vmatprep.subr.mxu0 0.0
        %3689 = vmatpush2.msra.mxu0 0.0
        %3690 = vmatprep.subr.mxu0 0.0
        %3691 = vmatpush2.msra.mxu0 0.0
        %3692 = vmatprep.mubr.f32.mxu0 0.0
        %3693 = vmatmul.mubr.f32.gmra.mxu0 %v3626
        %v3694 = vpop.f32.mrf.mxu0
        %v3695 = vadd.f32 0.0, %v3694
        %v3696 = vpop.f32.mrf.mxu0
        %3697 = vdwg.mxu0
        %v3698 = vadd.f32 %v3620, %v3695
        %v3699 = vld [vmem:[%s3464 + $0x3] sm:$0x1]
        %s3700 = scalar_lea.vmem %s7, 208
        %v3701 = vld [vmem:[%s3700] sm:$0xff]
        %v3702 = vld [vmem:[%s3700 + $0x8] sm:$0xff]
        %v3704 = vsel %vm2692, %v3699, 0
        %3706 = vmatprep.subr.mxu0 0.0
        %3707 = vmatpush1.msra.mxu0 0.0
        %3708 = vmatprep.subr.mxu0 0.0
        %3709 = vmatpush1.msra.mxu0 0.0
        %3710 = vmatprep.subr.mxu0 0.0
        %3711 = vmatpush1.msra.mxu0 0.0
        %3712 = vmatprep.subr.mxu0 0.0
        %3713 = vmatpush1.msra.mxu0 0.0
        %3714 = vmatprep.subr.mxu0 0.0
        %3715 = vmatpush1.msra.mxu0 0.0
        %3716 = vmatprep.subr.mxu0 0.0
        %3717 = vmatpush1.msra.mxu0 0.0
        %3718 = vmatprep.subr.mxu0 0.0
        %3719 = vmatpush1.msra.mxu0 0.0
        %3720 = vmatprep.subr.mxu0 0.0
        %3721 = vmatpush1.msra.mxu0 0.0
        %3722 = vmatprep.subr.mxu0 0.0
        %3723 = vmatpush1.msra.mxu0 0.0
        %3724 = vmatprep.subr.mxu0 0.0
        %3725 = vmatpush1.msra.mxu0 0.0
        %3726 = vmatprep.subr.mxu0 0.0
        %3727 = vmatpush1.msra.mxu0 0.0
        %3728 = vmatprep.subr.mxu0 0.0
        %3729 = vmatpush1.msra.mxu0 0.0
        %3730 = vmatprep.subr.mxu0 0.0
        %3731 = vmatpush1.msra.mxu0 0.0
        %3732 = vmatprep.subr.mxu0 0.0
        %3733 = vmatpush1.msra.mxu0 0.0
        %3734 = vmatprep.subr.mxu0 0.0
        %3735 = vmatpush1.msra.mxu0 %v3702
        %3736 = vmatprep.subr.mxu0 0.0
        %3737 = vmatpush1.msra.mxu0 %v3701
        %3738 = vmatprep.subr.mxu0 0.0
        %3739 = vmatpush2.msra.mxu0 0.0
        %3740 = vmatprep.subr.mxu0 0.0
        %3741 = vmatpush2.msra.mxu0 0.0
        %3742 = vmatprep.subr.mxu0 0.0
        %3743 = vmatpush2.msra.mxu0 0.0
        %3744 = vmatprep.subr.mxu0 0.0
        %3745 = vmatpush2.msra.mxu0 0.0
        %3746 = vmatprep.subr.mxu0 0.0
        %3747 = vmatpush2.msra.mxu0 0.0
        %3748 = vmatprep.subr.mxu0 0.0
        %3749 = vmatpush2.msra.mxu0 0.0
        %3750 = vmatprep.subr.mxu0 0.0
        %3751 = vmatpush2.msra.mxu0 0.0
        %3752 = vmatprep.subr.mxu0 0.0
        %3753 = vmatpush2.msra.mxu0 0.0
        %3754 = vmatprep.subr.mxu0 0.0
        %3755 = vmatpush2.msra.mxu0 0.0
        %3756 = vmatprep.subr.mxu0 0.0
        %3757 = vmatpush2.msra.mxu0 0.0
        %3758 = vmatprep.subr.mxu0 0.0
        %3759 = vmatpush2.msra.mxu0 0.0
        %3760 = vmatprep.subr.mxu0 0.0
        %3761 = vmatpush2.msra.mxu0 0.0
        %3762 = vmatprep.subr.mxu0 0.0
        %3763 = vmatpush2.msra.mxu0 0.0
        %3764 = vmatprep.subr.mxu0 0.0
        %3765 = vmatpush2.msra.mxu0 0.0
        %3766 = vmatprep.subr.mxu0 0.0
        %3767 = vmatpush2.msra.mxu0 0.0
        %3768 = vmatprep.subr.mxu0 0.0
        %3769 = vmatpush2.msra.mxu0 0.0
        %3770 = vmatprep.mubr.f32.mxu0 0.0
        %3771 = vmatmul.mubr.f32.gmra.mxu0 %v3704
        %v3772 = vpop.f32.mrf.mxu0
        %v3773 = vadd.f32 0.0, %v3772
        %v3774 = vpop.f32.mrf.mxu0
        %3775 = vdwg.mxu0
        %v3776 = vadd.f32 %v3698, %v3773
        %v3777 = vld [vmem:[%s3464 + $0x4] sm:$0x1]
        %s3778 = scalar_lea.vmem %s7, 224
        %v3779 = vld [vmem:[%s3778] sm:$0xff]
        %v3780 = vld [vmem:[%s3778 + $0x8] sm:$0xff]
        %v3782 = vsel %vm2692, %v3777, 0
        %3784 = vmatprep.subr.mxu0 0.0
        %3785 = vmatpush1.msra.mxu0 0.0
        %3786 = vmatprep.subr.mxu0 0.0
        %3787 = vmatpush1.msra.mxu0 0.0
        %3788 = vmatprep.subr.mxu0 0.0
        %3789 = vmatpush1.msra.mxu0 0.0
        %3790 = vmatprep.subr.mxu0 0.0
        %3791 = vmatpush1.msra.mxu0 0.0
        %3792 = vmatprep.subr.mxu0 0.0
        %3793 = vmatpush1.msra.mxu0 0.0
        %3794 = vmatprep.subr.mxu0 0.0
        %3795 = vmatpush1.msra.mxu0 0.0
        %3796 = vmatprep.subr.mxu0 0.0
        %3797 = vmatpush1.msra.mxu0 0.0
        %3798 = vmatprep.subr.mxu0 0.0
        %3799 = vmatpush1.msra.mxu0 0.0
        %3800 = vmatprep.subr.mxu0 0.0
        %3801 = vmatpush1.msra.mxu0 0.0
        %3802 = vmatprep.subr.mxu0 0.0
        %3803 = vmatpush1.msra.mxu0 0.0
        %3804 = vmatprep.subr.mxu0 0.0
        %3805 = vmatpush1.msra.mxu0 0.0
        %3806 = vmatprep.subr.mxu0 0.0
        %3807 = vmatpush1.msra.mxu0 0.0
        %3808 = vmatprep.subr.mxu0 0.0
        %3809 = vmatpush1.msra.mxu0 0.0
        %3810 = vmatprep.subr.mxu0 0.0
        %3811 = vmatpush1.msra.mxu0 0.0
        %3812 = vmatprep.subr.mxu0 0.0
        %3813 = vmatpush1.msra.mxu0 %v3780
        %3814 = vmatprep.subr.mxu0 0.0
        %3815 = vmatpush1.msra.mxu0 %v3779
        %3816 = vmatprep.subr.mxu0 0.0
        %3817 = vmatpush2.msra.mxu0 0.0
        %3818 = vmatprep.subr.mxu0 0.0
        %3819 = vmatpush2.msra.mxu0 0.0
        %3820 = vmatprep.subr.mxu0 0.0
        %3821 = vmatpush2.msra.mxu0 0.0
        %3822 = vmatprep.subr.mxu0 0.0
        %3823 = vmatpush2.msra.mxu0 0.0
        %3824 = vmatprep.subr.mxu0 0.0
        %3825 = vmatpush2.msra.mxu0 0.0
        %3826 = vmatprep.subr.mxu0 0.0
        %3827 = vmatpush2.msra.mxu0 0.0
        %3828 = vmatprep.subr.mxu0 0.0
        %3829 = vmatpush2.msra.mxu0 0.0
        %3830 = vmatprep.subr.mxu0 0.0
        %3831 = vmatpush2.msra.mxu0 0.0
        %3832 = vmatprep.subr.mxu0 0.0
        %3833 = vmatpush2.msra.mxu0 0.0
        %3834 = vmatprep.subr.mxu0 0.0
        %3835 = vmatpush2.msra.mxu0 0.0
        %3836 = vmatprep.subr.mxu0 0.0
        %3837 = vmatpush2.msra.mxu0 0.0
        %3838 = vmatprep.subr.mxu0 0.0
        %3839 = vmatpush2.msra.mxu0 0.0
        %3840 = vmatprep.subr.mxu0 0.0
        %3841 = vmatpush2.msra.mxu0 0.0
        %3842 = vmatprep.subr.mxu0 0.0
        %3843 = vmatpush2.msra.mxu0 0.0
        %3844 = vmatprep.subr.mxu0 0.0
        %3845 = vmatpush2.msra.mxu0 0.0
        %3846 = vmatprep.subr.mxu0 0.0
        %3847 = vmatpush2.msra.mxu0 0.0
        %3848 = vmatprep.mubr.f32.mxu0 0.0
        %3849 = vmatmul.mubr.f32.gmra.mxu0 %v3782
        %v3850 = vpop.f32.mrf.mxu0
        %v3851 = vadd.f32 0.0, %v3850
        %v3852 = vpop.f32.mrf.mxu0
        %3853 = vdwg.mxu0
        %v3854 = vadd.f32 %v3776, %v3851
        %s3855 = scalar_lea.vmem [#allocation6], 24
        %v3856 = vld [vmem:[%s3855] sm:$0x1]
        %s3857 = scalar_lea.vmem %s7, 240
        %v3858 = vld [vmem:[%s3857] sm:$0xff]
        %v3859 = vld [vmem:[%s3857 + $0x8] sm:$0xff]
        %v3861 = vsel %vm2692, %v3856, 0
        %3863 = vmatprep.subr.mxu0 0.0
        %3864 = vmatpush1.msra.mxu0 0.0
        %3865 = vmatprep.subr.mxu0 0.0
        %3866 = vmatpush1.msra.mxu0 0.0
        %3867 = vmatprep.subr.mxu0 0.0
        %3868 = vmatpush1.msra.mxu0 0.0
        %3869 = vmatprep.subr.mxu0 0.0
        %3870 = vmatpush1.msra.mxu0 0.0
        %3871 = vmatprep.subr.mxu0 0.0
        %3872 = vmatpush1.msra.mxu0 0.0
        %3873 = vmatprep.subr.mxu0 0.0
        %3874 = vmatpush1.msra.mxu0 0.0
        %3875 = vmatprep.subr.mxu0 0.0
        %3876 = vmatpush1.msra.mxu0 0.0
        %3877 = vmatprep.subr.mxu0 0.0
        %3878 = vmatpush1.msra.mxu0 0.0
        %3879 = vmatprep.subr.mxu0 0.0
        %3880 = vmatpush1.msra.mxu0 0.0
        %3881 = vmatprep.subr.mxu0 0.0
        %3882 = vmatpush1.msra.mxu0 0.0
        %3883 = vmatprep.subr.mxu0 0.0
        %3884 = vmatpush1.msra.mxu0 0.0
        %3885 = vmatprep.subr.mxu0 0.0
        %3886 = vmatpush1.msra.mxu0 0.0
        %3887 = vmatprep.subr.mxu0 0.0
        %3888 = vmatpush1.msra.mxu0 0.0
        %3889 = vmatprep.subr.mxu0 0.0
        %3890 = vmatpush1.msra.mxu0 0.0
        %3891 = vmatprep.subr.mxu0 0.0
        %3892 = vmatpush1.msra.mxu0 %v3859
        %3893 = vmatprep.subr.mxu0 0.0
        %3894 = vmatpush1.msra.mxu0 %v3858
        %3895 = vmatprep.subr.mxu0 0.0
        %3896 = vmatpush2.msra.mxu0 0.0
        %3897 = vmatprep.subr.mxu0 0.0
        %3898 = vmatpush2.msra.mxu0 0.0
        %3899 = vmatprep.subr.mxu0 0.0
        %3900 = vmatpush2.msra.mxu0 0.0
        %3901 = vmatprep.subr.mxu0 0.0
        %3902 = vmatpush2.msra.mxu0 0.0
        %3903 = vmatprep.subr.mxu0 0.0
        %3904 = vmatpush2.msra.mxu0 0.0
        %3905 = vmatprep.subr.mxu0 0.0
        %3906 = vmatpush2.msra.mxu0 0.0
        %3907 = vmatprep.subr.mxu0 0.0
        %3908 = vmatpush2.msra.mxu0 0.0
        %3909 = vmatprep.subr.mxu0 0.0
        %3910 = vmatpush2.msra.mxu0 0.0
        %3911 = vmatprep.subr.mxu0 0.0
        %3912 = vmatpush2.msra.mxu0 0.0
        %3913 = vmatprep.subr.mxu0 0.0
        %3914 = vmatpush2.msra.mxu0 0.0
        %3915 = vmatprep.subr.mxu0 0.0
        %3916 = vmatpush2.msra.mxu0 0.0
        %3917 = vmatprep.subr.mxu0 0.0
        %3918 = vmatpush2.msra.mxu0 0.0
        %3919 = vmatprep.subr.mxu0 0.0
        %3920 = vmatpush2.msra.mxu0 0.0
        %3921 = vmatprep.subr.mxu0 0.0
        %3922 = vmatpush2.msra.mxu0 0.0
        %3923 = vmatprep.subr.mxu0 0.0
        %3924 = vmatpush2.msra.mxu0 0.0
        %3925 = vmatprep.subr.mxu0 0.0
        %3926 = vmatpush2.msra.mxu0 0.0
        %3927 = vmatprep.mubr.f32.mxu0 0.0
        %3928 = vmatmul.mubr.f32.gmra.mxu0 %v3861
        %v3929 = vpop.f32.mrf.mxu0
        %v3930 = vadd.f32 0.0, %v3929
        %v3931 = vpop.f32.mrf.mxu0
        %3932 = vdwg.mxu0
        %v3933 = vadd.f32 %v3854, %v3930
        %v3934 = vld [vmem:[%s3855 + $0x1] sm:$0x1]
        %s3935 = scalar_lea.vmem %s7, 256
        %v3936 = vld [vmem:[%s3935] sm:$0xff]
        %v3937 = vld [vmem:[%s3935 + $0x8] sm:$0xff]
        %v3939 = vsel %vm2692, %v3934, 0
        %3941 = vmatprep.subr.mxu0 0.0
        %3942 = vmatpush1.msra.mxu0 0.0
        %3943 = vmatprep.subr.mxu0 0.0
        %3944 = vmatpush1.msra.mxu0 0.0
        %3945 = vmatprep.subr.mxu0 0.0
        %3946 = vmatpush1.msra.mxu0 0.0
        %3947 = vmatprep.subr.mxu0 0.0
        %3948 = vmatpush1.msra.mxu0 0.0
        %3949 = vmatprep.subr.mxu0 0.0
        %3950 = vmatpush1.msra.mxu0 0.0
        %3951 = vmatprep.subr.mxu0 0.0
        %3952 = vmatpush1.msra.mxu0 0.0
        %3953 = vmatprep.subr.mxu0 0.0
        %3954 = vmatpush1.msra.mxu0 0.0
        %3955 = vmatprep.subr.mxu0 0.0
        %3956 = vmatpush1.msra.mxu0 0.0
        %3957 = vmatprep.subr.mxu0 0.0
        %3958 = vmatpush1.msra.mxu0 0.0
        %3959 = vmatprep.subr.mxu0 0.0
        %3960 = vmatpush1.msra.mxu0 0.0
        %3961 = vmatprep.subr.mxu0 0.0
        %3962 = vmatpush1.msra.mxu0 0.0
        %3963 = vmatprep.subr.mxu0 0.0
        %3964 = vmatpush1.msra.mxu0 0.0
        %3965 = vmatprep.subr.mxu0 0.0
        %3966 = vmatpush1.msra.mxu0 0.0
        %3967 = vmatprep.subr.mxu0 0.0
        %3968 = vmatpush1.msra.mxu0 0.0
        %3969 = vmatprep.subr.mxu0 0.0
        %3970 = vmatpush1.msra.mxu0 %v3937
        %3971 = vmatprep.subr.mxu0 0.0
        %3972 = vmatpush1.msra.mxu0 %v3936
        %3973 = vmatprep.subr.mxu0 0.0
        %3974 = vmatpush2.msra.mxu0 0.0
        %3975 = vmatprep.subr.mxu0 0.0
        %3976 = vmatpush2.msra.mxu0 0.0
        %3977 = vmatprep.subr.mxu0 0.0
        %3978 = vmatpush2.msra.mxu0 0.0
        %3979 = vmatprep.subr.mxu0 0.0
        %3980 = vmatpush2.msra.mxu0 0.0
        %3981 = vmatprep.subr.mxu0 0.0
        %3982 = vmatpush2.msra.mxu0 0.0
        %3983 = vmatprep.subr.mxu0 0.0
        %3984 = vmatpush2.msra.mxu0 0.0
        %3985 = vmatprep.subr.mxu0 0.0
        %3986 = vmatpush2.msra.mxu0 0.0
        %3987 = vmatprep.subr.mxu0 0.0
        %3988 = vmatpush2.msra.mxu0 0.0
        %3989 = vmatprep.subr.mxu0 0.0
        %3990 = vmatpush2.msra.mxu0 0.0
        %3991 = vmatprep.subr.mxu0 0.0
        %3992 = vmatpush2.msra.mxu0 0.0
        %3993 = vmatprep.subr.mxu0 0.0
        %3994 = vmatpush2.msra.mxu0 0.0
        %3995 = vmatprep.subr.mxu0 0.0
        %3996 = vmatpush2.msra.mxu0 0.0
        %3997 = vmatprep.subr.mxu0 0.0
        %3998 = vmatpush2.msra.mxu0 0.0
        %3999 = vmatprep.subr.mxu0 0.0
        %4000 = vmatpush2.msra.mxu0 0.0
        %4001 = vmatprep.subr.mxu0 0.0
        %4002 = vmatpush2.msra.mxu0 0.0
        %4003 = vmatprep.subr.mxu0 0.0
        %4004 = vmatpush2.msra.mxu0 0.0
        %4005 = vmatprep.mubr.f32.mxu0 0.0
        %4006 = vmatmul.mubr.f32.gmra.mxu0 %v3939
        %v4007 = vpop.f32.mrf.mxu0
        %v4008 = vadd.f32 0.0, %v4007
        %v4009 = vpop.f32.mrf.mxu0
        %4010 = vdwg.mxu0
        %v4011 = vadd.f32 %v3933, %v4008
        %v4012 = vld [vmem:[%s3855 + $0x2] sm:$0x1]
        %s4013 = scalar_lea.vmem %s7, 272
        %v4014 = vld [vmem:[%s4013] sm:$0xff]
        %v4015 = vld [vmem:[%s4013 + $0x8] sm:$0xff]
        %v4017 = vsel %vm2692, %v4012, 0
        %4019 = vmatprep.subr.mxu0 0.0
        %4020 = vmatpush1.msra.mxu0 0.0
        %4021 = vmatprep.subr.mxu0 0.0
        %4022 = vmatpush1.msra.mxu0 0.0
        %4023 = vmatprep.subr.mxu0 0.0
        %4024 = vmatpush1.msra.mxu0 0.0
        %4025 = vmatprep.subr.mxu0 0.0
        %4026 = vmatpush1.msra.mxu0 0.0
        %4027 = vmatprep.subr.mxu0 0.0
        %4028 = vmatpush1.msra.mxu0 0.0
        %4029 = vmatprep.subr.mxu0 0.0
        %4030 = vmatpush1.msra.mxu0 0.0
        %4031 = vmatprep.subr.mxu0 0.0
        %4032 = vmatpush1.msra.mxu0 0.0
        %4033 = vmatprep.subr.mxu0 0.0
        %4034 = vmatpush1.msra.mxu0 0.0
        %4035 = vmatprep.subr.mxu0 0.0
        %4036 = vmatpush1.msra.mxu0 0.0
        %4037 = vmatprep.subr.mxu0 0.0
        %4038 = vmatpush1.msra.mxu0 0.0
        %4039 = vmatprep.subr.mxu0 0.0
        %4040 = vmatpush1.msra.mxu0 0.0
        %4041 = vmatprep.subr.mxu0 0.0
        %4042 = vmatpush1.msra.mxu0 0.0
        %4043 = vmatprep.subr.mxu0 0.0
        %4044 = vmatpush1.msra.mxu0 0.0
        %4045 = vmatprep.subr.mxu0 0.0
        %4046 = vmatpush1.msra.mxu0 0.0
        %4047 = vmatprep.subr.mxu0 0.0
        %4048 = vmatpush1.msra.mxu0 %v4015
        %4049 = vmatprep.subr.mxu0 0.0
        %4050 = vmatpush1.msra.mxu0 %v4014
        %4051 = vmatprep.subr.mxu0 0.0
        %4052 = vmatpush2.msra.mxu0 0.0
        %4053 = vmatprep.subr.mxu0 0.0
        %4054 = vmatpush2.msra.mxu0 0.0
        %4055 = vmatprep.subr.mxu0 0.0
        %4056 = vmatpush2.msra.mxu0 0.0
        %4057 = vmatprep.subr.mxu0 0.0
        %4058 = vmatpush2.msra.mxu0 0.0
        %4059 = vmatprep.subr.mxu0 0.0
        %4060 = vmatpush2.msra.mxu0 0.0
        %4061 = vmatprep.subr.mxu0 0.0
        %4062 = vmatpush2.msra.mxu0 0.0
        %4063 = vmatprep.subr.mxu0 0.0
        %4064 = vmatpush2.msra.mxu0 0.0
        %4065 = vmatprep.subr.mxu0 0.0
        %4066 = vmatpush2.msra.mxu0 0.0
        %4067 = vmatprep.subr.mxu0 0.0
        %4068 = vmatpush2.msra.mxu0 0.0
        %4069 = vmatprep.subr.mxu0 0.0
        %4070 = vmatpush2.msra.mxu0 0.0
        %4071 = vmatprep.subr.mxu0 0.0
        %4072 = vmatpush2.msra.mxu0 0.0
        %4073 = vmatprep.subr.mxu0 0.0
        %4074 = vmatpush2.msra.mxu0 0.0
        %4075 = vmatprep.subr.mxu0 0.0
        %4076 = vmatpush2.msra.mxu0 0.0
        %4077 = vmatprep.subr.mxu0 0.0
        %4078 = vmatpush2.msra.mxu0 0.0
        %4079 = vmatprep.subr.mxu0 0.0
        %4080 = vmatpush2.msra.mxu0 0.0
        %4081 = vmatprep.subr.mxu0 0.0
        %4082 = vmatpush2.msra.mxu0 0.0
        %4083 = vmatprep.mubr.f32.mxu0 0.0
        %4084 = vmatmul.mubr.f32.gmra.mxu0 %v4017
        %v4085 = vpop.f32.mrf.mxu0
        %v4086 = vadd.f32 0.0, %v4085
        %v4087 = vpop.f32.mrf.mxu0
        %4088 = vdwg.mxu0
        %v4089 = vadd.f32 %v4011, %v4086
        %v4090 = vld [vmem:[%s3855 + $0x3] sm:$0x1]
        %s4091 = scalar_lea.vmem %s7, 288
        %v4092 = vld [vmem:[%s4091] sm:$0xff]
        %v4093 = vld [vmem:[%s4091 + $0x8] sm:$0xff]
        %v4095 = vsel %vm2692, %v4090, 0
        %4097 = vmatprep.subr.mxu0 0.0
        %4098 = vmatpush1.msra.mxu0 0.0
        %4099 = vmatprep.subr.mxu0 0.0
        %4100 = vmatpush1.msra.mxu0 0.0
        %4101 = vmatprep.subr.mxu0 0.0
        %4102 = vmatpush1.msra.mxu0 0.0
        %4103 = vmatprep.subr.mxu0 0.0
        %4104 = vmatpush1.msra.mxu0 0.0
        %4105 = vmatprep.subr.mxu0 0.0
        %4106 = vmatpush1.msra.mxu0 0.0
        %4107 = vmatprep.subr.mxu0 0.0
        %4108 = vmatpush1.msra.mxu0 0.0
        %4109 = vmatprep.subr.mxu0 0.0
        %4110 = vmatpush1.msra.mxu0 0.0
        %4111 = vmatprep.subr.mxu0 0.0
        %4112 = vmatpush1.msra.mxu0 0.0
        %4113 = vmatprep.subr.mxu0 0.0
        %4114 = vmatpush1.msra.mxu0 0.0
        %4115 = vmatprep.subr.mxu0 0.0
        %4116 = vmatpush1.msra.mxu0 0.0
        %4117 = vmatprep.subr.mxu0 0.0
        %4118 = vmatpush1.msra.mxu0 0.0
        %4119 = vmatprep.subr.mxu0 0.0
        %4120 = vmatpush1.msra.mxu0 0.0
        %4121 = vmatprep.subr.mxu0 0.0
        %4122 = vmatpush1.msra.mxu0 0.0
        %4123 = vmatprep.subr.mxu0 0.0
        %4124 = vmatpush1.msra.mxu0 0.0
        %4125 = vmatprep.subr.mxu0 0.0
        %4126 = vmatpush1.msra.mxu0 %v4093
        %4127 = vmatprep.subr.mxu0 0.0
        %4128 = vmatpush1.msra.mxu0 %v4092
        %4129 = vmatprep.subr.mxu0 0.0
        %4130 = vmatpush2.msra.mxu0 0.0
        %4131 = vmatprep.subr.mxu0 0.0
        %4132 = vmatpush2.msra.mxu0 0.0
        %4133 = vmatprep.subr.mxu0 0.0
        %4134 = vmatpush2.msra.mxu0 0.0
        %4135 = vmatprep.subr.mxu0 0.0
        %4136 = vmatpush2.msra.mxu0 0.0
        %4137 = vmatprep.subr.mxu0 0.0
        %4138 = vmatpush2.msra.mxu0 0.0
        %4139 = vmatprep.subr.mxu0 0.0
        %4140 = vmatpush2.msra.mxu0 0.0
        %4141 = vmatprep.subr.mxu0 0.0
        %4142 = vmatpush2.msra.mxu0 0.0
        %4143 = vmatprep.subr.mxu0 0.0
        %4144 = vmatpush2.msra.mxu0 0.0
        %4145 = vmatprep.subr.mxu0 0.0
        %4146 = vmatpush2.msra.mxu0 0.0
        %4147 = vmatprep.subr.mxu0 0.0
        %4148 = vmatpush2.msra.mxu0 0.0
        %4149 = vmatprep.subr.mxu0 0.0
        %4150 = vmatpush2.msra.mxu0 0.0
        %4151 = vmatprep.subr.mxu0 0.0
        %4152 = vmatpush2.msra.mxu0 0.0
        %4153 = vmatprep.subr.mxu0 0.0
        %4154 = vmatpush2.msra.mxu0 0.0
        %4155 = vmatprep.subr.mxu0 0.0
        %4156 = vmatpush2.msra.mxu0 0.0
        %4157 = vmatprep.subr.mxu0 0.0
        %4158 = vmatpush2.msra.mxu0 0.0
        %4159 = vmatprep.subr.mxu0 0.0
        %4160 = vmatpush2.msra.mxu0 0.0
        %4161 = vmatprep.mubr.f32.mxu0 0.0
        %4162 = vmatmul.mubr.f32.gmra.mxu0 %v4095
        %v4163 = vpop.f32.mrf.mxu0
        %v4164 = vadd.f32 0.0, %v4163
        %v4165 = vpop.f32.mrf.mxu0
        %4166 = vdwg.mxu0
        %v4167 = vadd.f32 %v4089, %v4164
        %v4168 = vld [vmem:[%s3855 + $0x4] sm:$0x1]
        %s4169 = scalar_lea.vmem %s7, 304
        %v4170 = vld [vmem:[%s4169] sm:$0xff]
        %v4171 = vld [vmem:[%s4169 + $0x8] sm:$0xff]
        %v4173 = vsel %vm2692, %v4168, 0
        %4175 = vmatprep.subr.mxu0 0.0
        %4176 = vmatpush1.msra.mxu0 0.0
        %4177 = vmatprep.subr.mxu0 0.0
        %4178 = vmatpush1.msra.mxu0 0.0
        %4179 = vmatprep.subr.mxu0 0.0
        %4180 = vmatpush1.msra.mxu0 0.0
        %4181 = vmatprep.subr.mxu0 0.0
        %4182 = vmatpush1.msra.mxu0 0.0
        %4183 = vmatprep.subr.mxu0 0.0
        %4184 = vmatpush1.msra.mxu0 0.0
        %4185 = vmatprep.subr.mxu0 0.0
        %4186 = vmatpush1.msra.mxu0 0.0
        %4187 = vmatprep.subr.mxu0 0.0
        %4188 = vmatpush1.msra.mxu0 0.0
        %4189 = vmatprep.subr.mxu0 0.0
        %4190 = vmatpush1.msra.mxu0 0.0
        %4191 = vmatprep.subr.mxu0 0.0
        %4192 = vmatpush1.msra.mxu0 0.0
        %4193 = vmatprep.subr.mxu0 0.0
        %4194 = vmatpush1.msra.mxu0 0.0
        %4195 = vmatprep.subr.mxu0 0.0
        %4196 = vmatpush1.msra.mxu0 0.0
        %4197 = vmatprep.subr.mxu0 0.0
        %4198 = vmatpush1.msra.mxu0 0.0
        %4199 = vmatprep.subr.mxu0 0.0
        %4200 = vmatpush1.msra.mxu0 0.0
        %4201 = vmatprep.subr.mxu0 0.0
        %4202 = vmatpush1.msra.mxu0 0.0
        %4203 = vmatprep.subr.mxu0 0.0
        %4204 = vmatpush1.msra.mxu0 %v4171
        %4205 = vmatprep.subr.mxu0 0.0
        %4206 = vmatpush1.msra.mxu0 %v4170
        %4207 = vmatprep.subr.mxu0 0.0
        %4208 = vmatpush2.msra.mxu0 0.0
        %4209 = vmatprep.subr.mxu0 0.0
        %4210 = vmatpush2.msra.mxu0 0.0
        %4211 = vmatprep.subr.mxu0 0.0
        %4212 = vmatpush2.msra.mxu0 0.0
        %4213 = vmatprep.subr.mxu0 0.0
        %4214 = vmatpush2.msra.mxu0 0.0
        %4215 = vmatprep.subr.mxu0 0.0
        %4216 = vmatpush2.msra.mxu0 0.0
        %4217 = vmatprep.subr.mxu0 0.0
        %4218 = vmatpush2.msra.mxu0 0.0
        %4219 = vmatprep.subr.mxu0 0.0
        %4220 = vmatpush2.msra.mxu0 0.0
        %4221 = vmatprep.subr.mxu0 0.0
        %4222 = vmatpush2.msra.mxu0 0.0
        %4223 = vmatprep.subr.mxu0 0.0
        %4224 = vmatpush2.msra.mxu0 0.0
        %4225 = vmatprep.subr.mxu0 0.0
        %4226 = vmatpush2.msra.mxu0 0.0
        %4227 = vmatprep.subr.mxu0 0.0
        %4228 = vmatpush2.msra.mxu0 0.0
        %4229 = vmatprep.subr.mxu0 0.0
        %4230 = vmatpush2.msra.mxu0 0.0
        %4231 = vmatprep.subr.mxu0 0.0
        %4232 = vmatpush2.msra.mxu0 0.0
        %4233 = vmatprep.subr.mxu0 0.0
        %4234 = vmatpush2.msra.mxu0 0.0
        %4235 = vmatprep.subr.mxu0 0.0
        %4236 = vmatpush2.msra.mxu0 0.0
        %4237 = vmatprep.subr.mxu0 0.0
        %4238 = vmatpush2.msra.mxu0 0.0
        %4239 = vmatprep.mubr.f32.mxu0 0.0
        %4240 = vmatmul.mubr.f32.gmra.mxu0 %v4173
        %v4241 = vpop.f32.mrf.mxu0
        %v4242 = vadd.f32 0.0, %v4241
        %v4243 = vpop.f32.mrf.mxu0
        %4244 = vdwg.mxu0
        %v4245 = vadd.f32 %v4167, %v4242
        %s4246 = scalar_lea.vmem [#allocation6], 32
        %v4247 = vld [vmem:[%s4246] sm:$0x1]
        %s4248 = scalar_lea.vmem %s7, 320
        %v4249 = vld [vmem:[%s4248] sm:$0xff]
        %v4250 = vld [vmem:[%s4248 + $0x8] sm:$0xff]
        %v4252 = vsel %vm2692, %v4247, 0
        %4254 = vmatprep.subr.mxu0 0.0
        %4255 = vmatpush1.msra.mxu0 0.0
        %4256 = vmatprep.subr.mxu0 0.0
        %4257 = vmatpush1.msra.mxu0 0.0
        %4258 = vmatprep.subr.mxu0 0.0
        %4259 = vmatpush1.msra.mxu0 0.0
        %4260 = vmatprep.subr.mxu0 0.0
        %4261 = vmatpush1.msra.mxu0 0.0
        %4262 = vmatprep.subr.mxu0 0.0
        %4263 = vmatpush1.msra.mxu0 0.0
        %4264 = vmatprep.subr.mxu0 0.0
        %4265 = vmatpush1.msra.mxu0 0.0
        %4266 = vmatprep.subr.mxu0 0.0
        %4267 = vmatpush1.msra.mxu0 0.0
        %4268 = vmatprep.subr.mxu0 0.0
        %4269 = vmatpush1.msra.mxu0 0.0
        %4270 = vmatprep.subr.mxu0 0.0
        %4271 = vmatpush1.msra.mxu0 0.0
        %4272 = vmatprep.subr.mxu0 0.0
        %4273 = vmatpush1.msra.mxu0 0.0
        %4274 = vmatprep.subr.mxu0 0.0
        %4275 = vmatpush1.msra.mxu0 0.0
        %4276 = vmatprep.subr.mxu0 0.0
        %4277 = vmatpush1.msra.mxu0 0.0
        %4278 = vmatprep.subr.mxu0 0.0
        %4279 = vmatpush1.msra.mxu0 0.0
        %4280 = vmatprep.subr.mxu0 0.0
        %4281 = vmatpush1.msra.mxu0 0.0
        %4282 = vmatprep.subr.mxu0 0.0
        %4283 = vmatpush1.msra.mxu0 %v4250
        %4284 = vmatprep.subr.mxu0 0.0
        %4285 = vmatpush1.msra.mxu0 %v4249
        %4286 = vmatprep.subr.mxu0 0.0
        %4287 = vmatpush2.msra.mxu0 0.0
        %4288 = vmatprep.subr.mxu0 0.0
        %4289 = vmatpush2.msra.mxu0 0.0
        %4290 = vmatprep.subr.mxu0 0.0
        %4291 = vmatpush2.msra.mxu0 0.0
        %4292 = vmatprep.subr.mxu0 0.0
        %4293 = vmatpush2.msra.mxu0 0.0
        %4294 = vmatprep.subr.mxu0 0.0
        %4295 = vmatpush2.msra.mxu0 0.0
        %4296 = vmatprep.subr.mxu0 0.0
        %4297 = vmatpush2.msra.mxu0 0.0
        %4298 = vmatprep.subr.mxu0 0.0
        %4299 = vmatpush2.msra.mxu0 0.0
        %4300 = vmatprep.subr.mxu0 0.0
        %4301 = vmatpush2.msra.mxu0 0.0
        %4302 = vmatprep.subr.mxu0 0.0
        %4303 = vmatpush2.msra.mxu0 0.0
        %4304 = vmatprep.subr.mxu0 0.0
        %4305 = vmatpush2.msra.mxu0 0.0
        %4306 = vmatprep.subr.mxu0 0.0
        %4307 = vmatpush2.msra.mxu0 0.0
        %4308 = vmatprep.subr.mxu0 0.0
        %4309 = vmatpush2.msra.mxu0 0.0
        %4310 = vmatprep.subr.mxu0 0.0
        %4311 = vmatpush2.msra.mxu0 0.0
        %4312 = vmatprep.subr.mxu0 0.0
        %4313 = vmatpush2.msra.mxu0 0.0
        %4314 = vmatprep.subr.mxu0 0.0
        %4315 = vmatpush2.msra.mxu0 0.0
        %4316 = vmatprep.subr.mxu0 0.0
        %4317 = vmatpush2.msra.mxu0 0.0
        %4318 = vmatprep.mubr.f32.mxu0 0.0
        %4319 = vmatmul.mubr.f32.gmra.mxu0 %v4252
        %v4320 = vpop.f32.mrf.mxu0
        %v4321 = vadd.f32 0.0, %v4320
        %v4322 = vpop.f32.mrf.mxu0
        %4323 = vdwg.mxu0
        %v4324 = vadd.f32 %v4245, %v4321
        %v4325 = vld [vmem:[%s4246 + $0x1] sm:$0x1]
        %s4326 = scalar_lea.vmem %s7, 336
        %v4327 = vld [vmem:[%s4326] sm:$0xff]
        %v4328 = vld [vmem:[%s4326 + $0x8] sm:$0xff]
        %v4330 = vsel %vm2692, %v4325, 0
        %4332 = vmatprep.subr.mxu0 0.0
        %4333 = vmatpush1.msra.mxu0 0.0
        %4334 = vmatprep.subr.mxu0 0.0
        %4335 = vmatpush1.msra.mxu0 0.0
        %4336 = vmatprep.subr.mxu0 0.0
        %4337 = vmatpush1.msra.mxu0 0.0
        %4338 = vmatprep.subr.mxu0 0.0
        %4339 = vmatpush1.msra.mxu0 0.0
        %4340 = vmatprep.subr.mxu0 0.0
        %4341 = vmatpush1.msra.mxu0 0.0
        %4342 = vmatprep.subr.mxu0 0.0
        %4343 = vmatpush1.msra.mxu0 0.0
        %4344 = vmatprep.subr.mxu0 0.0
        %4345 = vmatpush1.msra.mxu0 0.0
        %4346 = vmatprep.subr.mxu0 0.0
        %4347 = vmatpush1.msra.mxu0 0.0
        %4348 = vmatprep.subr.mxu0 0.0
        %4349 = vmatpush1.msra.mxu0 0.0
        %4350 = vmatprep.subr.mxu0 0.0
        %4351 = vmatpush1.msra.mxu0 0.0
        %4352 = vmatprep.subr.mxu0 0.0
        %4353 = vmatpush1.msra.mxu0 0.0
        %4354 = vmatprep.subr.mxu0 0.0
        %4355 = vmatpush1.msra.mxu0 0.0
        %4356 = vmatprep.subr.mxu0 0.0
        %4357 = vmatpush1.msra.mxu0 0.0
        %4358 = vmatprep.subr.mxu0 0.0
        %4359 = vmatpush1.msra.mxu0 0.0
        %4360 = vmatprep.subr.mxu0 0.0
        %4361 = vmatpush1.msra.mxu0 %v4328
        %4362 = vmatprep.subr.mxu0 0.0
        %4363 = vmatpush1.msra.mxu0 %v4327
        %4364 = vmatprep.subr.mxu0 0.0
        %4365 = vmatpush2.msra.mxu0 0.0
        %4366 = vmatprep.subr.mxu0 0.0
        %4367 = vmatpush2.msra.mxu0 0.0
        %4368 = vmatprep.subr.mxu0 0.0
        %4369 = vmatpush2.msra.mxu0 0.0
        %4370 = vmatprep.subr.mxu0 0.0
        %4371 = vmatpush2.msra.mxu0 0.0
        %4372 = vmatprep.subr.mxu0 0.0
        %4373 = vmatpush2.msra.mxu0 0.0
        %4374 = vmatprep.subr.mxu0 0.0
        %4375 = vmatpush2.msra.mxu0 0.0
        %4376 = vmatprep.subr.mxu0 0.0
        %4377 = vmatpush2.msra.mxu0 0.0
        %4378 = vmatprep.subr.mxu0 0.0
        %4379 = vmatpush2.msra.mxu0 0.0
        %4380 = vmatprep.subr.mxu0 0.0
        %4381 = vmatpush2.msra.mxu0 0.0
        %4382 = vmatprep.subr.mxu0 0.0
        %4383 = vmatpush2.msra.mxu0 0.0
        %4384 = vmatprep.subr.mxu0 0.0
        %4385 = vmatpush2.msra.mxu0 0.0
        %4386 = vmatprep.subr.mxu0 0.0
        %4387 = vmatpush2.msra.mxu0 0.0
        %4388 = vmatprep.subr.mxu0 0.0
        %4389 = vmatpush2.msra.mxu0 0.0
        %4390 = vmatprep.subr.mxu0 0.0
        %4391 = vmatpush2.msra.mxu0 0.0
        %4392 = vmatprep.subr.mxu0 0.0
        %4393 = vmatpush2.msra.mxu0 0.0
        %4394 = vmatprep.subr.mxu0 0.0
        %4395 = vmatpush2.msra.mxu0 0.0
        %4396 = vmatprep.mubr.f32.mxu0 0.0
        %4397 = vmatmul.mubr.f32.gmra.mxu0 %v4330
        %v4398 = vpop.f32.mrf.mxu0
        %v4399 = vadd.f32 0.0, %v4398
        %v4400 = vpop.f32.mrf.mxu0
        %4401 = vdwg.mxu0
        %v4402 = vadd.f32 %v4324, %v4399
        %v4403 = vld [vmem:[%s4246 + $0x2] sm:$0x1]
        %s4404 = scalar_lea.vmem %s7, 352
        %v4405 = vld [vmem:[%s4404] sm:$0xff]
        %v4406 = vld [vmem:[%s4404 + $0x8] sm:$0xff]
        %v4408 = vsel %vm2692, %v4403, 0
        %4410 = vmatprep.subr.mxu0 0.0
        %4411 = vmatpush1.msra.mxu0 0.0
        %4412 = vmatprep.subr.mxu0 0.0
        %4413 = vmatpush1.msra.mxu0 0.0
        %4414 = vmatprep.subr.mxu0 0.0
        %4415 = vmatpush1.msra.mxu0 0.0
        %4416 = vmatprep.subr.mxu0 0.0
        %4417 = vmatpush1.msra.mxu0 0.0
        %4418 = vmatprep.subr.mxu0 0.0
        %4419 = vmatpush1.msra.mxu0 0.0
        %4420 = vmatprep.subr.mxu0 0.0
        %4421 = vmatpush1.msra.mxu0 0.0
        %4422 = vmatprep.subr.mxu0 0.0
        %4423 = vmatpush1.msra.mxu0 0.0
        %4424 = vmatprep.subr.mxu0 0.0
        %4425 = vmatpush1.msra.mxu0 0.0
        %4426 = vmatprep.subr.mxu0 0.0
        %4427 = vmatpush1.msra.mxu0 0.0
        %4428 = vmatprep.subr.mxu0 0.0
        %4429 = vmatpush1.msra.mxu0 0.0
        %4430 = vmatprep.subr.mxu0 0.0
        %4431 = vmatpush1.msra.mxu0 0.0
        %4432 = vmatprep.subr.mxu0 0.0
        %4433 = vmatpush1.msra.mxu0 0.0
        %4434 = vmatprep.subr.mxu0 0.0
        %4435 = vmatpush1.msra.mxu0 0.0
        %4436 = vmatprep.subr.mxu0 0.0
        %4437 = vmatpush1.msra.mxu0 0.0
        %4438 = vmatprep.subr.mxu0 0.0
        %4439 = vmatpush1.msra.mxu0 %v4406
        %4440 = vmatprep.subr.mxu0 0.0
        %4441 = vmatpush1.msra.mxu0 %v4405
        %4442 = vmatprep.subr.mxu0 0.0
        %4443 = vmatpush2.msra.mxu0 0.0
        %4444 = vmatprep.subr.mxu0 0.0
        %4445 = vmatpush2.msra.mxu0 0.0
        %4446 = vmatprep.subr.mxu0 0.0
        %4447 = vmatpush2.msra.mxu0 0.0
        %4448 = vmatprep.subr.mxu0 0.0
        %4449 = vmatpush2.msra.mxu0 0.0
        %4450 = vmatprep.subr.mxu0 0.0
        %4451 = vmatpush2.msra.mxu0 0.0
        %4452 = vmatprep.subr.mxu0 0.0
        %4453 = vmatpush2.msra.mxu0 0.0
        %4454 = vmatprep.subr.mxu0 0.0
        %4455 = vmatpush2.msra.mxu0 0.0
        %4456 = vmatprep.subr.mxu0 0.0
        %4457 = vmatpush2.msra.mxu0 0.0
        %4458 = vmatprep.subr.mxu0 0.0
        %4459 = vmatpush2.msra.mxu0 0.0
        %4460 = vmatprep.subr.mxu0 0.0
        %4461 = vmatpush2.msra.mxu0 0.0
        %4462 = vmatprep.subr.mxu0 0.0
        %4463 = vmatpush2.msra.mxu0 0.0
        %4464 = vmatprep.subr.mxu0 0.0
        %4465 = vmatpush2.msra.mxu0 0.0
        %4466 = vmatprep.subr.mxu0 0.0
        %4467 = vmatpush2.msra.mxu0 0.0
        %4468 = vmatprep.subr.mxu0 0.0
        %4469 = vmatpush2.msra.mxu0 0.0
        %4470 = vmatprep.subr.mxu0 0.0
        %4471 = vmatpush2.msra.mxu0 0.0
        %4472 = vmatprep.subr.mxu0 0.0
        %4473 = vmatpush2.msra.mxu0 0.0
        %4474 = vmatprep.mubr.f32.mxu0 0.0
        %4475 = vmatmul.mubr.f32.gmra.mxu0 %v4408
        %v4476 = vpop.f32.mrf.mxu0
        %v4477 = vadd.f32 0.0, %v4476
        %v4478 = vpop.f32.mrf.mxu0
        %4479 = vdwg.mxu0
        %v4480 = vadd.f32 %v4402, %v4477
        %v4481 = vld [vmem:[%s4246 + $0x3] sm:$0x1]
        %s4482 = scalar_lea.vmem %s7, 368
        %v4483 = vld [vmem:[%s4482] sm:$0xff]
        %v4484 = vld [vmem:[%s4482 + $0x8] sm:$0xff]
        %v4486 = vsel %vm2692, %v4481, 0
        %4488 = vmatprep.subr.mxu0 0.0
        %4489 = vmatpush1.msra.mxu0 0.0
        %4490 = vmatprep.subr.mxu0 0.0
        %4491 = vmatpush1.msra.mxu0 0.0
        %4492 = vmatprep.subr.mxu0 0.0
        %4493 = vmatpush1.msra.mxu0 0.0
        %4494 = vmatprep.subr.mxu0 0.0
        %4495 = vmatpush1.msra.mxu0 0.0
        %4496 = vmatprep.subr.mxu0 0.0
        %4497 = vmatpush1.msra.mxu0 0.0
        %4498 = vmatprep.subr.mxu0 0.0
        %4499 = vmatpush1.msra.mxu0 0.0
        %4500 = vmatprep.subr.mxu0 0.0
        %4501 = vmatpush1.msra.mxu0 0.0
        %4502 = vmatprep.subr.mxu0 0.0
        %4503 = vmatpush1.msra.mxu0 0.0
        %4504 = vmatprep.subr.mxu0 0.0
        %4505 = vmatpush1.msra.mxu0 0.0
        %4506 = vmatprep.subr.mxu0 0.0
        %4507 = vmatpush1.msra.mxu0 0.0
        %4508 = vmatprep.subr.mxu0 0.0
        %4509 = vmatpush1.msra.mxu0 0.0
        %4510 = vmatprep.subr.mxu0 0.0
        %4511 = vmatpush1.msra.mxu0 0.0
        %4512 = vmatprep.subr.mxu0 0.0
        %4513 = vmatpush1.msra.mxu0 0.0
        %4514 = vmatprep.subr.mxu0 0.0
        %4515 = vmatpush1.msra.mxu0 0.0
        %4516 = vmatprep.subr.mxu0 0.0
        %4517 = vmatpush1.msra.mxu0 %v4484
        %4518 = vmatprep.subr.mxu0 0.0
        %4519 = vmatpush1.msra.mxu0 %v4483
        %4520 = vmatprep.subr.mxu0 0.0
        %4521 = vmatpush2.msra.mxu0 0.0
        %4522 = vmatprep.subr.mxu0 0.0
        %4523 = vmatpush2.msra.mxu0 0.0
        %4524 = vmatprep.subr.mxu0 0.0
        %4525 = vmatpush2.msra.mxu0 0.0
        %4526 = vmatprep.subr.mxu0 0.0
        %4527 = vmatpush2.msra.mxu0 0.0
        %4528 = vmatprep.subr.mxu0 0.0
        %4529 = vmatpush2.msra.mxu0 0.0
        %4530 = vmatprep.subr.mxu0 0.0
        %4531 = vmatpush2.msra.mxu0 0.0
        %4532 = vmatprep.subr.mxu0 0.0
        %4533 = vmatpush2.msra.mxu0 0.0
        %4534 = vmatprep.subr.mxu0 0.0
        %4535 = vmatpush2.msra.mxu0 0.0
        %4536 = vmatprep.subr.mxu0 0.0
        %4537 = vmatpush2.msra.mxu0 0.0
        %4538 = vmatprep.subr.mxu0 0.0
        %4539 = vmatpush2.msra.mxu0 0.0
        %4540 = vmatprep.subr.mxu0 0.0
        %4541 = vmatpush2.msra.mxu0 0.0
        %4542 = vmatprep.subr.mxu0 0.0
        %4543 = vmatpush2.msra.mxu0 0.0
        %4544 = vmatprep.subr.mxu0 0.0
        %4545 = vmatpush2.msra.mxu0 0.0
        %4546 = vmatprep.subr.mxu0 0.0
        %4547 = vmatpush2.msra.mxu0 0.0
        %4548 = vmatprep.subr.mxu0 0.0
        %4549 = vmatpush2.msra.mxu0 0.0
        %4550 = vmatprep.subr.mxu0 0.0
        %4551 = vmatpush2.msra.mxu0 0.0
        %4552 = vmatprep.mubr.f32.mxu0 0.0
        %4553 = vmatmul.mubr.f32.gmra.mxu0 %v4486
        %v4554 = vpop.f32.mrf.mxu0
        %v4555 = vadd.f32 0.0, %v4554
        %v4556 = vpop.f32.mrf.mxu0
        %4557 = vdwg.mxu0
        %v4558 = vadd.f32 %v4480, %v4555
        %v4559 = vld [vmem:[%s4246 + $0x4] sm:$0x1]
        %s4560 = scalar_lea.vmem %s7, 384
        %v4561 = vld [vmem:[%s4560] sm:$0xff]
        %v4562 = vld [vmem:[%s4560 + $0x8] sm:$0xff]
        %v4564 = vsel %vm2692, %v4559, 0
        %4566 = vmatprep.subr.mxu0 0.0
        %4567 = vmatpush1.msra.mxu0 0.0
        %4568 = vmatprep.subr.mxu0 0.0
        %4569 = vmatpush1.msra.mxu0 0.0
        %4570 = vmatprep.subr.mxu0 0.0
        %4571 = vmatpush1.msra.mxu0 0.0
        %4572 = vmatprep.subr.mxu0 0.0
        %4573 = vmatpush1.msra.mxu0 0.0
        %4574 = vmatprep.subr.mxu0 0.0
        %4575 = vmatpush1.msra.mxu0 0.0
        %4576 = vmatprep.subr.mxu0 0.0
        %4577 = vmatpush1.msra.mxu0 0.0
        %4578 = vmatprep.subr.mxu0 0.0
        %4579 = vmatpush1.msra.mxu0 0.0
        %4580 = vmatprep.subr.mxu0 0.0
        %4581 = vmatpush1.msra.mxu0 0.0
        %4582 = vmatprep.subr.mxu0 0.0
        %4583 = vmatpush1.msra.mxu0 0.0
        %4584 = vmatprep.subr.mxu0 0.0
        %4585 = vmatpush1.msra.mxu0 0.0
        %4586 = vmatprep.subr.mxu0 0.0
        %4587 = vmatpush1.msra.mxu0 0.0
        %4588 = vmatprep.subr.mxu0 0.0
        %4589 = vmatpush1.msra.mxu0 0.0
        %4590 = vmatprep.subr.mxu0 0.0
        %4591 = vmatpush1.msra.mxu0 0.0
        %4592 = vmatprep.subr.mxu0 0.0
        %4593 = vmatpush1.msra.mxu0 0.0
        %4594 = vmatprep.subr.mxu0 0.0
        %4595 = vmatpush1.msra.mxu0 %v4562
        %4596 = vmatprep.subr.mxu0 0.0
        %4597 = vmatpush1.msra.mxu0 %v4561
        %4598 = vmatprep.subr.mxu0 0.0
        %4599 = vmatpush2.msra.mxu0 0.0
        %4600 = vmatprep.subr.mxu0 0.0
        %4601 = vmatpush2.msra.mxu0 0.0
        %4602 = vmatprep.subr.mxu0 0.0
        %4603 = vmatpush2.msra.mxu0 0.0
        %4604 = vmatprep.subr.mxu0 0.0
        %4605 = vmatpush2.msra.mxu0 0.0
        %4606 = vmatprep.subr.mxu0 0.0
        %4607 = vmatpush2.msra.mxu0 0.0
        %4608 = vmatprep.subr.mxu0 0.0
        %4609 = vmatpush2.msra.mxu0 0.0
        %4610 = vmatprep.subr.mxu0 0.0
        %4611 = vmatpush2.msra.mxu0 0.0
        %4612 = vmatprep.subr.mxu0 0.0
        %4613 = vmatpush2.msra.mxu0 0.0
        %4614 = vmatprep.subr.mxu0 0.0
        %4615 = vmatpush2.msra.mxu0 0.0
        %4616 = vmatprep.subr.mxu0 0.0
        %4617 = vmatpush2.msra.mxu0 0.0
        %4618 = vmatprep.subr.mxu0 0.0
        %4619 = vmatpush2.msra.mxu0 0.0
        %4620 = vmatprep.subr.mxu0 0.0
        %4621 = vmatpush2.msra.mxu0 0.0
        %4622 = vmatprep.subr.mxu0 0.0
        %4623 = vmatpush2.msra.mxu0 0.0
        %4624 = vmatprep.subr.mxu0 0.0
        %4625 = vmatpush2.msra.mxu0 0.0
        %4626 = vmatprep.subr.mxu0 0.0
        %4627 = vmatpush2.msra.mxu0 0.0
        %4628 = vmatprep.subr.mxu0 0.0
        %4629 = vmatpush2.msra.mxu0 0.0
        %4630 = vmatprep.mubr.f32.mxu0 0.0
        %4631 = vmatmul.mubr.f32.gmra.mxu0 %v4564
        %v4632 = vpop.f32.mrf.mxu0
        %v4633 = vadd.f32 0.0, %v4632
        %v4634 = vpop.f32.mrf.mxu0
        %4635 = vdwg.mxu0
        %v4636 = vadd.f32 %v4558, %v4633
        %v4637 = vld [vmem:[%s8] sm:$0x1]
        %v4638 = vadd.f32 %v4636, %v4637
        %v4639 = vmax.f32 %v4638, 0.0
        %v4640 = vld [vmem:[%s9] sm:$0xff]
        %v4641 = vld [vmem:[%s9 + $0x8] sm:$0xff]
        %v4642 = vld [vmem:[%s9 + $0x10] sm:$0xff]
        %v4643 = vld [vmem:[%s9 + $0x18] sm:$0xff]
        %v4644 = vld [vmem:[%s9 + $0x20] sm:$0xff]
        %v4645 = vld [vmem:[%s9 + $0x28] sm:$0xff]
        %v4646 = vld [vmem:[%s9 + $0x30] sm:$0xff]
        %v4647 = vld [vmem:[%s9 + $0x38] sm:$0xff]
        %v4648 = vld [vmem:[%s9 + $0x40] sm:$0xff]
        %v4649 = vld [vmem:[%s9 + $0x48] sm:$0xff]
        %v4650 = vld [vmem:[%s9 + $0x50] sm:$0xff]
        %v4651 = vld [vmem:[%s9 + $0x58] sm:$0xff]
        %v4652 = vld [vmem:[%s9 + $0x60] sm:$0xff]
        %v4653 = vld [vmem:[%s9 + $0x68] sm:$0xff]
        %v4654 = vld [vmem:[%s9 + $0x70] sm:$0xff]
        %v4655 = vld [vmem:[%s10] sm:$0x1]
        %vm4656 = vcmask 982016
        %v4658 = vsel %vm4656, %v4639, 0
        %4660 = vmatprep.subr.mxu0 0.0
        %4661 = vmatpush1.msra.mxu0 0.0
        %4662 = vmatprep.subr.mxu0 0.0
        %4663 = vmatpush1.msra.mxu0 %v4654
        %4664 = vmatprep.subr.mxu0 0.0
        %4665 = vmatpush1.msra.mxu0 %v4653
        %4666 = vmatprep.subr.mxu0 0.0
        %4667 = vmatpush1.msra.mxu0 %v4652
        %4668 = vmatprep.subr.mxu0 0.0
        %4669 = vmatpush1.msra.mxu0 %v4651
        %4670 = vmatprep.subr.mxu0 0.0
        %4671 = vmatpush1.msra.mxu0 %v4650
        %4672 = vmatprep.subr.mxu0 0.0
        %4673 = vmatpush1.msra.mxu0 %v4649
        %4674 = vmatprep.subr.mxu0 0.0
        %4675 = vmatpush1.msra.mxu0 %v4648
        %4676 = vmatprep.subr.mxu0 0.0
        %4677 = vmatpush1.msra.mxu0 %v4647
        %4678 = vmatprep.subr.mxu0 0.0
        %4679 = vmatpush1.msra.mxu0 %v4646
        %4680 = vmatprep.subr.mxu0 0.0
        %4681 = vmatpush1.msra.mxu0 %v4645
        %4682 = vmatprep.subr.mxu0 0.0
        %4683 = vmatpush1.msra.mxu0 %v4644
        %4684 = vmatprep.subr.mxu0 0.0
        %4685 = vmatpush1.msra.mxu0 %v4643
        %4686 = vmatprep.subr.mxu0 0.0
        %4687 = vmatpush1.msra.mxu0 %v4642
        %4688 = vmatprep.subr.mxu0 0.0
        %4689 = vmatpush1.msra.mxu0 %v4641
        %4690 = vmatprep.subr.mxu0 0.0
        %4691 = vmatpush1.msra.mxu0 %v4640
        %4692 = vmatprep.subr.mxu0 0.0
        %4693 = vmatpush2.msra.mxu0 0.0
        %4694 = vmatprep.subr.mxu0 0.0
        %4695 = vmatpush2.msra.mxu0 0.0
        %4696 = vmatprep.subr.mxu0 0.0
        %4697 = vmatpush2.msra.mxu0 0.0
        %4698 = vmatprep.subr.mxu0 0.0
        %4699 = vmatpush2.msra.mxu0 0.0
        %4700 = vmatprep.subr.mxu0 0.0
        %4701 = vmatpush2.msra.mxu0 0.0
        %4702 = vmatprep.subr.mxu0 0.0
        %4703 = vmatpush2.msra.mxu0 0.0
        %4704 = vmatprep.subr.mxu0 0.0
        %4705 = vmatpush2.msra.mxu0 0.0
        %4706 = vmatprep.subr.mxu0 0.0
        %4707 = vmatpush2.msra.mxu0 0.0
        %4708 = vmatprep.subr.mxu0 0.0
        %4709 = vmatpush2.msra.mxu0 0.0
        %4710 = vmatprep.subr.mxu0 0.0
        %4711 = vmatpush2.msra.mxu0 0.0
        %4712 = vmatprep.subr.mxu0 0.0
        %4713 = vmatpush2.msra.mxu0 0.0
        %4714 = vmatprep.subr.mxu0 0.0
        %4715 = vmatpush2.msra.mxu0 0.0
        %4716 = vmatprep.subr.mxu0 0.0
        %4717 = vmatpush2.msra.mxu0 0.0
        %4718 = vmatprep.subr.mxu0 0.0
        %4719 = vmatpush2.msra.mxu0 0.0
        %4720 = vmatprep.subr.mxu0 0.0
        %4721 = vmatpush2.msra.mxu0 0.0
        %4722 = vmatprep.subr.mxu0 0.0
        %4723 = vmatpush2.msra.mxu0 0.0
        %4724 = vmatprep.mubr.f32.mxu0 0.0
        %4725 = vmatmul.mubr.f32.gmra.mxu0 %v4658
        %v4726 = vpop.f32.mrf.mxu0
        %v4727 = vadd.f32 %v4655, %v4726
        %v4728 = vpop.f32.mrf.mxu0
        %4729 = vdwg.mxu0
        %v4730 = vmax.f32 %v4727, 0.0
        %v4731 = vld [vmem:[%s11] sm:$0xff]
        %v4732 = vld [vmem:[%s11 + $0x8] sm:$0xff]
        %v4733 = vld [vmem:[%s11 + $0x10] sm:$0xff]
        %v4734 = vld [vmem:[%s11 + $0x18] sm:$0xff]
        %v4735 = vld [vmem:[%s11 + $0x20] sm:$0xff]
        %v4736 = vld [vmem:[%s11 + $0x28] sm:$0xff]
        %v4737 = vld [vmem:[%s12] sm:$0x1]
        %vm4738 = vcmask 392192
        %v4740 = vsel %vm4738, %v4730, 0
        %4742 = vmatprep.subr.mxu0 0.0
        %4743 = vmatpush1.msra.mxu0 0.0
        %4744 = vmatprep.subr.mxu0 0.0
        %4745 = vmatpush1.msra.mxu0 0.0
        %4746 = vmatprep.subr.mxu0 0.0
        %4747 = vmatpush1.msra.mxu0 0.0
        %4748 = vmatprep.subr.mxu0 0.0
        %4749 = vmatpush1.msra.mxu0 0.0
        %4750 = vmatprep.subr.mxu0 0.0
        %4751 = vmatpush1.msra.mxu0 0.0
        %4752 = vmatprep.subr.mxu0 0.0
        %4753 = vmatpush1.msra.mxu0 0.0
        %4754 = vmatprep.subr.mxu0 0.0
        %4755 = vmatpush1.msra.mxu0 0.0
        %4756 = vmatprep.subr.mxu0 0.0
        %4757 = vmatpush1.msra.mxu0 0.0
        %4758 = vmatprep.subr.mxu0 0.0
        %4759 = vmatpush1.msra.mxu0 0.0
        %4760 = vmatprep.subr.mxu0 0.0
        %4761 = vmatpush1.msra.mxu0 0.0
        %4762 = vmatprep.subr.mxu0 0.0
        %4763 = vmatpush1.msra.mxu0 %v4736
        %4764 = vmatprep.subr.mxu0 0.0
        %4765 = vmatpush1.msra.mxu0 %v4735
        %4766 = vmatprep.subr.mxu0 0.0
        %4767 = vmatpush1.msra.mxu0 %v4734
        %4768 = vmatprep.subr.mxu0 0.0
        %4769 = vmatpush1.msra.mxu0 %v4733
        %4770 = vmatprep.subr.mxu0 0.0
        %4771 = vmatpush1.msra.mxu0 %v4732
        %4772 = vmatprep.subr.mxu0 0.0
        %4773 = vmatpush1.msra.mxu0 %v4731
        %4774 = vmatprep.subr.mxu0 0.0
        %4775 = vmatpush2.msra.mxu0 0.0
        %4776 = vmatprep.subr.mxu0 0.0
        %4777 = vmatpush2.msra.mxu0 0.0
        %4778 = vmatprep.subr.mxu0 0.0
        %4779 = vmatpush2.msra.mxu0 0.0
        %4780 = vmatprep.subr.mxu0 0.0
        %4781 = vmatpush2.msra.mxu0 0.0
        %4782 = vmatprep.subr.mxu0 0.0
        %4783 = vmatpush2.msra.mxu0 0.0
        %4784 = vmatprep.subr.mxu0 0.0
        %4785 = vmatpush2.msra.mxu0 0.0
        %4786 = vmatprep.subr.mxu0 0.0
        %4787 = vmatpush2.msra.mxu0 0.0
        %4788 = vmatprep.subr.mxu0 0.0
        %4789 = vmatpush2.msra.mxu0 0.0
        %4790 = vmatprep.subr.mxu0 0.0
        %4791 = vmatpush2.msra.mxu0 0.0
        %4792 = vmatprep.subr.mxu0 0.0
        %4793 = vmatpush2.msra.mxu0 0.0
        %4794 = vmatprep.subr.mxu0 0.0
        %4795 = vmatpush2.msra.mxu0 0.0
        %4796 = vmatprep.subr.mxu0 0.0
        %4797 = vmatpush2.msra.mxu0 0.0
        %4798 = vmatprep.subr.mxu0 0.0
        %4799 = vmatpush2.msra.mxu0 0.0
        %4800 = vmatprep.subr.mxu0 0.0
        %4801 = vmatpush2.msra.mxu0 0.0
        %4802 = vmatprep.subr.mxu0 0.0
        %4803 = vmatpush2.msra.mxu0 0.0
        %4804 = vmatprep.subr.mxu0 0.0
        %4805 = vmatpush2.msra.mxu0 0.0
        %4806 = vmatprep.mubr.f32.mxu0 0.0
        %4807 = vmatmul.mubr.f32.gmra.mxu0 %v4740
        %v4808 = vpop.f32.mrf.mxu0
        %v4809 = vadd.f32 %v4737, %v4808
        %v4810 = vpop.f32.mrf.mxu0
        %4811 = vdwg.mxu0
        %vm4812 = vcmask 188416
        %4813 = vst.msk [vmem:[%s432] sm:$0x1] %vm4812, %v4809
        %s4814 = sand.u32 %s313, 1
        %s4815 = scalar_lea.sflag [#allocation8], %s4814
        %s4816 = sand.u32 %s313, 1
        %s4817 = scalar_lea.vmem [#allocation7], %s4816
        // Predicated region
        $region108: #{forward.1} parent=71 // pred_check
          %p4818 = pneg %p323
        $region109: #{forward.1} parent=71 // pred_check_branch
          %4820 = sbr.rel (%p4818) target = $region111
        $region110: #{forward.1} parent=71 // pred_region
          %s4822 = ssub.s32 16, 16
          %4823 = vsyncadd %s4815, %s4822
          %s4824 = smul.addr %s27, 16
          %s4825 = scalar_lea.hbm %s13, %s4824
          %s4827 = sshll.u32 %s4817, 4
          %s4828 = int_to_ptr.vmem [resolvable:$true] %s4827
          %4830 = dma.vmem_to_hbm [thread:$0]  %s4828, 16, %s4825, %s4815
        $region111: #{forward.1} parent=71 // pred_fallthru
          _
      $region72: #{forward.1} parent=5 // pred_fallthru
        _
      %p4831 = scmp.le.s32.totalorder 2, %s22
      // Predicated region
      $region112: #{forward.1} parent=5 // pred_check
        %p4832 = pneg %p4831
      $region113: #{forward.1} parent=5 // pred_check_branch
        %4834 = sbr.rel (%p4832) target = $region115
      $region114: #{forward.1} parent=5 // pred_region
        %s4835 = ssub.s32 %s22, 2
        // Predicated region
        $region116: #{forward.1} parent=114 // pred_check
          %p4836 = pneg %p329
        $region117: #{forward.1} parent=114 // pred_check_branch
          %4838 = sbr.rel (%p4836) target = $region119
        $region118: #{forward.1} parent=114 // pred_region
          %s4839 = sand.u32 %s314, 1
          %s4840 = scalar_lea.sflag [#allocation8], %s4839
          %s4841 = sand.u32 %s314, 1
          %s4842 = scalar_lea.vmem [#allocation7], %s4841
          %4843 = dma.done %s4840, 16
        $region119: #{forward.1} parent=114 // pred_fallthru
          _
      $region115: #{forward.1} parent=5 // pred_fallthru
        _
    $region6: #{forward.1} parent=1 // loop_footer
      %s26 = sadd.s32 1, %s22
    $region7: #{forward.1} parent=1 // loop_footer_branch
      %21 = sbr.rel target = $region3
    $region8: #{forward.1} parent=1 // loop_exit
      _
    %4844 = vsyncpa [#allocation8], 1
    %s4845 = scalar_lea.sflag [#allocation8], 1
    %4846 = vsyncpa %s4845, 1

</llo_original>
